<compile_context>
chip_gen: v7x
topology: tpu7x:2x2x1
jax: 0.10.0
libtpu: 0.0.40
codegen_flags: <defaults>
</compile_context>

<pallas_src>
import functools

import jax
import jax.numpy as jnp
from jax.experimental import pallas as pl
from jax.experimental.pallas import tpu as pltpu

# ----------------------------- configuration --------------------------------
IMG = 16          # img_size
PS = 4            # patch_size
IN_CH = 3         # in_chans
DIM = 32          # embed_dim
DEPTH = 2         # depth
HEADS = 4         # num_heads
MLP_RATIO = 4.0
PRETRAIN_IMG = 16
USE_CLS = True    # pretrain_use_cls_token
B = 2             # batch

HP = IMG // PS
N = HP * HP
HD = DIM // HEADS
MLP_HID = int(DIM * MLP_RATIO)      # 128
QKV_COLS = 128                      # 3*DIM (=96) padded to 128 lanes
LN_EPS = 1e-5


# ------------------------------ kernel helpers -------------------------------
def _layernorm(x, g, b):
    mu = jnp.mean(x, axis=-1, keepdims=True)
    xc = x - mu
    var = jnp.mean(xc * xc, axis=-1, keepdims=True)
    return xc * jax.lax.rsqrt(var + LN_EPS) * g + b          # rsqrt -> EUP


def _erf(x):
    # Abramowitz & Stegun 7.1.26, |error| <= 1.5e-7 (well below bf16 matmul
    # noise).  Avoids depending on a lax.erf lowering inside Mosaic.
    ax = jnp.abs(x)
    t = 1.0 / (1.0 + 0.3275911 * ax)
    poly = t * (0.254829592 + t * (-0.284496736 + t * (1.421413741
                + t * (-1.453152027 + t * 1.061405429))))
    y = 1.0 - poly * jnp.exp(-ax * ax)
    return jnp.where(x < 0.0, -y, y)


def _gelu_exact(x):
    # Matches torch.nn.GELU() (erf form).
    # TODO(synk): on v5e, jax.nn.gelu(approximate=True) would move the
    # transcendental fully onto the EUP at a small fidelity cost.
    return 0.5 * x * (1.0 + _erf(x * 0.7071067811865476))


# ------------------------------ fused Pallas kernel --------------------------
def _vit_fused_kernel(patches_ref, pos_ref, patch_w_ref, w_big_ref, wproj_ref,
                      w2_ref, qkv_b_ref, mlp_b1_ref, ln_ref, final_ln_ref,
                      out_ref, *, batch, depth, heads):
    n_tok, dim = pos_ref.shape
    hd = dim // heads
    bn = batch * n_tok
    mlp_hid = mlp_b1_ref.shape[-1]
    qkv_cols = w_big_ref.shape[-1] - mlp_hid

    # PatchEmbed (non-overlapping conv == matmul). Conv bias is pre-folded
    # into the (N, D) absolute-position row wrapper-side.
    x = jnp.dot(patches_ref[...].astype(jnp.bfloat16), patch_w_ref[...],
                preferred_element_type=jnp.float32)
    x = (x.reshape(batch, n_tok, dim) + pos_ref[...][None]).reshape(bn, dim)

    def split_heads(qkv, off):
        # Lanes [off + h*hd : off + (h+1)*hd] of (BN, 128) -> (H*B, N, hd);
        # leading index z = h*batch + b (consistent across q, k, v, o).
        parts = [qkv[:, off + h * hd: off + (h + 1) * hd]
                 .reshape(1, batch, n_tok, hd) for h in range(heads)]
        return jnp.concatenate(parts, axis=0).reshape(heads * batch, n_tok, hd)

    # window_block_indexes=[] and use_rel_pos=False -> every block is plain
    # global attention; drop_path_rate=0 -> residual adds are identities.
    for i in range(depth):
        wqkv = w_big_ref[i, :, 0:qkv_cols]            # (D,128) bf16 [q|k|v|0]
        w1 = w_big_ref[i, :, qkv_cols:qkv_cols + mlp_hid]   # (D, MLP_HID) bf16
        wproj = wproj_ref[i]                          # (D, D) bf16 (proj_w.T)
        w2 = w2_ref[i]                                # (MLP_HID, D) bf16
        qkv_b = qkv_b_ref[i]                          # (1, 128) f32, scale in q
        b1 = mlp_b1_ref[i]                            # (1, MLP_HID) f32
        ln1_g, ln1_b = ln_ref[i, 0:1, :], ln_ref[i, 1:2, :]
        proj_b = ln_ref[i, 2:3, :]
        ln2_g, ln2_b = ln_ref[i, 3:4, :], ln_ref[i, 4:5, :]
        b2 = ln_ref[i, 5:6, :]

        # ---- attention branch ------------------------------------------------
        xn = _layernorm(x, ln1_g, ln1_b)
        qkv = jnp.dot(xn.astype(jnp.bfloat16), wqkv,
                      preferred_element_type=jnp.float32) + qkv_b   # (BN,128)
        q = split_heads(qkv, 0).astype(jnp.bfloat16)                # (HB,N,hd)
        k = split_heads(qkv, dim).astype(jnp.bfloat16)
        v = split_heads(qkv, 2 * dim).astype(jnp.bfloat16)

        s = jnp.einsum('znf,zmf->znm', q, k,
                       preferred_element_type=jnp.float32)          # (HB,N,N)
        s = s - jnp.max(s, axis=-1, keepdims=True)
        p = jnp.exp(s)
        p = p * pl.reciprocal(jnp.sum(p, axis=-1, keepdims=True), approx=True)
        o = jnp.einsum('znm,zmf->znf', p.astype(jnp.bfloat16), v,
                       preferred_element_type=jnp.float32)          # (HB,N,hd)
        # Concatenate heads head-major along lanes -> (BN, D), matching the
        # torch permute(0,2,3,1,4).reshape(...) layout, then ONE proj matmul.
        o = jnp.concatenate(
            [o[h * batch:(h + 1) * batch].reshape(bn, hd) for h in range(heads)],
            axis=-1)
        attn = jnp.dot(o.astype(jnp.bfloat16), wproj,
                       preferred_element_type=jnp.float32) + proj_b
        x1 = x + attn                         # residual (drop_path = identity)

        # ---- MLP branch --------------------------------------------------------
        xn2 = _layernorm(x1, ln2_g, ln2_b)
        h = jnp.dot(xn2.astype(jnp.bfloat16), w1,
                    preferred_element_type=jnp.float32) + b1
        h = _gelu_exact(h)
        mlp = jnp.dot(h.astype(jnp.bfloat16), w2,
                      preferred_element_type=jnp.float32) + b2
        x = x1 + mlp

    # enc_norm=True -> final LayerNorm
    out_ref[...] = _layernorm(x, final_ln_ref[0:1, :], final_ln_ref[1:2, :])


_VMEM = pl.BlockSpec(memory_space=pltpu.MemorySpace.VMEM)


def _grid_batches(bsz):
    """Number of grid steps along batch. >1 only on megacore (v7x) parts."""
    try:
        kind = jax.devices()[0].device_kind.lower()
    except Exception:
        return 1
    return bsz if "v7" in kind else 1


# ------------------------------ model forward --------------------------------
def vit_det_forward(x, kp):
    """x: (B, C, H, W) NCHW float32 -> {'last_feat': (B, D, H/ps, W/ps)}"""
    bsz, c, h_img, w_img = x.shape
    hp, wp = h_img // PS, w_img // PS
    n_tok = hp * wp
    patch_dim = c * PS * PS

    # Patch extraction: Conv2d(k=stride=patch) == non-overlapping patch matmul.
    patches = (x.reshape(bsz, c, hp, PS, wp, PS)
                 .transpose(0, 2, 4, 1, 3, 5)          # (B, Hp, Wp, C, ps, ps)
                 .reshape(bsz * n_tok, patch_dim))

    nb = _grid_batches(bsz)         # v7x: one batch element per TensorCore
    bpg = bsz // nb                 # batch per grid step

    args = (patches, kp["pos_b"], kp["patch_w"], kp["w_big"], kp["wproj"],
            kp["w2"], kp["qkv_b"], kp["mlp_b1"], kp["ln_small"], kp["final_ln"])

    in_specs = [pl.BlockSpec((bpg * n_tok, patch_dim), lambda b: (b, 0))]
    in_specs += [_VMEM] * (len(args) - 1)          # weight blobs: whole-array VMEM
    out_specs = pl.BlockSpec((bpg * n_tok, DIM), lambda b: (b, 0))

    kernel = functools.partial(_vit_fused_kernel,
                               batch=bpg, depth=DEPTH, heads=HEADS)
    tokens = pl.pallas_call(
        kernel,
        grid=(nb,),
        in_specs=in_specs,
        out_specs=out_specs,
        out_shape=jax.ShapeDtypeStruct((bsz * n_tok, DIM), jnp.float32),
        compiler_params=pltpu.CompilerParams(dimension_semantics=("parallel",)),
    )(*args)

    # Wrapper-side layout plumbing: (B*N, D) -> NCHW, like x.permute(0, 3, 1, 2).
    feat = tokens.reshape(bsz, hp, wp, DIM).transpose(0, 3, 1, 2)
    return {"last_feat": feat}


# ------------------------------ parameter handling ----------------------------
def init_params(key):
    """PyTorch-layout parameters (Linear weights are (out, in))."""
    ks = iter(jax.random.split(key, 4 + DEPTH * 4))

    def tn(k, shape, std=0.02):
        return (std * jax.random.truncated_normal(k, -2.0, 2.0, shape)
                ).astype(jnp.float32)

    params = {
        "patch_w": tn(next(ks), (DIM, IN_CH, PS, PS)),   # conv weight (O, I, kh, kw)
        "patch_b": jnp.zeros((DIM,), jnp.float32),
        "pos_embed": tn(next(ks), (1, (PRETRAIN_IMG // PS) ** 2 + 1, DIM)),
        "norm_g": jnp.ones((DIM,), jnp.float32),
        "norm_b": jnp.zeros((DIM,), jnp.float32),
        "blocks": [],
    }
    for _ in range(DEPTH):
        params["blocks"].append({
            "ln1_g": jnp.ones((DIM,), jnp.float32),
            "ln1_b": jnp.zeros((DIM,), jnp.float32),
            "qkv_w": tn(next(ks), (3 * DIM, DIM)),
            "qkv_b": jnp.zeros((3 * DIM,), jnp.float32),
            "proj_w": tn(next(ks), (DIM, DIM)),
            "proj_b": jnp.zeros((DIM,), jnp.float32),
            "ln2_g": jnp.ones((DIM,), jnp.float32),
            "ln2_b": jnp.zeros((DIM,), jnp.float32),
            "mlp_w1": tn(next(ks), (MLP_HID, DIM)),
            "mlp_b1": jnp.zeros((MLP_HID,), jnp.float32),
            "mlp_w2": tn(next(ks), (DIM, MLP_HID)),
            "mlp_b2": jnp.zeros((DIM,), jnp.float32),
        })
    return params


def prepare_kernel_params(params):
    """One-time conversion to packed, kernel-friendly layouts (off hot path).

    * Matmul weights -> bf16, (in, out) orientation, stacked over blocks.
    * Attention scale folded into the q weight/bias BEFORE the bf16 cast.
    * qkv padded to 128 output lanes (zero cols) so in-kernel slices are
      vreg-aligned and the MXU runs one 128-lane matmul.
    * Conv (patch-embed) bias folded into the abs-pos row.
    """
    bf16 = jnp.bfloat16
    scale = HD ** (-0.5)

    patch_w = params["patch_w"].reshape(DIM, IN_CH * PS * PS).T.astype(bf16)

    # get_abs_pos: strip cls token; pretrain grid must equal runtime grid.
    # TODO(synk): bicubic interpolation of pos_embed for mismatched grids not implemented.
    pos = params["pos_embed"][:, 1:, :] if USE_CLS else params["pos_embed"]
    pre_hw = PRETRAIN_IMG // PS
    assert pos.shape[1] == pre_hw * pre_hw
    assert pre_hw == HP, "pos_embed resampling for mismatched grids not supported"
    pos_b = pos.reshape(N, DIM) + params["patch_b"].reshape(1, DIM)

    w_big, wproj, w2, qkv_b, mlp_b1, ln_small = [], [], [], [], [], []
    pad_w = jnp.zeros((DIM, QKV_COLS - 3 * DIM), jnp.float32)
    pad_b = jnp.zeros((QKV_COLS - 3 * DIM,), jnp.float32)
    for p in params["blocks"]:
        W, bqkv = p["qkv_w"], p["qkv_b"]               # (3D, D), (3D,)
        wq = W[0:DIM].T * scale                        # fold scale pre-bf16
        wk = W[DIM:2 * DIM].T
        wv = W[2 * DIM:3 * DIM].T
        wqkv = jnp.concatenate([wq, wk, wv, pad_w], axis=1)        # (D, 128)
        w1 = p["mlp_w1"].T                                          # (D, 128)
        w_big.append(jnp.concatenate([wqkv, w1], axis=1).astype(bf16))  # (D,256)
        wproj.append(p["proj_w"].T.astype(bf16))                    # (D, D)
        w2.append(p["mlp_w2"].T.astype(bf16))                       # (128, D)
        qkv_b.append(jnp.concatenate(
            [bqkv[0:DIM] * scale, bqkv[DIM:3 * DIM], pad_b]).reshape(1, QKV_COLS))
        mlp_b1.append(p["mlp_b1"].reshape(1, MLP_HID))
        ln_small.append(jnp.stack([p["ln1_g"], p["ln1_b"], p["proj_b"],
                                   p["ln2_g"], p["ln2_b"], p["mlp_b2"]], axis=0))

    return {
        "patch_w": patch_w,                       # (48, 32) bf16
        "pos_b": pos_b,                           # (16, 32) f32
        "w_big": jnp.stack(w_big),                # (DEPTH, 32, 256) bf16
        "wproj": jnp.stack(wproj),                # (DEPTH, 32, 32) bf16
        "w2": jnp.stack(w2),                      # (DEPTH, 128, 32) bf16
        "qkv_b": jnp.stack(qkv_b),                # (DEPTH, 1, 128) f32
        "mlp_b1": jnp.stack(mlp_b1),              # (DEPTH, 1, 128) f32
        "ln_small": jnp.stack(ln_small),          # (DEPTH, 6, 32) f32
        "final_ln": jnp.stack([params["norm_g"], params["norm_b"]], axis=0),
    }


# ---------------------------------- main --------------------------------------
if __name__ == "__main__":
    key = jax.random.PRNGKey(0)
    kx, kparam = jax.random.split(key)
    x = jax.random.normal(kx, (B, IN_CH, IMG, IMG), dtype=jnp.float32)

    params = init_params(kparam)
    kernel_params = prepare_kernel_params(params)   # one-time layout/bf16 prep

    forward = jax.jit(vit_det_forward)
    out = forward(x, kernel_params)
    feat = out["last_feat"]
    jax.block_until_ready(feat)

    assert feat.shape == (B, DIM, HP, HP), feat.shape
    assert feat.dtype == jnp.float32
    assert bool(jnp.all(jnp.isfinite(feat)))
    print("KERNEL_OK")
</pallas_src>

<mosaic_0001>
module attributes {stable_mosaic.version = 11 : i64} {
  func.func @_vit_fused_kernel(%arg0: i32, %arg1: memref<32x48xf32, #tpu.memory_space<vmem>>, %arg2: memref<16x32xf32, #tpu.memory_space<vmem>>, %arg3: memref<48x32xbf16, #tpu.memory_space<vmem>>, %arg4: memref<2x32x256xbf16, #tpu.memory_space<vmem>>, %arg5: memref<2x32x32xbf16, #tpu.memory_space<vmem>>, %arg6: memref<2x128x32xbf16, #tpu.memory_space<vmem>>, %arg7: memref<2x1x128xf32, #tpu.memory_space<vmem>>, %arg8: memref<2x1x128xf32, #tpu.memory_space<vmem>>, %arg9: memref<2x6x32xf32, #tpu.memory_space<vmem>>, %arg10: memref<2x32xf32, #tpu.memory_space<vmem>>, %arg11: memref<32x32xf32, #tpu.memory_space<vmem>>) attributes {dimension_semantics = [#tpu.dimension_semantics<parallel>], iteration_bounds = array<i64: 1>, scalar_prefetch = 0 : i64, scratch_operands = 0 : i64, tpu.core_type = #tpu.core_type<tc>, window_params = [{transform_indices = @transform_0, window_bounds = array<i64: 32, 48>}, {pipeline_mode = #tpu.pipeline_mode<synchronous>, transform_indices = @transform_1, window_bounds = array<i64: 16, 32>}, {pipeline_mode = #tpu.pipeline_mode<synchronous>, transform_indices = @transform_2, window_bounds = array<i64: 48, 32>}, {pipeline_mode = #tpu.pipeline_mode<synchronous>, transform_indices = @transform_3, window_bounds = array<i64: 2, 32, 256>}, {pipeline_mode = #tpu.pipeline_mode<synchronous>, transform_indices = @transform_4, window_bounds = array<i64: 2, 32, 32>}, {pipeline_mode = #tpu.pipeline_mode<synchronous>, transform_indices = @transform_5, window_bounds = array<i64: 2, 128, 32>}, {pipeline_mode = #tpu.pipeline_mode<synchronous>, transform_indices = @transform_6, window_bounds = array<i64: 2, 1, 128>}, {pipeline_mode = #tpu.pipeline_mode<synchronous>, transform_indices = @transform_7, window_bounds = array<i64: 2, 1, 128>}, {pipeline_mode = #tpu.pipeline_mode<synchronous>, transform_indices = @transform_8, window_bounds = array<i64: 2, 6, 32>}, {pipeline_mode = #tpu.pipeline_mode<synchronous>, transform_indices = @transform_9, window_bounds = array<i64: 2, 32>}, {transform_indices = @transform_10, window_bounds = array<i64: 32, 32>}]} {
    %c0 = arith.constant 0 : index
    %c0_0 = arith.constant 0 : index
    %0 = vector.load %arg1[%c0, %c0_0] : memref<32x48xf32, #tpu.memory_space<vmem>>, vector<32x48xf32>
    %1 = arith.truncf %0 : vector<32x48xf32> to vector<32x48xbf16>
    %c0_1 = arith.constant 0 : index
    %c0_2 = arith.constant 0 : index
    %2 = vector.load %arg3[%c0_1, %c0_2] : memref<48x32xbf16, #tpu.memory_space<vmem>>, vector<48x32xbf16>
    %cst = arith.constant dense<0.000000e+00> : vector<32x32xf32>
    %3 = tpu.matmul %1, %2, %cst {dimension_numbers = #tpu.dot_dimension_numbers<[1], [0], [0], [1], [0, 0, 1, 1], [], []>} : vector<32x48xbf16>, vector<48x32xbf16>, vector<32x32xf32> -> vector<32x32xf32>
    %4 = vector.shape_cast %3 : vector<32x32xf32> to vector<2x16x32xf32>
    %c0_3 = arith.constant 0 : index
    %c0_4 = arith.constant 0 : index
    %5 = vector.load %arg2[%c0_3, %c0_4] : memref<16x32xf32, #tpu.memory_space<vmem>>, vector<16x32xf32>
    %6 = vector.shape_cast %5 : vector<16x32xf32> to vector<1x16x32xf32>
    %7 = vector.broadcast %6 : vector<1x16x32xf32> to vector<2x16x32xf32>
    %8 = arith.addf %4, %7 : vector<2x16x32xf32>
    %9 = vector.shape_cast %8 : vector<2x16x32xf32> to vector<32x32xf32>
    %c0_5 = arith.constant 0 : index
    %c0_6 = arith.constant 0 : index
    %c0_7 = arith.constant 0 : index
    %10 = vector.load %arg4[%c0_5, %c0_6, %c0_7] : memref<2x32x256xbf16, #tpu.memory_space<vmem>>, vector<1x32x128xbf16>
    %11 = vector.shape_cast %10 : vector<1x32x128xbf16> to vector<32x128xbf16>
    %c0_8 = arith.constant 0 : index
    %c0_9 = arith.constant 0 : index
    %c128 = arith.constant 128 : index
    %12 = vector.load %arg4[%c0_8, %c0_9, %c128] : memref<2x32x256xbf16, #tpu.memory_space<vmem>>, vector<1x32x128xbf16>
    %13 = vector.shape_cast %12 : vector<1x32x128xbf16> to vector<32x128xbf16>
    %c0_10 = arith.constant 0 : index
    %c0_11 = arith.constant 0 : index
    %c0_12 = arith.constant 0 : index
    %14 = vector.load %arg5[%c0_10, %c0_11, %c0_12] : memref<2x32x32xbf16, #tpu.memory_space<vmem>>, vector<1x32x32xbf16>
    %15 = vector.shape_cast %14 : vector<1x32x32xbf16> to vector<32x32xbf16>
    %c0_13 = arith.constant 0 : index
    %c0_14 = arith.constant 0 : index
    %c0_15 = arith.constant 0 : index
    %16 = vector.load %arg6[%c0_13, %c0_14, %c0_15] : memref<2x128x32xbf16, #tpu.memory_space<vmem>>, vector<1x128x32xbf16>
    %17 = vector.shape_cast %16 : vector<1x128x32xbf16> to vector<128x32xbf16>
    %c0_16 = arith.constant 0 : index
    %c0_17 = arith.constant 0 : index
    %c0_18 = arith.constant 0 : index
    %18 = vector.load %arg7[%c0_16, %c0_17, %c0_18] : memref<2x1x128xf32, #tpu.memory_space<vmem>>, vector<1x1x128xf32>
    %19 = vector.shape_cast %18 : vector<1x1x128xf32> to vector<1x128xf32>
    %c0_19 = arith.constant 0 : index
    %c0_20 = arith.constant 0 : index
    %c0_21 = arith.constant 0 : index
    %20 = vector.load %arg8[%c0_19, %c0_20, %c0_21] : memref<2x1x128xf32, #tpu.memory_space<vmem>>, vector<1x1x128xf32>
    %21 = vector.shape_cast %20 : vector<1x1x128xf32> to vector<1x128xf32>
    %c0_22 = arith.constant 0 : index
    %c0_23 = arith.constant 0 : index
    %c0_24 = arith.constant 0 : index
    %22 = vector.load %arg9[%c0_22, %c0_23, %c0_24] : memref<2x6x32xf32, #tpu.memory_space<vmem>>, vector<1x1x32xf32>
    %23 = vector.shape_cast %22 : vector<1x1x32xf32> to vector<1x32xf32>
    %c0_25 = arith.constant 0 : index
    %c1 = arith.constant 1 : index
    %c0_26 = arith.constant 0 : index
    %24 = vector.load %arg9[%c0_25, %c1, %c0_26] : memref<2x6x32xf32, #tpu.memory_space<vmem>>, vector<1x1x32xf32>
    %25 = vector.shape_cast %24 : vector<1x1x32xf32> to vector<1x32xf32>
    %c0_27 = arith.constant 0 : index
    %c2 = arith.constant 2 : index
    %c0_28 = arith.constant 0 : index
    %26 = vector.load %arg9[%c0_27, %c2, %c0_28] : memref<2x6x32xf32, #tpu.memory_space<vmem>>, vector<1x1x32xf32>
    %27 = vector.shape_cast %26 : vector<1x1x32xf32> to vector<1x32xf32>
    %c0_29 = arith.constant 0 : index
    %c3 = arith.constant 3 : index
    %c0_30 = arith.constant 0 : index
    %28 = vector.load %arg9[%c0_29, %c3, %c0_30] : memref<2x6x32xf32, #tpu.memory_space<vmem>>, vector<1x1x32xf32>
    %29 = vector.shape_cast %28 : vector<1x1x32xf32> to vector<1x32xf32>
    %c0_31 = arith.constant 0 : index
    %c4 = arith.constant 4 : index
    %c0_32 = arith.constant 0 : index
    %30 = vector.load %arg9[%c0_31, %c4, %c0_32] : memref<2x6x32xf32, #tpu.memory_space<vmem>>, vector<1x1x32xf32>
    %31 = vector.shape_cast %30 : vector<1x1x32xf32> to vector<1x32xf32>
    %c0_33 = arith.constant 0 : index
    %c5 = arith.constant 5 : index
    %c0_34 = arith.constant 0 : index
    %32 = vector.load %arg9[%c0_33, %c5, %c0_34] : memref<2x6x32xf32, #tpu.memory_space<vmem>>, vector<1x1x32xf32>
    %33 = vector.shape_cast %32 : vector<1x1x32xf32> to vector<1x32xf32>
    %cst_35 = arith.constant dense<0.000000e+00> : vector<32xf32>
    %34 = vector.multi_reduction <add>, %9, %cst_35 [1] : vector<32x32xf32> to vector<32xf32>
    %35 = vector.shape_cast %34 : vector<32xf32> to vector<32x1xf32>
    %cst_36 = arith.constant 3.200000e+01 : f32
    %36 = vector.broadcast %cst_36 : f32 to vector<32x1xf32>
    %37 = arith.divf %35, %36 : vector<32x1xf32>
    %38 = vector.broadcast %37 : vector<32x1xf32> to vector<32x32xf32>
    %39 = arith.subf %9, %38 : vector<32x32xf32>
    %40 = arith.mulf %39, %39 : vector<32x32xf32>
    %cst_37 = arith.constant dense<0.000000e+00> : vector<32xf32>
    %41 = vector.multi_reduction <add>, %40, %cst_37 [1] : vector<32x32xf32> to vector<32xf32>
    %42 = vector.shape_cast %41 : vector<32xf32> to vector<32x1xf32>
    %cst_38 = arith.constant 3.200000e+01 : f32
    %43 = vector.broadcast %cst_38 : f32 to vector<32x1xf32>
    %44 = arith.divf %42, %43 : vector<32x1xf32>
    %cst_39 = arith.constant 9.99999974E-6 : f32
    %45 = vector.broadcast %cst_39 : f32 to vector<32x1xf32>
    %46 = arith.addf %44, %45 : vector<32x1xf32>
    %47 = math.rsqrt %46 : vector<32x1xf32>
    %48 = vector.broadcast %47 : vector<32x1xf32> to vector<32x32xf32>
    %49 = arith.mulf %39, %48 : vector<32x32xf32>
    %50 = vector.broadcast %23 : vector<1x32xf32> to vector<32x32xf32>
    %51 = arith.mulf %49, %50 : vector<32x32xf32>
    %52 = vector.broadcast %25 : vector<1x32xf32> to vector<32x32xf32>
    %53 = arith.addf %51, %52 : vector<32x32xf32>
    %54 = arith.truncf %53 : vector<32x32xf32> to vector<32x32xbf16>
    %cst_40 = arith.constant dense<0.000000e+00> : vector<32x128xf32>
    %55 = tpu.matmul %54, %11, %cst_40 {dimension_numbers = #tpu.dot_dimension_numbers<[1], [0], [0], [1], [0, 0, 1, 1], [], []>} : vector<32x32xbf16>, vector<32x128xbf16>, vector<32x128xf32> -> vector<32x128xf32>
    %56 = vector.broadcast %19 : vector<1x128xf32> to vector<32x128xf32>
    %57 = arith.addf %55, %56 : vector<32x128xf32>
    %58 = vector.extract_strided_slice %57 {offsets = [0, 0], sizes = [32, 8], strides = [1, 1]} : vector<32x128xf32> to vector<32x8xf32>
    %59 = vector.shape_cast %58 : vector<32x8xf32> to vector<1x2x16x8xf32>
    %60 = vector.extract_strided_slice %57 {offsets = [0, 8], sizes = [32, 8], strides = [1, 1]} : vector<32x128xf32> to vector<32x8xf32>
    %61 = vector.shape_cast %60 : vector<32x8xf32> to vector<1x2x16x8xf32>
    %62 = vector.extract_strided_slice %57 {offsets = [0, 16], sizes = [32, 8], strides = [1, 1]} : vector<32x128xf32> to vector<32x8xf32>
    %63 = vector.shape_cast %62 : vector<32x8xf32> to vector<1x2x16x8xf32>
    %64 = vector.extract_strided_slice %57 {offsets = [0, 24], sizes = [32, 8], strides = [1, 1]} : vector<32x128xf32> to vector<32x8xf32>
    %65 = vector.shape_cast %64 : vector<32x8xf32> to vector<1x2x16x8xf32>
    %66 = tpu.concatenate %59, %61, %63, %65 in 0 : vector<1x2x16x8xf32>, vector<1x2x16x8xf32>, vector<1x2x16x8xf32>, vector<1x2x16x8xf32> -> vector<4x2x16x8xf32>
    %67 = vector.shape_cast %66 : vector<4x2x16x8xf32> to vector<8x16x8xf32>
    %68 = arith.truncf %67 : vector<8x16x8xf32> to vector<8x16x8xbf16>
    %69 = vector.extract_strided_slice %57 {offsets = [0, 32], sizes = [32, 8], strides = [1, 1]} : vector<32x128xf32> to vector<32x8xf32>
    %70 = vector.shape_cast %69 : vector<32x8xf32> to vector<1x2x16x8xf32>
    %71 = vector.extract_strided_slice %57 {offsets = [0, 40], sizes = [32, 8], strides = [1, 1]} : vector<32x128xf32> to vector<32x8xf32>
    %72 = vector.shape_cast %71 : vector<32x8xf32> to vector<1x2x16x8xf32>
    %73 = vector.extract_strided_slice %57 {offsets = [0, 48], sizes = [32, 8], strides = [1, 1]} : vector<32x128xf32> to vector<32x8xf32>
    %74 = vector.shape_cast %73 : vector<32x8xf32> to vector<1x2x16x8xf32>
    %75 = vector.extract_strided_slice %57 {offsets = [0, 56], sizes = [32, 8], strides = [1, 1]} : vector<32x128xf32> to vector<32x8xf32>
    %76 = vector.shape_cast %75 : vector<32x8xf32> to vector<1x2x16x8xf32>
    %77 = tpu.concatenate %70, %72, %74, %76 in 0 : vector<1x2x16x8xf32>, vector<1x2x16x8xf32>, vector<1x2x16x8xf32>, vector<1x2x16x8xf32> -> vector<4x2x16x8xf32>
    %78 = vector.shape_cast %77 : vector<4x2x16x8xf32> to vector<8x16x8xf32>
    %79 = arith.truncf %78 : vector<8x16x8xf32> to vector<8x16x8xbf16>
    %80 = vector.extract_strided_slice %57 {offsets = [0, 64], sizes = [32, 8], strides = [1, 1]} : vector<32x128xf32> to vector<32x8xf32>
    %81 = vector.shape_cast %80 : vector<32x8xf32> to vector<1x2x16x8xf32>
    %82 = vector.extract_strided_slice %57 {offsets = [0, 72], sizes = [32, 8], strides = [1, 1]} : vector<32x128xf32> to vector<32x8xf32>
    %83 = vector.shape_cast %82 : vector<32x8xf32> to vector<1x2x16x8xf32>
    %84 = vector.extract_strided_slice %57 {offsets = [0, 80], sizes = [32, 8], strides = [1, 1]} : vector<32x128xf32> to vector<32x8xf32>
    %85 = vector.shape_cast %84 : vector<32x8xf32> to vector<1x2x16x8xf32>
    %86 = vector.extract_strided_slice %57 {offsets = [0, 88], sizes = [32, 8], strides = [1, 1]} : vector<32x128xf32> to vector<32x8xf32>
    %87 = vector.shape_cast %86 : vector<32x8xf32> to vector<1x2x16x8xf32>
    %88 = tpu.concatenate %81, %83, %85, %87 in 0 : vector<1x2x16x8xf32>, vector<1x2x16x8xf32>, vector<1x2x16x8xf32>, vector<1x2x16x8xf32> -> vector<4x2x16x8xf32>
    %89 = vector.shape_cast %88 : vector<4x2x16x8xf32> to vector<8x16x8xf32>
    %90 = arith.truncf %89 : vector<8x16x8xf32> to vector<8x16x8xbf16>
    "tpu.trace_start"() <{level = 10 : i32, message = "znf,zmf->znm"}> : () -> ()
    %cst_41 = arith.constant dense<0.000000e+00> : vector<8x16x16xf32>
    %91 = tpu.matmul %68, %79, %cst_41 {dimension_numbers = #tpu.dot_dimension_numbers<[2], [2], [1], [1], [0, 0, 0, 1, 1, 1], [0], [0]>} : vector<8x16x8xbf16>, vector<8x16x8xbf16>, vector<8x16x16xf32> -> vector<8x16x16xf32>
    "tpu.trace_stop"() : () -> ()
    %cst_42 = arith.constant dense<0xFF800000> : vector<8x16xf32>
    %92 = vector.multi_reduction <maximumf>, %91, %cst_42 [2] : vector<8x16x16xf32> to vector<8x16xf32>
    %93 = vector.shape_cast %92 : vector<8x16xf32> to vector<8x16x1xf32>
    %94 = vector.broadcast %93 : vector<8x16x1xf32> to vector<8x16x16xf32>
    %95 = arith.subf %91, %94 : vector<8x16x16xf32>
    %96 = math.exp %95 : vector<8x16x16xf32>
    %cst_43 = arith.constant dense<0.000000e+00> : vector<8x16xf32>
    %97 = vector.multi_reduction <add>, %96, %cst_43 [2] : vector<8x16x16xf32> to vector<8x16xf32>
    %98 = vector.shape_cast %97 : vector<8x16xf32> to vector<8x16x1xf32>
    %99 = tpu.reciprocal %98 {approx = true} : vector<8x16x1xf32> -> vector<8x16x1xf32>
    %100 = vector.broadcast %99 : vector<8x16x1xf32> to vector<8x16x16xf32>
    %101 = arith.mulf %96, %100 : vector<8x16x16xf32>
    %102 = arith.truncf %101 : vector<8x16x16xf32> to vector<8x16x16xbf16>
    "tpu.trace_start"() <{level = 10 : i32, message = "znm,zmf->znf"}> : () -> ()
    %cst_44 = arith.constant dense<0.000000e+00> : vector<8x16x8xf32>
    %103 = tpu.matmul %102, %90, %cst_44 {dimension_numbers = #tpu.dot_dimension_numbers<[2], [1], [1], [2], [0, 0, 0, 1, 1, 2], [0], [0]>} : vector<8x16x16xbf16>, vector<8x16x8xbf16>, vector<8x16x8xf32> -> vector<8x16x8xf32>
    "tpu.trace_stop"() : () -> ()
    %104 = vector.extract_strided_slice %103 {offsets = [0, 0, 0], sizes = [2, 16, 8], strides = [1, 1, 1]} : vector<8x16x8xf32> to vector<2x16x8xf32>
    %105 = vector.shape_cast %104 : vector<2x16x8xf32> to vector<32x8xf32>
    %106 = vector.extract_strided_slice %103 {offsets = [2, 0, 0], sizes = [2, 16, 8], strides = [1, 1, 1]} : vector<8x16x8xf32> to vector<2x16x8xf32>
    %107 = vector.shape_cast %106 : vector<2x16x8xf32> to vector<32x8xf32>
    %108 = vector.extract_strided_slice %103 {offsets = [4, 0, 0], sizes = [2, 16, 8], strides = [1, 1, 1]} : vector<8x16x8xf32> to vector<2x16x8xf32>
    %109 = vector.shape_cast %108 : vector<2x16x8xf32> to vector<32x8xf32>
    %110 = vector.extract_strided_slice %103 {offsets = [6, 0, 0], sizes = [2, 16, 8], strides = [1, 1, 1]} : vector<8x16x8xf32> to vector<2x16x8xf32>
    %111 = vector.shape_cast %110 : vector<2x16x8xf32> to vector<32x8xf32>
    %112 = tpu.concatenate %105, %107, %109, %111 in 1 : vector<32x8xf32>, vector<32x8xf32>, vector<32x8xf32>, vector<32x8xf32> -> vector<32x32xf32>
    %113 = arith.truncf %112 : vector<32x32xf32> to vector<32x32xbf16>
    %cst_45 = arith.constant dense<0.000000e+00> : vector<32x32xf32>
    %114 = tpu.matmul %113, %15, %cst_45 {dimension_numbers = #tpu.dot_dimension_numbers<[1], [0], [0], [1], [0, 0, 1, 1], [], []>} : vector<32x32xbf16>, vector<32x32xbf16>, vector<32x32xf32> -> vector<32x32xf32>
    %115 = vector.broadcast %27 : vector<1x32xf32> to vector<32x32xf32>
    %116 = arith.addf %114, %115 : vector<32x32xf32>
    %117 = arith.addf %9, %116 : vector<32x32xf32>
    %cst_46 = arith.constant dense<0.000000e+00> : vector<32xf32>
    %118 = vector.multi_reduction <add>, %117, %cst_46 [1] : vector<32x32xf32> to vector<32xf32>
    %119 = vector.shape_cast %118 : vector<32xf32> to vector<32x1xf32>
    %cst_47 = arith.constant 3.200000e+01 : f32
    %120 = vector.broadcast %cst_47 : f32 to vector<32x1xf32>
    %121 = arith.divf %119, %120 : vector<32x1xf32>
    %122 = vector.broadcast %121 : vector<32x1xf32> to vector<32x32xf32>
    %123 = arith.subf %117, %122 : vector<32x32xf32>
    %124 = arith.mulf %123, %123 : vector<32x32xf32>
    %cst_48 = arith.constant dense<0.000000e+00> : vector<32xf32>
    %125 = vector.multi_reduction <add>, %124, %cst_48 [1] : vector<32x32xf32> to vector<32xf32>
    %126 = vector.shape_cast %125 : vector<32xf32> to vector<32x1xf32>
    %cst_49 = arith.constant 3.200000e+01 : f32
    %127 = vector.broadcast %cst_49 : f32 to vector<32x1xf32>
    %128 = arith.divf %126, %127 : vector<32x1xf32>
    %cst_50 = arith.constant 9.99999974E-6 : f32
    %129 = vector.broadcast %cst_50 : f32 to vector<32x1xf32>
    %130 = arith.addf %128, %129 : vector<32x1xf32>
    %131 = math.rsqrt %130 : vector<32x1xf32>
    %132 = vector.broadcast %131 : vector<32x1xf32> to vector<32x32xf32>
    %133 = arith.mulf %123, %132 : vector<32x32xf32>
    %134 = vector.broadcast %29 : vector<1x32xf32> to vector<32x32xf32>
    %135 = arith.mulf %133, %134 : vector<32x32xf32>
    %136 = vector.broadcast %31 : vector<1x32xf32> to vector<32x32xf32>
    %137 = arith.addf %135, %136 : vector<32x32xf32>
    %138 = arith.truncf %137 : vector<32x32xf32> to vector<32x32xbf16>
    %cst_51 = arith.constant dense<0.000000e+00> : vector<32x128xf32>
    %139 = tpu.matmul %138, %13, %cst_51 {dimension_numbers = #tpu.dot_dimension_numbers<[1], [0], [0], [1], [0, 0, 1, 1], [], []>} : vector<32x32xbf16>, vector<32x128xbf16>, vector<32x128xf32> -> vector<32x128xf32>
    %140 = vector.broadcast %21 : vector<1x128xf32> to vector<32x128xf32>
    %141 = arith.addf %139, %140 : vector<32x128xf32>
    %cst_52 = arith.constant 5.000000e-01 : f32
    %142 = vector.broadcast %cst_52 : f32 to vector<32x128xf32>
    %143 = arith.mulf %142, %141 : vector<32x128xf32>
    %cst_53 = arith.constant 0.707106769 : f32
    %144 = vector.broadcast %cst_53 : f32 to vector<32x128xf32>
    %145 = arith.mulf %141, %144 : vector<32x128xf32>
    %146 = math.absf %145 : vector<32x128xf32>
    %cst_54 = arith.constant 0.327591091 : f32
    %147 = vector.broadcast %cst_54 : f32 to vector<32x128xf32>
    %148 = arith.mulf %147, %146 : vector<32x128xf32>
    %cst_55 = arith.constant 1.000000e+00 : f32
    %149 = vector.broadcast %cst_55 : f32 to vector<32x128xf32>
    %150 = arith.addf %149, %148 : vector<32x128xf32>
    %cst_56 = arith.constant 1.000000e+00 : f32
    %151 = vector.broadcast %cst_56 : f32 to vector<32x128xf32>
    %152 = arith.divf %151, %150 : vector<32x128xf32>
    %cst_57 = arith.constant 1.06140542 : f32
    %153 = vector.broadcast %cst_57 : f32 to vector<32x128xf32>
    %154 = arith.mulf %152, %153 : vector<32x128xf32>
    %cst_58 = arith.constant -1.45315206 : f32
    %155 = vector.broadcast %cst_58 : f32 to vector<32x128xf32>
    %156 = arith.addf %155, %154 : vector<32x128xf32>
    %157 = arith.mulf %152, %156 : vector<32x128xf32>
    %cst_59 = arith.constant 1.42141378 : f32
    %158 = vector.broadcast %cst_59 : f32 to vector<32x128xf32>
    %159 = arith.addf %158, %157 : vector<32x128xf32>
    %160 = arith.mulf %152, %159 : vector<32x128xf32>
    %cst_60 = arith.constant -0.284496725 : f32
    %161 = vector.broadcast %cst_60 : f32 to vector<32x128xf32>
    %162 = arith.addf %161, %160 : vector<32x128xf32>
    %163 = arith.mulf %152, %162 : vector<32x128xf32>
    %cst_61 = arith.constant 0.254829586 : f32
    %164 = vector.broadcast %cst_61 : f32 to vector<32x128xf32>
    %165 = arith.addf %164, %163 : vector<32x128xf32>
    %166 = arith.mulf %152, %165 : vector<32x128xf32>
    %cst_62 = arith.constant 0.000000e+00 : f32
    %167 = vector.broadcast %cst_62 : f32 to vector<32x128xf32>
    %168 = arith.subf %167, %146 : vector<32x128xf32>
    %169 = arith.mulf %168, %146 : vector<32x128xf32>
    %170 = math.exp %169 : vector<32x128xf32>
    %171 = arith.mulf %166, %170 : vector<32x128xf32>
    %cst_63 = arith.constant 1.000000e+00 : f32
    %172 = vector.broadcast %cst_63 : f32 to vector<32x128xf32>
    %173 = arith.subf %172, %171 : vector<32x128xf32>
    %cst_64 = arith.constant 0.000000e+00 : f32
    %174 = vector.broadcast %cst_64 : f32 to vector<32x128xf32>
    %175 = arith.cmpf olt, %145, %174 : vector<32x128xf32>
    %cst_65 = arith.constant 0.000000e+00 : f32
    %176 = vector.broadcast %cst_65 : f32 to vector<32x128xf32>
    %177 = arith.subf %176, %173 : vector<32x128xf32>
    %178 = arith.select %175, %177, %173 : vector<32x128xi1>, vector<32x128xf32>
    %cst_66 = arith.constant 1.000000e+00 : f32
    %179 = vector.broadcast %cst_66 : f32 to vector<32x128xf32>
    %180 = arith.addf %179, %178 : vector<32x128xf32>
    %181 = arith.mulf %143, %180 : vector<32x128xf32>
    %182 = arith.truncf %181 : vector<32x128xf32> to vector<32x128xbf16>
    %cst_67 = arith.constant dense<0.000000e+00> : vector<32x32xf32>
    %183 = tpu.matmul %182, %17, %cst_67 {dimension_numbers = #tpu.dot_dimension_numbers<[1], [0], [0], [1], [0, 0, 1, 1], [], []>} : vector<32x128xbf16>, vector<128x32xbf16>, vector<32x32xf32> -> vector<32x32xf32>
    %184 = vector.broadcast %33 : vector<1x32xf32> to vector<32x32xf32>
    %185 = arith.addf %183, %184 : vector<32x32xf32>
    %186 = arith.addf %117, %185 : vector<32x32xf32>
    %c1_68 = arith.constant 1 : index
    %c0_69 = arith.constant 0 : index
    %c0_70 = arith.constant 0 : index
    %187 = vector.load %arg4[%c1_68, %c0_69, %c0_70] : memref<2x32x256xbf16, #tpu.memory_space<vmem>>, vector<1x32x128xbf16>
    %188 = vector.shape_cast %187 : vector<1x32x128xbf16> to vector<32x128xbf16>
    %c1_71 = arith.constant 1 : index
    %c0_72 = arith.constant 0 : index
    %c128_73 = arith.constant 128 : index
    %189 = vector.load %arg4[%c1_71, %c0_72, %c128_73] : memref<2x32x256xbf16, #tpu.memory_space<vmem>>, vector<1x32x128xbf16>
    %190 = vector.shape_cast %189 : vector<1x32x128xbf16> to vector<32x128xbf16>
    %c1_74 = arith.constant 1 : index
    %c0_75 = arith.constant 0 : index
    %c0_76 = arith.constant 0 : index
    %191 = vector.load %arg5[%c1_74, %c0_75, %c0_76] : memref<2x32x32xbf16, #tpu.memory_space<vmem>>, vector<1x32x32xbf16>
    %192 = vector.shape_cast %191 : vector<1x32x32xbf16> to vector<32x32xbf16>
    %c1_77 = arith.constant 1 : index
    %c0_78 = arith.constant 0 : index
    %c0_79 = arith.constant 0 : index
    %193 = vector.load %arg6[%c1_77, %c0_78, %c0_79] : memref<2x128x32xbf16, #tpu.memory_space<vmem>>, vector<1x128x32xbf16>
    %194 = vector.shape_cast %193 : vector<1x128x32xbf16> to vector<128x32xbf16>
    %c1_80 = arith.constant 1 : index
    %c0_81 = arith.constant 0 : index
    %c0_82 = arith.constant 0 : index
    %195 = vector.load %arg7[%c1_80, %c0_81, %c0_82] : memref<2x1x128xf32, #tpu.memory_space<vmem>>, vector<1x1x128xf32>
    %196 = vector.shape_cast %195 : vector<1x1x128xf32> to vector<1x128xf32>
    %c1_83 = arith.constant 1 : index
    %c0_84 = arith.constant 0 : index
    %c0_85 = arith.constant 0 : index
    %197 = vector.load %arg8[%c1_83, %c0_84, %c0_85] : memref<2x1x128xf32, #tpu.memory_space<vmem>>, vector<1x1x128xf32>
    %198 = vector.shape_cast %197 : vector<1x1x128xf32> to vector<1x128xf32>
    %c1_86 = arith.constant 1 : index
    %c0_87 = arith.constant 0 : index
    %c0_88 = arith.constant 0 : index
    %199 = vector.load %arg9[%c1_86, %c0_87, %c0_88] : memref<2x6x32xf32, #tpu.memory_space<vmem>>, vector<1x1x32xf32>
    %200 = vector.shape_cast %199 : vector<1x1x32xf32> to vector<1x32xf32>
    %c1_89 = arith.constant 1 : index
    %c1_90 = arith.constant 1 : index
    %c0_91 = arith.constant 0 : index
    %201 = vector.load %arg9[%c1_89, %c1_90, %c0_91] : memref<2x6x32xf32, #tpu.memory_space<vmem>>, vector<1x1x32xf32>
    %202 = vector.shape_cast %201 : vector<1x1x32xf32> to vector<1x32xf32>
    %c1_92 = arith.constant 1 : index
    %c2_93 = arith.constant 2 : index
    %c0_94 = arith.constant 0 : index
    %203 = vector.load %arg9[%c1_92, %c2_93, %c0_94] : memref<2x6x32xf32, #tpu.memory_space<vmem>>, vector<1x1x32xf32>
    %204 = vector.shape_cast %203 : vector<1x1x32xf32> to vector<1x32xf32>
    %c1_95 = arith.constant 1 : index
    %c3_96 = arith.constant 3 : index
    %c0_97 = arith.constant 0 : index
    %205 = vector.load %arg9[%c1_95, %c3_96, %c0_97] : memref<2x6x32xf32, #tpu.memory_space<vmem>>, vector<1x1x32xf32>
    %206 = vector.shape_cast %205 : vector<1x1x32xf32> to vector<1x32xf32>
    %c1_98 = arith.constant 1 : index
    %c4_99 = arith.constant 4 : index
    %c0_100 = arith.constant 0 : index
    %207 = vector.load %arg9[%c1_98, %c4_99, %c0_100] : memref<2x6x32xf32, #tpu.memory_space<vmem>>, vector<1x1x32xf32>
    %208 = vector.shape_cast %207 : vector<1x1x32xf32> to vector<1x32xf32>
    %c1_101 = arith.constant 1 : index
    %c5_102 = arith.constant 5 : index
    %c0_103 = arith.constant 0 : index
    %209 = vector.load %arg9[%c1_101, %c5_102, %c0_103] : memref<2x6x32xf32, #tpu.memory_space<vmem>>, vector<1x1x32xf32>
    %210 = vector.shape_cast %209 : vector<1x1x32xf32> to vector<1x32xf32>
    %cst_104 = arith.constant dense<0.000000e+00> : vector<32xf32>
    %211 = vector.multi_reduction <add>, %186, %cst_104 [1] : vector<32x32xf32> to vector<32xf32>
    %212 = vector.shape_cast %211 : vector<32xf32> to vector<32x1xf32>
    %cst_105 = arith.constant 3.200000e+01 : f32
    %213 = vector.broadcast %cst_105 : f32 to vector<32x1xf32>
    %214 = arith.divf %212, %213 : vector<32x1xf32>
    %215 = vector.broadcast %214 : vector<32x1xf32> to vector<32x32xf32>
    %216 = arith.subf %186, %215 : vector<32x32xf32>
    %217 = arith.mulf %216, %216 : vector<32x32xf32>
    %cst_106 = arith.constant dense<0.000000e+00> : vector<32xf32>
    %218 = vector.multi_reduction <add>, %217, %cst_106 [1] : vector<32x32xf32> to vector<32xf32>
    %219 = vector.shape_cast %218 : vector<32xf32> to vector<32x1xf32>
    %cst_107 = arith.constant 3.200000e+01 : f32
    %220 = vector.broadcast %cst_107 : f32 to vector<32x1xf32>
    %221 = arith.divf %219, %220 : vector<32x1xf32>
    %cst_108 = arith.constant 9.99999974E-6 : f32
    %222 = vector.broadcast %cst_108 : f32 to vector<32x1xf32>
    %223 = arith.addf %221, %222 : vector<32x1xf32>
    %224 = math.rsqrt %223 : vector<32x1xf32>
    %225 = vector.broadcast %224 : vector<32x1xf32> to vector<32x32xf32>
    %226 = arith.mulf %216, %225 : vector<32x32xf32>
    %227 = vector.broadcast %200 : vector<1x32xf32> to vector<32x32xf32>
    %228 = arith.mulf %226, %227 : vector<32x32xf32>
    %229 = vector.broadcast %202 : vector<1x32xf32> to vector<32x32xf32>
    %230 = arith.addf %228, %229 : vector<32x32xf32>
    %231 = arith.truncf %230 : vector<32x32xf32> to vector<32x32xbf16>
    %cst_109 = arith.constant dense<0.000000e+00> : vector<32x128xf32>
    %232 = tpu.matmul %231, %188, %cst_109 {dimension_numbers = #tpu.dot_dimension_numbers<[1], [0], [0], [1], [0, 0, 1, 1], [], []>} : vector<32x32xbf16>, vector<32x128xbf16>, vector<32x128xf32> -> vector<32x128xf32>
    %233 = vector.broadcast %196 : vector<1x128xf32> to vector<32x128xf32>
    %234 = arith.addf %232, %233 : vector<32x128xf32>
    %235 = vector.extract_strided_slice %234 {offsets = [0, 0], sizes = [32, 8], strides = [1, 1]} : vector<32x128xf32> to vector<32x8xf32>
    %236 = vector.shape_cast %235 : vector<32x8xf32> to vector<1x2x16x8xf32>
    %237 = vector.extract_strided_slice %234 {offsets = [0, 8], sizes = [32, 8], strides = [1, 1]} : vector<32x128xf32> to vector<32x8xf32>
    %238 = vector.shape_cast %237 : vector<32x8xf32> to vector<1x2x16x8xf32>
    %239 = vector.extract_strided_slice %234 {offsets = [0, 16], sizes = [32, 8], strides = [1, 1]} : vector<32x128xf32> to vector<32x8xf32>
    %240 = vector.shape_cast %239 : vector<32x8xf32> to vector<1x2x16x8xf32>
    %241 = vector.extract_strided_slice %234 {offsets = [0, 24], sizes = [32, 8], strides = [1, 1]} : vector<32x128xf32> to vector<32x8xf32>
    %242 = vector.shape_cast %241 : vector<32x8xf32> to vector<1x2x16x8xf32>
    %243 = tpu.concatenate %236, %238, %240, %242 in 0 : vector<1x2x16x8xf32>, vector<1x2x16x8xf32>, vector<1x2x16x8xf32>, vector<1x2x16x8xf32> -> vector<4x2x16x8xf32>
    %244 = vector.shape_cast %243 : vector<4x2x16x8xf32> to vector<8x16x8xf32>
    %245 = arith.truncf %244 : vector<8x16x8xf32> to vector<8x16x8xbf16>
    %246 = vector.extract_strided_slice %234 {offsets = [0, 32], sizes = [32, 8], strides = [1, 1]} : vector<32x128xf32> to vector<32x8xf32>
    %247 = vector.shape_cast %246 : vector<32x8xf32> to vector<1x2x16x8xf32>
    %248 = vector.extract_strided_slice %234 {offsets = [0, 40], sizes = [32, 8], strides = [1, 1]} : vector<32x128xf32> to vector<32x8xf32>
    %249 = vector.shape_cast %248 : vector<32x8xf32> to vector<1x2x16x8xf32>
    %250 = vector.extract_strided_slice %234 {offsets = [0, 48], sizes = [32, 8], strides = [1, 1]} : vector<32x128xf32> to vector<32x8xf32>
    %251 = vector.shape_cast %250 : vector<32x8xf32> to vector<1x2x16x8xf32>
    %252 = vector.extract_strided_slice %234 {offsets = [0, 56], sizes = [32, 8], strides = [1, 1]} : vector<32x128xf32> to vector<32x8xf32>
    %253 = vector.shape_cast %252 : vector<32x8xf32> to vector<1x2x16x8xf32>
    %254 = tpu.concatenate %247, %249, %251, %253 in 0 : vector<1x2x16x8xf32>, vector<1x2x16x8xf32>, vector<1x2x16x8xf32>, vector<1x2x16x8xf32> -> vector<4x2x16x8xf32>
    %255 = vector.shape_cast %254 : vector<4x2x16x8xf32> to vector<8x16x8xf32>
    %256 = arith.truncf %255 : vector<8x16x8xf32> to vector<8x16x8xbf16>
    %257 = vector.extract_strided_slice %234 {offsets = [0, 64], sizes = [32, 8], strides = [1, 1]} : vector<32x128xf32> to vector<32x8xf32>
    %258 = vector.shape_cast %257 : vector<32x8xf32> to vector<1x2x16x8xf32>
    %259 = vector.extract_strided_slice %234 {offsets = [0, 72], sizes = [32, 8], strides = [1, 1]} : vector<32x128xf32> to vector<32x8xf32>
    %260 = vector.shape_cast %259 : vector<32x8xf32> to vector<1x2x16x8xf32>
    %261 = vector.extract_strided_slice %234 {offsets = [0, 80], sizes = [32, 8], strides = [1, 1]} : vector<32x128xf32> to vector<32x8xf32>
    %262 = vector.shape_cast %261 : vector<32x8xf32> to vector<1x2x16x8xf32>
    %263 = vector.extract_strided_slice %234 {offsets = [0, 88], sizes = [32, 8], strides = [1, 1]} : vector<32x128xf32> to vector<32x8xf32>
    %264 = vector.shape_cast %263 : vector<32x8xf32> to vector<1x2x16x8xf32>
    %265 = tpu.concatenate %258, %260, %262, %264 in 0 : vector<1x2x16x8xf32>, vector<1x2x16x8xf32>, vector<1x2x16x8xf32>, vector<1x2x16x8xf32> -> vector<4x2x16x8xf32>
    %266 = vector.shape_cast %265 : vector<4x2x16x8xf32> to vector<8x16x8xf32>
    %267 = arith.truncf %266 : vector<8x16x8xf32> to vector<8x16x8xbf16>
    "tpu.trace_start"() <{level = 10 : i32, message = "znf,zmf->znm"}> : () -> ()
    %cst_110 = arith.constant dense<0.000000e+00> : vector<8x16x16xf32>
    %268 = tpu.matmul %245, %256, %cst_110 {dimension_numbers = #tpu.dot_dimension_numbers<[2], [2], [1], [1], [0, 0, 0, 1, 1, 1], [0], [0]>} : vector<8x16x8xbf16>, vector<8x16x8xbf16>, vector<8x16x16xf32> -> vector<8x16x16xf32>
    "tpu.trace_stop"() : () -> ()
    %cst_111 = arith.constant dense<0xFF800000> : vector<8x16xf32>
    %269 = vector.multi_reduction <maximumf>, %268, %cst_111 [2] : vector<8x16x16xf32> to vector<8x16xf32>
    %270 = vector.shape_cast %269 : vector<8x16xf32> to vector<8x16x1xf32>
    %271 = vector.broadcast %270 : vector<8x16x1xf32> to vector<8x16x16xf32>
    %272 = arith.subf %268, %271 : vector<8x16x16xf32>
    %273 = math.exp %272 : vector<8x16x16xf32>
    %cst_112 = arith.constant dense<0.000000e+00> : vector<8x16xf32>
    %274 = vector.multi_reduction <add>, %273, %cst_112 [2] : vector<8x16x16xf32> to vector<8x16xf32>
    %275 = vector.shape_cast %274 : vector<8x16xf32> to vector<8x16x1xf32>
    %276 = tpu.reciprocal %275 {approx = true} : vector<8x16x1xf32> -> vector<8x16x1xf32>
    %277 = vector.broadcast %276 : vector<8x16x1xf32> to vector<8x16x16xf32>
    %278 = arith.mulf %273, %277 : vector<8x16x16xf32>
    %279 = arith.truncf %278 : vector<8x16x16xf32> to vector<8x16x16xbf16>
    "tpu.trace_start"() <{level = 10 : i32, message = "znm,zmf->znf"}> : () -> ()
    %cst_113 = arith.constant dense<0.000000e+00> : vector<8x16x8xf32>
    %280 = tpu.matmul %279, %267, %cst_113 {dimension_numbers = #tpu.dot_dimension_numbers<[2], [1], [1], [2], [0, 0, 0, 1, 1, 2], [0], [0]>} : vector<8x16x16xbf16>, vector<8x16x8xbf16>, vector<8x16x8xf32> -> vector<8x16x8xf32>
    "tpu.trace_stop"() : () -> ()
    %281 = vector.extract_strided_slice %280 {offsets = [0, 0, 0], sizes = [2, 16, 8], strides = [1, 1, 1]} : vector<8x16x8xf32> to vector<2x16x8xf32>
    %282 = vector.shape_cast %281 : vector<2x16x8xf32> to vector<32x8xf32>
    %283 = vector.extract_strided_slice %280 {offsets = [2, 0, 0], sizes = [2, 16, 8], strides = [1, 1, 1]} : vector<8x16x8xf32> to vector<2x16x8xf32>
    %284 = vector.shape_cast %283 : vector<2x16x8xf32> to vector<32x8xf32>
    %285 = vector.extract_strided_slice %280 {offsets = [4, 0, 0], sizes = [2, 16, 8], strides = [1, 1, 1]} : vector<8x16x8xf32> to vector<2x16x8xf32>
    %286 = vector.shape_cast %285 : vector<2x16x8xf32> to vector<32x8xf32>
    %287 = vector.extract_strided_slice %280 {offsets = [6, 0, 0], sizes = [2, 16, 8], strides = [1, 1, 1]} : vector<8x16x8xf32> to vector<2x16x8xf32>
    %288 = vector.shape_cast %287 : vector<2x16x8xf32> to vector<32x8xf32>
    %289 = tpu.concatenate %282, %284, %286, %288 in 1 : vector<32x8xf32>, vector<32x8xf32>, vector<32x8xf32>, vector<32x8xf32> -> vector<32x32xf32>
    %290 = arith.truncf %289 : vector<32x32xf32> to vector<32x32xbf16>
    %cst_114 = arith.constant dense<0.000000e+00> : vector<32x32xf32>
    %291 = tpu.matmul %290, %192, %cst_114 {dimension_numbers = #tpu.dot_dimension_numbers<[1], [0], [0], [1], [0, 0, 1, 1], [], []>} : vector<32x32xbf16>, vector<32x32xbf16>, vector<32x32xf32> -> vector<32x32xf32>
    %292 = vector.broadcast %204 : vector<1x32xf32> to vector<32x32xf32>
    %293 = arith.addf %291, %292 : vector<32x32xf32>
    %294 = arith.addf %186, %293 : vector<32x32xf32>
    %cst_115 = arith.constant dense<0.000000e+00> : vector<32xf32>
    %295 = vector.multi_reduction <add>, %294, %cst_115 [1] : vector<32x32xf32> to vector<32xf32>
    %296 = vector.shape_cast %295 : vector<32xf32> to vector<32x1xf32>
    %cst_116 = arith.constant 3.200000e+01 : f32
    %297 = vector.broadcast %cst_116 : f32 to vector<32x1xf32>
    %298 = arith.divf %296, %297 : vector<32x1xf32>
    %299 = vector.broadcast %298 : vector<32x1xf32> to vector<32x32xf32>
    %300 = arith.subf %294, %299 : vector<32x32xf32>
    %301 = arith.mulf %300, %300 : vector<32x32xf32>
    %cst_117 = arith.constant dense<0.000000e+00> : vector<32xf32>
    %302 = vector.multi_reduction <add>, %301, %cst_117 [1] : vector<32x32xf32> to vector<32xf32>
    %303 = vector.shape_cast %302 : vector<32xf32> to vector<32x1xf32>
    %cst_118 = arith.constant 3.200000e+01 : f32
    %304 = vector.broadcast %cst_118 : f32 to vector<32x1xf32>
    %305 = arith.divf %303, %304 : vector<32x1xf32>
    %cst_119 = arith.constant 9.99999974E-6 : f32
    %306 = vector.broadcast %cst_119 : f32 to vector<32x1xf32>
    %307 = arith.addf %305, %306 : vector<32x1xf32>
    %308 = math.rsqrt %307 : vector<32x1xf32>
    %309 = vector.broadcast %308 : vector<32x1xf32> to vector<32x32xf32>
    %310 = arith.mulf %300, %309 : vector<32x32xf32>
    %311 = vector.broadcast %206 : vector<1x32xf32> to vector<32x32xf32>
    %312 = arith.mulf %310, %311 : vector<32x32xf32>
    %313 = vector.broadcast %208 : vector<1x32xf32> to vector<32x32xf32>
    %314 = arith.addf %312, %313 : vector<32x32xf32>
    %315 = arith.truncf %314 : vector<32x32xf32> to vector<32x32xbf16>
    %cst_120 = arith.constant dense<0.000000e+00> : vector<32x128xf32>
    %316 = tpu.matmul %315, %190, %cst_120 {dimension_numbers = #tpu.dot_dimension_numbers<[1], [0], [0], [1], [0, 0, 1, 1], [], []>} : vector<32x32xbf16>, vector<32x128xbf16>, vector<32x128xf32> -> vector<32x128xf32>
    %317 = vector.broadcast %198 : vector<1x128xf32> to vector<32x128xf32>
    %318 = arith.addf %316, %317 : vector<32x128xf32>
    %cst_121 = arith.constant 5.000000e-01 : f32
    %319 = vector.broadcast %cst_121 : f32 to vector<32x128xf32>
    %320 = arith.mulf %319, %318 : vector<32x128xf32>
    %cst_122 = arith.constant 0.707106769 : f32
    %321 = vector.broadcast %cst_122 : f32 to vector<32x128xf32>
    %322 = arith.mulf %318, %321 : vector<32x128xf32>
    %323 = math.absf %322 : vector<32x128xf32>
    %cst_123 = arith.constant 0.327591091 : f32
    %324 = vector.broadcast %cst_123 : f32 to vector<32x128xf32>
    %325 = arith.mulf %324, %323 : vector<32x128xf32>
    %cst_124 = arith.constant 1.000000e+00 : f32
    %326 = vector.broadcast %cst_124 : f32 to vector<32x128xf32>
    %327 = arith.addf %326, %325 : vector<32x128xf32>
    %cst_125 = arith.constant 1.000000e+00 : f32
    %328 = vector.broadcast %cst_125 : f32 to vector<32x128xf32>
    %329 = arith.divf %328, %327 : vector<32x128xf32>
    %cst_126 = arith.constant 1.06140542 : f32
    %330 = vector.broadcast %cst_126 : f32 to vector<32x128xf32>
    %331 = arith.mulf %329, %330 : vector<32x128xf32>
    %cst_127 = arith.constant -1.45315206 : f32
    %332 = vector.broadcast %cst_127 : f32 to vector<32x128xf32>
    %333 = arith.addf %332, %331 : vector<32x128xf32>
    %334 = arith.mulf %329, %333 : vector<32x128xf32>
    %cst_128 = arith.constant 1.42141378 : f32
    %335 = vector.broadcast %cst_128 : f32 to vector<32x128xf32>
    %336 = arith.addf %335, %334 : vector<32x128xf32>
    %337 = arith.mulf %329, %336 : vector<32x128xf32>
    %cst_129 = arith.constant -0.284496725 : f32
    %338 = vector.broadcast %cst_129 : f32 to vector<32x128xf32>
    %339 = arith.addf %338, %337 : vector<32x128xf32>
    %340 = arith.mulf %329, %339 : vector<32x128xf32>
    %cst_130 = arith.constant 0.254829586 : f32
    %341 = vector.broadcast %cst_130 : f32 to vector<32x128xf32>
    %342 = arith.addf %341, %340 : vector<32x128xf32>
    %343 = arith.mulf %329, %342 : vector<32x128xf32>
    %cst_131 = arith.constant 0.000000e+00 : f32
    %344 = vector.broadcast %cst_131 : f32 to vector<32x128xf32>
    %345 = arith.subf %344, %323 : vector<32x128xf32>
    %346 = arith.mulf %345, %323 : vector<32x128xf32>
    %347 = math.exp %346 : vector<32x128xf32>
    %348 = arith.mulf %343, %347 : vector<32x128xf32>
    %cst_132 = arith.constant 1.000000e+00 : f32
    %349 = vector.broadcast %cst_132 : f32 to vector<32x128xf32>
    %350 = arith.subf %349, %348 : vector<32x128xf32>
    %cst_133 = arith.constant 0.000000e+00 : f32
    %351 = vector.broadcast %cst_133 : f32 to vector<32x128xf32>
    %352 = arith.cmpf olt, %322, %351 : vector<32x128xf32>
    %cst_134 = arith.constant 0.000000e+00 : f32
    %353 = vector.broadcast %cst_134 : f32 to vector<32x128xf32>
    %354 = arith.subf %353, %350 : vector<32x128xf32>
    %355 = arith.select %352, %354, %350 : vector<32x128xi1>, vector<32x128xf32>
    %cst_135 = arith.constant 1.000000e+00 : f32
    %356 = vector.broadcast %cst_135 : f32 to vector<32x128xf32>
    %357 = arith.addf %356, %355 : vector<32x128xf32>
    %358 = arith.mulf %320, %357 : vector<32x128xf32>
    %359 = arith.truncf %358 : vector<32x128xf32> to vector<32x128xbf16>
    %cst_136 = arith.constant dense<0.000000e+00> : vector<32x32xf32>
    %360 = tpu.matmul %359, %194, %cst_136 {dimension_numbers = #tpu.dot_dimension_numbers<[1], [0], [0], [1], [0, 0, 1, 1], [], []>} : vector<32x128xbf16>, vector<128x32xbf16>, vector<32x32xf32> -> vector<32x32xf32>
    %361 = vector.broadcast %210 : vector<1x32xf32> to vector<32x32xf32>
    %362 = arith.addf %360, %361 : vector<32x32xf32>
    %363 = arith.addf %294, %362 : vector<32x32xf32>
    %c0_137 = arith.constant 0 : index
    %c0_138 = arith.constant 0 : index
    %364 = vector.load %arg10[%c0_137, %c0_138] : memref<2x32xf32, #tpu.memory_space<vmem>>, vector<1x32xf32>
    %c1_139 = arith.constant 1 : index
    %c0_140 = arith.constant 0 : index
    %365 = vector.load %arg10[%c1_139, %c0_140] : memref<2x32xf32, #tpu.memory_space<vmem>>, vector<1x32xf32>
    %cst_141 = arith.constant dense<0.000000e+00> : vector<32xf32>
    %366 = vector.multi_reduction <add>, %363, %cst_141 [1] : vector<32x32xf32> to vector<32xf32>
    %367 = vector.shape_cast %366 : vector<32xf32> to vector<32x1xf32>
    %cst_142 = arith.constant 3.200000e+01 : f32
    %368 = vector.broadcast %cst_142 : f32 to vector<32x1xf32>
    %369 = arith.divf %367, %368 : vector<32x1xf32>
    %370 = vector.broadcast %369 : vector<32x1xf32> to vector<32x32xf32>
    %371 = arith.subf %363, %370 : vector<32x32xf32>
    %372 = arith.mulf %371, %371 : vector<32x32xf32>
    %cst_143 = arith.constant dense<0.000000e+00> : vector<32xf32>
    %373 = vector.multi_reduction <add>, %372, %cst_143 [1] : vector<32x32xf32> to vector<32xf32>
    %374 = vector.shape_cast %373 : vector<32xf32> to vector<32x1xf32>
    %cst_144 = arith.constant 3.200000e+01 : f32
    %375 = vector.broadcast %cst_144 : f32 to vector<32x1xf32>
    %376 = arith.divf %374, %375 : vector<32x1xf32>
    %cst_145 = arith.constant 9.99999974E-6 : f32
    %377 = vector.broadcast %cst_145 : f32 to vector<32x1xf32>
    %378 = arith.addf %376, %377 : vector<32x1xf32>
    %379 = math.rsqrt %378 : vector<32x1xf32>
    %380 = vector.broadcast %379 : vector<32x1xf32> to vector<32x32xf32>
    %381 = arith.mulf %371, %380 : vector<32x32xf32>
    %382 = vector.broadcast %364 : vector<1x32xf32> to vector<32x32xf32>
    %383 = arith.mulf %381, %382 : vector<32x32xf32>
    %384 = vector.broadcast %365 : vector<1x32xf32> to vector<32x32xf32>
    %385 = arith.addf %383, %384 : vector<32x32xf32>
    %c0_146 = arith.constant 0 : index
    %c0_147 = arith.constant 0 : index
    %386 = vector.load %arg11[%c0_146, %c0_147] : memref<32x32xf32, #tpu.memory_space<vmem>>, vector<32x32xf32>
    tpu.vector_store %arg11[%c0_146, %c0_147], %385 {strides = array<i32>} : memref<32x32xf32, #tpu.memory_space<vmem>>, vector<32x32xf32>,
    return
  }
  func.func @transform_0(%arg0: i32) -> (i32, i32) {
    %c0_i32 = arith.constant 0 : i32
    %c0_i32_0 = arith.constant 0 : i32
    return %arg0, %c0_i32 : i32, i32
  }
  func.func @transform_1(%arg0: i32) -> (i32, i32) {
    %c0_i32 = arith.constant 0 : i32
    %c0_i32_0 = arith.constant 0 : i32
    %c0_i32_1 = arith.constant 0 : i32
    return %c0_i32, %c0_i32_0 : i32, i32
  }
  func.func @transform_2(%arg0: i32) -> (i32, i32) {
    %c0_i32 = arith.constant 0 : i32
    %c0_i32_0 = arith.constant 0 : i32
    %c0_i32_1 = arith.constant 0 : i32
    return %c0_i32, %c0_i32_0 : i32, i32
  }
  func.func @transform_3(%arg0: i32) -> (i32, i32, i32) {
    %c0_i32 = arith.constant 0 : i32
    %c0_i32_0 = arith.constant 0 : i32
    %c0_i32_1 = arith.constant 0 : i32
    %c0_i32_2 = arith.constant 0 : i32
    return %c0_i32, %c0_i32_0, %c0_i32_1 : i32, i32, i32
  }
  func.func @transform_4(%arg0: i32) -> (i32, i32, i32) {
    %c0_i32 = arith.constant 0 : i32
    %c0_i32_0 = arith.constant 0 : i32
    %c0_i32_1 = arith.constant 0 : i32
    %c0_i32_2 = arith.constant 0 : i32
    return %c0_i32, %c0_i32_0, %c0_i32_1 : i32, i32, i32
  }
  func.func @transform_5(%arg0: i32) -> (i32, i32, i32) {
    %c0_i32 = arith.constant 0 : i32
    %c0_i32_0 = arith.constant 0 : i32
    %c0_i32_1 = arith.constant 0 : i32
    %c0_i32_2 = arith.constant 0 : i32
    return %c0_i32, %c0_i32_0, %c0_i32_1 : i32, i32, i32
  }
  func.func @transform_6(%arg0: i32) -> (i32, i32, i32) {
    %c0_i32 = arith.constant 0 : i32
    %c0_i32_0 = arith.constant 0 : i32
    %c0_i32_1 = arith.constant 0 : i32
    %c0_i32_2 = arith.constant 0 : i32
    return %c0_i32, %c0_i32_0, %c0_i32_1 : i32, i32, i32
  }
  func.func @transform_7(%arg0: i32) -> (i32, i32, i32) {
    %c0_i32 = arith.constant 0 : i32
    %c0_i32_0 = arith.constant 0 : i32
    %c0_i32_1 = arith.constant 0 : i32
    %c0_i32_2 = arith.constant 0 : i32
    return %c0_i32, %c0_i32_0, %c0_i32_1 : i32, i32, i32
  }
  func.func @transform_8(%arg0: i32) -> (i32, i32, i32) {
    %c0_i32 = arith.constant 0 : i32
    %c0_i32_0 = arith.constant 0 : i32
    %c0_i32_1 = arith.constant 0 : i32
    %c0_i32_2 = arith.constant 0 : i32
    return %c0_i32, %c0_i32_0, %c0_i32_1 : i32, i32, i32
  }
  func.func @transform_9(%arg0: i32) -> (i32, i32) {
    %c0_i32 = arith.constant 0 : i32
    %c0_i32_0 = arith.constant 0 : i32
    %c0_i32_1 = arith.constant 0 : i32
    return %c0_i32, %c0_i32_0 : i32, i32
  }
  func.func @transform_10(%arg0: i32) -> (i32, i32) {
    %c0_i32 = arith.constant 0 : i32
    %c0_i32_0 = arith.constant 0 : i32
    return %arg0, %c0_i32 : i32, i32
  }
}

</mosaic_0001>

<llo_original>
// kernel: vit_det_forward.1
$region0: #{vit_det_forward.1}
  #allocation0 [shape = 'u32[]', space=smem, size = 0x4, offset = 0x4, fixed_abs, tag = 'smem constant byte address 0x4 - core index']
  #allocation1 [shape = 'u32[144,128]{1,0:T(1,128)}', space=vmem, size = 0x12000, scoped, tag = 'internal scratch']
  %s0 = inlined_call_operand.vmem [shape: f32[32,48], index: 0, kind: input, shape index: {}]
  %s1 = inlined_call_operand.vmem [shape: f32[16,32], index: 1, kind: input, shape index: {}]
  %s2 = inlined_call_operand.vmem [shape: bf16[48,32], index: 2, kind: input, shape index: {}]
  %s3 = inlined_call_operand.vmem [shape: bf16[2,32,256], index: 3, kind: input, shape index: {}]
  %s4 = inlined_call_operand.vmem [shape: bf16[2,32,32], index: 4, kind: input, shape index: {}]
  %s5 = inlined_call_operand.vmem [shape: bf16[2,128,32], index: 5, kind: input, shape index: {}]
  %s6 = inlined_call_operand.vmem [shape: f32[2,1,128], index: 6, kind: input, shape index: {}]
  %s7 = inlined_call_operand.vmem [shape: f32[2,1,128], index: 7, kind: input, shape index: {}]
  %s8 = inlined_call_operand.vmem [shape: f32[2,6,32], index: 8, kind: input, shape index: {}]
  %s9 = inlined_call_operand.vmem [shape: f32[2,32], index: 9, kind: input, shape index: {}]
  %s10 = inlined_call_operand.hbm [shape: f32[32,32], index: 10, kind: output, shape index: {}]
  %s11 = sld [smem:[#allocation0]]
  $region50: #{vit_det_forward.1} parent=0
    _
  %s13 = ssub.s32 1, %s11
  %s14 = scalar_select 0, %s13, %s11
  $region1: #{vit_det_forward.1} parent=0
    #allocation2 [shape = 'u8[16384]{0}', space=vmem, size = 0x4000, scoped, tag = 'output window, operand 0, single buffered']
    #allocation3 [shape = 's32[1]{0}', space=sflag, size = 0x4, scoped, tag = 'scoped memory for vit_det_forward.1']
    %15 = vsyncpa [#allocation3], 0
    // Predicated region
    $region2: #{vit_det_forward.1} parent=1 // pred_check
      _
    $region3: #{vit_det_forward.1} parent=1 // pred_check_branch
      %17 = sbr.rel (0) target = $region5
    $region4: #{vit_det_forward.1} parent=1 // pred_region
      _
    $region5: #{vit_det_forward.1} parent=1 // pred_fallthru
      _
    // Predicated region
    $region6: #{vit_det_forward.1} parent=1 // pred_check
      _
    $region7: #{vit_det_forward.1} parent=1 // pred_check_branch
      %19 = sbr.rel (0) target = $region9
    $region8: #{vit_det_forward.1} parent=1 // pred_region
      _
    $region9: #{vit_det_forward.1} parent=1 // pred_fallthru
      _
    // Predicated region
    $region10: #{vit_det_forward.1} parent=1 // pred_check
      _
    $region11: #{vit_det_forward.1} parent=1 // pred_check_branch
      %21 = sbr.rel (0) target = $region13
    $region12: #{vit_det_forward.1} parent=1 // pred_region
      _
    $region13: #{vit_det_forward.1} parent=1 // pred_fallthru
      _
    // Predicated region
    $region14: #{vit_det_forward.1} parent=1 // pred_check
      _
    $region15: #{vit_det_forward.1} parent=1 // pred_check_branch
      %23 = sbr.rel (0) target = $region17
    $region16: #{vit_det_forward.1} parent=1 // pred_region
      _
    $region17: #{vit_det_forward.1} parent=1 // pred_fallthru
      _
    // Predicated region
    $region18: #{vit_det_forward.1} parent=1 // pred_check
      _
    $region19: #{vit_det_forward.1} parent=1 // pred_check_branch
      %25 = sbr.rel (0) target = $region21
    $region20: #{vit_det_forward.1} parent=1 // pred_region
      _
    $region21: #{vit_det_forward.1} parent=1 // pred_fallthru
      _
    // Predicated region
    $region22: #{vit_det_forward.1} parent=1 // pred_check
      _
    $region23: #{vit_det_forward.1} parent=1 // pred_check_branch
      %27 = sbr.rel (0) target = $region25
    $region24: #{vit_det_forward.1} parent=1 // pred_region
      _
    $region25: #{vit_det_forward.1} parent=1 // pred_fallthru
      _
    // Predicated region
    $region26: #{vit_det_forward.1} parent=1 // pred_check
      _
    $region27: #{vit_det_forward.1} parent=1 // pred_check_branch
      %29 = sbr.rel (0) target = $region29
    $region28: #{vit_det_forward.1} parent=1 // pred_region
      _
    $region29: #{vit_det_forward.1} parent=1 // pred_fallthru
      _
    // Predicated region
    $region30: #{vit_det_forward.1} parent=1 // pred_check
      _
    $region31: #{vit_det_forward.1} parent=1 // pred_check_branch
      %31 = sbr.rel (0) target = $region33
    $region32: #{vit_det_forward.1} parent=1 // pred_region
      _
    $region33: #{vit_det_forward.1} parent=1 // pred_fallthru
      _
    // Predicated region
    $region34: #{vit_det_forward.1} parent=1 // pred_check
      _
    $region35: #{vit_det_forward.1} parent=1 // pred_check_branch
      %33 = sbr.rel (0) target = $region37
    $region36: #{vit_det_forward.1} parent=1 // pred_region
      _
    $region37: #{vit_det_forward.1} parent=1 // pred_fallthru
      _
    // Predicated region
    $region38: #{vit_det_forward.1} parent=1 // pred_check
      _
    $region39: #{vit_det_forward.1} parent=1 // pred_check_branch
      %35 = sbr.rel (0) target = $region41
    $region40: #{vit_det_forward.1} parent=1 // pred_region
      _
    $region41: #{vit_det_forward.1} parent=1 // pred_fallthru
      _
    %v37 = vld [vmem:[%s0] sm:$0xff]
    %v38 = vld [vmem:[%s0 + $0x8] sm:$0xff]
    %v39 = vld [vmem:[%s0 + $0x10] sm:$0xff]
    %v40 = vld [vmem:[%s0 + $0x18] sm:$0xff]
    %v41 = vpack.c.bf16 %v38, %v37
    %v42 = vpack.c.bf16 %v40, %v39
    %v43 = vld [vmem:[%s2] sm:$0xf]
    %v44 = vld [vmem:[%s2 + $0x4] sm:$0xf]
    %v45 = vld [vmem:[%s2 + $0x8] sm:$0xf]
    %v46 = vld [vmem:[%s2 + $0xc] sm:$0xf]
    %v47 = vld [vmem:[%s2 + $0x10] sm:$0xf]
    %v48 = vld [vmem:[%s2 + $0x14] sm:$0xf]
    %v55 = vunpack.c.l.b16 %v43
    %v56 = vunpack.c.l.b16 %v44
    %v57 = vunpack.c.l.b16 %v45
    %v58 = vunpack.c.l.b16 %v46
    %v59 = vunpack.c.l.b16 %v47
    %v60 = vunpack.c.l.b16 %v48
    %v61 = vpack.c.b16 %v56, %v55
    %v62 = vpack.c.b16 %v58, %v57
    %v63 = vpack.c.b16 %v60, %v59
    %vm67 = vcmask 392192
    %v69 = vsel %vm67, %v41, 0
    %v72 = vsel %vm67, %v42, 0
    %74 = vmatprep.subr.bf16.mxu0 0
    %75 = vmatpush1.bf16.msra.mxu0 %v61
    %76 = vmatprep.subr.bf16.mxu0 0
    %77 = vmatpush1.bf16.msra.mxu0 %v62
    %78 = vmatprep.subr.bf16.mxu0 0
    %79 = vmatpush1.bf16.msra.mxu0 %v63
    %80 = vmatprep.subr.bf16.mxu0 0
    %81 = vmatpush1.bf16.msra.mxu0 0
    %82 = vmatprep.subr.bf16.mxu0 0
    %83 = vmatpush1.bf16.msra.mxu0 0
    %84 = vmatprep.subr.bf16.mxu0 0
    %85 = vmatpush1.bf16.msra.mxu0 0
    %86 = vmatprep.subr.bf16.mxu0 0
    %87 = vmatpush1.bf16.msra.mxu0 0
    %88 = vmatprep.subr.bf16.mxu0 0
    %89 = vmatpush1.bf16.msra.mxu0 0
    %90 = vmatprep.subr.bf16.mxu0 0
    %91 = vmatpush1.bf16.msra.mxu0 0
    %92 = vmatprep.subr.bf16.mxu0 0
    %93 = vmatpush1.bf16.msra.mxu0 0
    %94 = vmatprep.subr.bf16.mxu0 0
    %95 = vmatpush1.bf16.msra.mxu0 0
    %96 = vmatprep.subr.bf16.mxu0 0
    %97 = vmatpush1.bf16.msra.mxu0 0
    %98 = vmatprep.subr.bf16.mxu0 0
    %99 = vmatpush1.bf16.msra.mxu0 0
    %100 = vmatprep.subr.bf16.mxu0 0
    %101 = vmatpush1.bf16.msra.mxu0 0
    %102 = vmatprep.subr.bf16.mxu0 0
    %103 = vmatpush1.bf16.msra.mxu0 0
    %104 = vmatprep.subr.bf16.mxu0 0
    %105 = vmatpush1.bf16.msra.mxu0 0
    %106 = vmatprep.mubr.bf16.mxu0 0
    %107 = vmatmul.mubr.bf16.gmra.mrb[0].mxu0 %v69
    %v108 = vpop.f32.mrb[0].mxu0
    %v109 = vadd.f32 0.0, %v108
    %v110 = vpop.f32.mrb[0].mxu0
    %v111 = vpop.f32.mrb[0].mxu0
    %v112 = vadd.f32 0.0, %v111
    %v113 = vpop.f32.mrb[0].mxu0
    %114 = vmatprep.mubr.bf16.mxu0 0
    %115 = vmatmul.mubr.bf16.gmra.mrb[0].mxu0 %v72
    %v116 = vpop.f32.mrb[0].mxu0
    %v117 = vadd.f32 0.0, %v116
    %v118 = vpop.f32.mrb[0].mxu0
    %v119 = vpop.f32.mrb[0].mxu0
    %v120 = vadd.f32 0.0, %v119
    %v121 = vpop.f32.mrb[0].mxu0
    %122 = vdwg.mxu0
    %v123 = vld [vmem:[%s1] sm:$0xff]
    %v124 = vld [vmem:[%s1 + $0x8] sm:$0xff]
    %v125 = vadd.f32 %v109, %v123
    %v126 = vadd.f32 %v112, %v124
    %v127 = vadd.f32 %v117, %v123
    %v128 = vadd.f32 %v120, %v124
    %v129 = vld [vmem:[%s3] sm:$0xf]
    %v130 = vld [vmem:[%s3 + $0x8] sm:$0xf]
    %v131 = vld [vmem:[%s3 + $0x10] sm:$0xf]
    %v132 = vld [vmem:[%s3 + $0x18] sm:$0xf]
    %v133 = vld [vmem:[%s3 + $0x4] sm:$0xf]
    %v134 = vld [vmem:[%s3 + $0xc] sm:$0xf]
    %v135 = vld [vmem:[%s3 + $0x14] sm:$0xf]
    %v136 = vld [vmem:[%s3 + $0x1c] sm:$0xf]
    %v137 = vld [vmem:[%s4] sm:$0xf]
    %v138 = vld [vmem:[%s4 + $0x4] sm:$0xf]
    %v139 = vld [vmem:[%s4 + $0x8] sm:$0xf]
    %v140 = vld [vmem:[%s4 + $0xc] sm:$0xf]
    %v141 = vld [vmem:[%s5] sm:$0xf]
    %v142 = vld [vmem:[%s5 + $0x4] sm:$0xf]
    %v143 = vld [vmem:[%s5 + $0x8] sm:$0xf]
    %v144 = vld [vmem:[%s5 + $0xc] sm:$0xf]
    %v145 = vld [vmem:[%s5 + $0x10] sm:$0xf]
    %v146 = vld [vmem:[%s5 + $0x14] sm:$0xf]
    %v147 = vld [vmem:[%s5 + $0x18] sm:$0xf]
    %v148 = vld [vmem:[%s5 + $0x1c] sm:$0xf]
    %v149 = vld [vmem:[%s5 + $0x20] sm:$0xf]
    %v150 = vld [vmem:[%s5 + $0x24] sm:$0xf]
    %v151 = vld [vmem:[%s5 + $0x28] sm:$0xf]
    %v152 = vld [vmem:[%s5 + $0x2c] sm:$0xf]
    %v153 = vld [vmem:[%s5 + $0x30] sm:$0xf]
    %v154 = vld [vmem:[%s5 + $0x34] sm:$0xf]
    %v155 = vld [vmem:[%s5 + $0x38] sm:$0xf]
    %v156 = vld [vmem:[%s5 + $0x3c] sm:$0xf]
    %v157 = vld [vmem:[%s6] sm:$0x1]
    %v158 = vld [vmem:[%s7] sm:$0x1]
    %v159 = vld [vmem:[%s8] sm:$0x1]
    %v160 = vld [vmem:[%s8 + $0x1] sm:$0x1]
    %v161 = vld [vmem:[%s8 + $0x2] sm:$0x1]
    %v162 = vld [vmem:[%s8 + $0x3] sm:$0x1]
    %v163 = vld [vmem:[%s8 + $0x4] sm:$0x1]
    %v164 = vld [vmem:[%s8 + $0x5] sm:$0x1]
    %vm165 = vcmask 261120
    %v166 = vsel %vm165, %v125, 0.0
    %167 = vadd.xlane.f32.xlu0 %v166
    %v168 = vpop.xlane.xlu0 %167
    %v169 = vsel %vm165, %v126, 0.0
    %170 = vadd.xlane.f32.xlu0 %v169
    %v171 = vpop.xlane.xlu0 %170
    %v172 = vsel %vm165, %v127, 0.0
    %173 = vadd.xlane.f32.xlu0 %v172
    %v174 = vpop.xlane.xlu0 %173
    %v175 = vsel %vm165, %v128, 0.0
    %176 = vadd.xlane.f32.xlu0 %v175
    %v177 = vpop.xlane.xlu0 %176
    %v178 = vrcp.pop 32.0
    %v179 = vmul.f32 %v168, %v178
    %v180 = vmul.f32 %v171, %v178
    %v181 = vmul.f32 %v174, %v178
    %v182 = vmul.f32 %v177, %v178
    %v183 = vsub.f32 %v125, %v179
    %v184 = vsub.f32 %v126, %v180
    %v185 = vsub.f32 %v127, %v181
    %v186 = vsub.f32 %v128, %v182
    %v187 = vmul.f32 %v183, %v183
    %v188 = vmul.f32 %v184, %v184
    %v189 = vmul.f32 %v185, %v185
    %v190 = vmul.f32 %v186, %v186
    %v191 = vsel %vm165, %v187, 0.0
    %192 = vadd.xlane.f32.xlu0 %v191
    %v193 = vpop.xlane.xlu0 %192
    %v194 = vsel %vm165, %v188, 0.0
    %195 = vadd.xlane.f32.xlu0 %v194
    %v196 = vpop.xlane.xlu0 %195
    %v197 = vsel %vm165, %v189, 0.0
    %198 = vadd.xlane.f32.xlu0 %v197
    %v199 = vpop.xlane.xlu0 %198
    %v200 = vsel %vm165, %v190, 0.0
    %201 = vadd.xlane.f32.xlu0 %v200
    %v202 = vpop.xlane.xlu0 %201
    %v203 = vmul.f32 %v193, %v178
    %v204 = vmul.f32 %v196, %v178
    %v205 = vmul.f32 %v199, %v178
    %v206 = vmul.f32 %v202, %v178
    %v207 = vadd.f32 %v203, 1e-05
    %v208 = vadd.f32 %v204, 1e-05
    %v209 = vadd.f32 %v205, 1e-05
    %v210 = vadd.f32 %v206, 1e-05
    %v211 = vrsqrt.pop %v207
    %v212 = vrsqrt.pop %v208
    %v213 = vrsqrt.pop %v209
    %v214 = vrsqrt.pop %v210
    %v215 = vmul.f32 %v183, %v211
    %v216 = vmul.f32 %v184, %v212
    %v217 = vmul.f32 %v185, %v213
    %v218 = vmul.f32 %v186, %v214
    %v219 = vlaneseq
    %v220 = vshrl.u32 %v219, 7
    %v221 = vsub.s32 0, %v220
    %v222 = vrot.slane %v159, %v221
    %v223 = vmul.f32 %v215, %v222
    %v224 = vmul.f32 %v216, %v222
    %v225 = vmul.f32 %v217, %v222
    %v226 = vmul.f32 %v218, %v222
    %v227 = vlaneseq
    %v228 = vshrl.u32 %v227, 7
    %v229 = vsub.s32 0, %v228
    %v230 = vrot.slane %v160, %v229
    %v231 = vadd.f32 %v223, %v230
    %v232 = vadd.f32 %v224, %v230
    %v233 = vadd.f32 %v225, %v230
    %v234 = vadd.f32 %v226, %v230
    %v235 = vpack.c.bf16 %v232, %v231
    %v236 = vpack.c.bf16 %v234, %v233
    %v238 = vlaneseq
    %v239 = vshrl.u32 %v238, 7
    %v240 = vsub.s32 0, %v239
    %v241 = vrot.slane %v157, %v240
    %v247 = vunpack.c.l.b16 %v129
    %v248 = vunpack.c.l.b16 %v130
    %v249 = vunpack.c.l.b16 %v131
    %v250 = vunpack.c.l.b16 %v132
    %v251 = vpack.c.b16 %v248, %v247
    %v252 = vpack.c.b16 %v250, %v249
    %v256 = vsel %vm165, %v235, 0
    %v259 = vsel %vm165, %v236, 0
    %261 = vmatprep.subr.bf16.mxu0 0
    %262 = vmatpush1.bf16.msra.mxu0 %v251
    %263 = vmatprep.subr.bf16.mxu0 0
    %264 = vmatpush1.bf16.msra.mxu0 %v252
    %265 = vmatprep.subr.bf16.mxu0 0
    %266 = vmatpush1.bf16.msra.mxu0 0
    %267 = vmatprep.subr.bf16.mxu0 0
    %268 = vmatpush1.bf16.msra.mxu0 0
    %269 = vmatprep.subr.bf16.mxu0 0
    %270 = vmatpush1.bf16.msra.mxu0 0
    %271 = vmatprep.subr.bf16.mxu0 0
    %272 = vmatpush1.bf16.msra.mxu0 0
    %273 = vmatprep.subr.bf16.mxu0 0
    %274 = vmatpush1.bf16.msra.mxu0 0
    %275 = vmatprep.subr.bf16.mxu0 0
    %276 = vmatpush1.bf16.msra.mxu0 0
    %277 = vmatprep.subr.bf16.mxu0 0
    %278 = vmatpush1.bf16.msra.mxu0 0
    %279 = vmatprep.subr.bf16.mxu0 0
    %280 = vmatpush1.bf16.msra.mxu0 0
    %281 = vmatprep.subr.bf16.mxu0 0
    %282 = vmatpush1.bf16.msra.mxu0 0
    %283 = vmatprep.subr.bf16.mxu0 0
    %284 = vmatpush1.bf16.msra.mxu0 0
    %285 = vmatprep.subr.bf16.mxu0 0
    %286 = vmatpush1.bf16.msra.mxu0 0
    %287 = vmatprep.subr.bf16.mxu0 0
    %288 = vmatpush1.bf16.msra.mxu0 0
    %289 = vmatprep.subr.bf16.mxu0 0
    %290 = vmatpush1.bf16.msra.mxu0 0
    %291 = vmatprep.subr.bf16.mxu0 0
    %292 = vmatpush1.bf16.msra.mxu0 0
    %293 = vmatprep.mubr.bf16.mxu0 0
    %294 = vmatmul.mubr.bf16.gmra.mrb[0].mxu0 %v256
    %v295 = vpop.f32.mrb[0].mxu0
    %v296 = vadd.f32 %v241, %v295
    %v297 = vpop.f32.mrb[0].mxu0
    %v298 = vpop.f32.mrb[0].mxu0
    %v299 = vadd.f32 %v241, %v298
    %v300 = vpop.f32.mrb[0].mxu0
    %301 = vmatprep.mubr.bf16.mxu0 0
    %302 = vmatmul.mubr.bf16.gmra.mrb[0].mxu0 %v259
    %v303 = vpop.f32.mrb[0].mxu0
    %v304 = vadd.f32 %v241, %v303
    %v305 = vpop.f32.mrb[0].mxu0
    %v306 = vpop.f32.mrb[0].mxu0
    %v307 = vadd.f32 %v241, %v306
    %v308 = vpop.f32.mrb[0].mxu0
    %309 = vdwg.mxu0
    %314 = vrot.lane.b32.xlu0 %v296, 120
    %v315 = vpop.permute.xlu0 %314
    %316 = vrot.lane.b32.xlu0 %v299, 120
    %v317 = vpop.permute.xlu0 %316
    %318 = vrot.lane.b32.xlu0 %v304, 120
    %v319 = vpop.permute.xlu0 %318
    %320 = vrot.lane.b32.xlu0 %v307, 120
    %v321 = vpop.permute.xlu0 %320
    %326 = vrot.lane.b32.xlu0 %v296, 112
    %v327 = vpop.permute.xlu0 %326
    %328 = vrot.lane.b32.xlu0 %v299, 112
    %v329 = vpop.permute.xlu0 %328
    %330 = vrot.lane.b32.xlu0 %v304, 112
    %v331 = vpop.permute.xlu0 %330
    %332 = vrot.lane.b32.xlu0 %v307, 112
    %v333 = vpop.permute.xlu0 %332
    %338 = vrot.lane.b32.xlu0 %v296, 104
    %v339 = vpop.permute.xlu0 %338
    %340 = vrot.lane.b32.xlu0 %v299, 104
    %v341 = vpop.permute.xlu0 %340
    %342 = vrot.lane.b32.xlu0 %v304, 104
    %v343 = vpop.permute.xlu0 %342
    %344 = vrot.lane.b32.xlu0 %v307, 104
    %v345 = vpop.permute.xlu0 %344
    %v350 = vpack.c.bf16 %v299, %v296
    %v351 = vpack.c.bf16 %v307, %v304
    %v352 = vpack.c.bf16 %v317, %v315
    %v353 = vpack.c.bf16 %v321, %v319
    %v354 = vpack.c.bf16 %v329, %v327
    %v355 = vpack.c.bf16 %v333, %v331
    %v356 = vpack.c.bf16 %v341, %v339
    %v357 = vpack.c.bf16 %v345, %v343
    %359 = vrot.lane.b32.xlu0 %v350, 96
    %v360 = vpop.permute.xlu0 %359
    %vm361 = vcmask 64512
    %v363 = vsel %vm361, %v350, 0
    %v366 = vsel %vm361, %v360, 0
    %368 = vmatprep.subr.bf16.mxu0 0
    %369 = vmatpush1.bf16.xpose.msra.mxu0 %v366
    %370 = vmatprep.subr.bf16.mxu0 0
    %371 = vmatpush1.bf16.xpose.msra.mxu0 0
    %372 = vmatprep.subr.bf16.mxu0 0
    %373 = vmatpush1.bf16.xpose.msra.mxu0 0
    %374 = vmatprep.subr.bf16.mxu0 0
    %375 = vmatpush1.bf16.xpose.msra.mxu0 0
    %376 = vmatprep.subr.bf16.mxu0 0
    %377 = vmatpush1.bf16.xpose.msra.mxu0 0
    %378 = vmatprep.subr.bf16.mxu0 0
    %379 = vmatpush1.bf16.xpose.msra.mxu0 0
    %380 = vmatprep.subr.bf16.mxu0 0
    %381 = vmatpush1.bf16.xpose.msra.mxu0 0
    %382 = vmatprep.subr.bf16.mxu0 0
    %383 = vmatpush1.bf16.xpose.msra.mxu0 0
    %384 = vmatprep.subr.bf16.mxu0 0
    %385 = vmatpush1.bf16.xpose.msra.mxu0 0
    %386 = vmatprep.subr.bf16.mxu0 0
    %387 = vmatpush1.bf16.xpose.msra.mxu0 0
    %388 = vmatprep.subr.bf16.mxu0 0
    %389 = vmatpush1.bf16.xpose.msra.mxu0 0
    %390 = vmatprep.subr.bf16.mxu0 0
    %391 = vmatpush1.bf16.xpose.msra.mxu0 0
    %392 = vmatprep.subr.bf16.mxu0 0
    %393 = vmatpush1.bf16.xpose.msra.mxu0 0
    %394 = vmatprep.subr.bf16.mxu0 0
    %395 = vmatpush1.bf16.xpose.msra.mxu0 0
    %396 = vmatprep.subr.bf16.mxu0 0
    %397 = vmatpush1.bf16.xpose.msra.mxu0 0
    %398 = vmatprep.subr.bf16.mxu0 0
    %399 = vmatpush1.bf16.xpose.msra.mxu0 0
    %400 = vmatprep.mubr.bf16.mxu0 0
    %401 = vmatmul.mubr.bf16.gmra.mrb[0].mxu0 %v363
    %v402 = vpop.f32.mrb[0].mxu0
    %v403 = vadd.f32 0.0, %v402
    %v404 = vpop.f32.mrb[0].mxu0
    %v405 = vpop.f32.mrb[0].mxu0
    %v406 = vadd.f32 0.0, %v405
    %v407 = vpop.f32.mrb[0].mxu0
    %408 = vdwg.mxu0
    %410 = vrot.lane.b32.xlu0 %v351, 96
    %v411 = vpop.permute.xlu0 %410
    %v413 = vsel %vm361, %v351, 0
    %v416 = vsel %vm361, %v411, 0
    %418 = vmatprep.subr.bf16.mxu0 0
    %419 = vmatpush1.bf16.xpose.msra.mxu0 %v416
    %420 = vmatprep.subr.bf16.mxu0 0
    %421 = vmatpush1.bf16.xpose.msra.mxu0 0
    %422 = vmatprep.subr.bf16.mxu0 0
    %423 = vmatpush1.bf16.xpose.msra.mxu0 0
    %424 = vmatprep.subr.bf16.mxu0 0
    %425 = vmatpush1.bf16.xpose.msra.mxu0 0
    %426 = vmatprep.subr.bf16.mxu0 0
    %427 = vmatpush1.bf16.xpose.msra.mxu0 0
    %428 = vmatprep.subr.bf16.mxu0 0
    %429 = vmatpush1.bf16.xpose.msra.mxu0 0
    %430 = vmatprep.subr.bf16.mxu0 0
    %431 = vmatpush1.bf16.xpose.msra.mxu0 0
    %432 = vmatprep.subr.bf16.mxu0 0
    %433 = vmatpush1.bf16.xpose.msra.mxu0 0
    %434 = vmatprep.subr.bf16.mxu0 0
    %435 = vmatpush1.bf16.xpose.msra.mxu0 0
    %436 = vmatprep.subr.bf16.mxu0 0
    %437 = vmatpush1.bf16.xpose.msra.mxu0 0
    %438 = vmatprep.subr.bf16.mxu0 0
    %439 = vmatpush1.bf16.xpose.msra.mxu0 0
    %440 = vmatprep.subr.bf16.mxu0 0
    %441 = vmatpush1.bf16.xpose.msra.mxu0 0
    %442 = vmatprep.subr.bf16.mxu0 0
    %443 = vmatpush1.bf16.xpose.msra.mxu0 0
    %444 = vmatprep.subr.bf16.mxu0 0
    %445 = vmatpush1.bf16.xpose.msra.mxu0 0
    %446 = vmatprep.subr.bf16.mxu0 0
    %447 = vmatpush1.bf16.xpose.msra.mxu0 0
    %448 = vmatprep.subr.bf16.mxu0 0
    %449 = vmatpush1.bf16.xpose.msra.mxu0 0
    %450 = vmatprep.mubr.bf16.mxu0 0
    %451 = vmatmul.mubr.bf16.gmra.mrb[0].mxu0 %v413
    %v452 = vpop.f32.mrb[0].mxu0
    %v453 = vadd.f32 0.0, %v452
    %v454 = vpop.f32.mrb[0].mxu0
    %v455 = vpop.f32.mrb[0].mxu0
    %v456 = vadd.f32 0.0, %v455
    %v457 = vpop.f32.mrb[0].mxu0
    %458 = vdwg.mxu0
    %460 = vrot.lane.b32.xlu0 %v352, 96
    %v461 = vpop.permute.xlu0 %460
    %v463 = vsel %vm361, %v352, 0
    %v466 = vsel %vm361, %v461, 0
    %468 = vmatprep.subr.bf16.mxu0 0
    %469 = vmatpush1.bf16.xpose.msra.mxu0 %v466
    %470 = vmatprep.subr.bf16.mxu0 0
    %471 = vmatpush1.bf16.xpose.msra.mxu0 0
    %472 = vmatprep.subr.bf16.mxu0 0
    %473 = vmatpush1.bf16.xpose.msra.mxu0 0
    %474 = vmatprep.subr.bf16.mxu0 0
    %475 = vmatpush1.bf16.xpose.msra.mxu0 0
    %476 = vmatprep.subr.bf16.mxu0 0
    %477 = vmatpush1.bf16.xpose.msra.mxu0 0
    %478 = vmatprep.subr.bf16.mxu0 0
    %479 = vmatpush1.bf16.xpose.msra.mxu0 0
    %480 = vmatprep.subr.bf16.mxu0 0
    %481 = vmatpush1.bf16.xpose.msra.mxu0 0
    %482 = vmatprep.subr.bf16.mxu0 0
    %483 = vmatpush1.bf16.xpose.msra.mxu0 0
    %484 = vmatprep.subr.bf16.mxu0 0
    %485 = vmatpush1.bf16.xpose.msra.mxu0 0
    %486 = vmatprep.subr.bf16.mxu0 0
    %487 = vmatpush1.bf16.xpose.msra.mxu0 0
    %488 = vmatprep.subr.bf16.mxu0 0
    %489 = vmatpush1.bf16.xpose.msra.mxu0 0
    %490 = vmatprep.subr.bf16.mxu0 0
    %491 = vmatpush1.bf16.xpose.msra.mxu0 0
    %492 = vmatprep.subr.bf16.mxu0 0
    %493 = vmatpush1.bf16.xpose.msra.mxu0 0
    %494 = vmatprep.subr.bf16.mxu0 0
    %495 = vmatpush1.bf16.xpose.msra.mxu0 0
    %496 = vmatprep.subr.bf16.mxu0 0
    %497 = vmatpush1.bf16.xpose.msra.mxu0 0
    %498 = vmatprep.subr.bf16.mxu0 0
    %499 = vmatpush1.bf16.xpose.msra.mxu0 0
    %500 = vmatprep.mubr.bf16.mxu0 0
    %501 = vmatmul.mubr.bf16.gmra.mrb[0].mxu0 %v463
    %v502 = vpop.f32.mrb[0].mxu0
    %v503 = vadd.f32 0.0, %v502
    %v504 = vpop.f32.mrb[0].mxu0
    %v505 = vpop.f32.mrb[0].mxu0
    %v506 = vadd.f32 0.0, %v505
    %v507 = vpop.f32.mrb[0].mxu0
    %508 = vdwg.mxu0
    %510 = vrot.lane.b32.xlu0 %v353, 96
    %v511 = vpop.permute.xlu0 %510
    %v513 = vsel %vm361, %v353, 0
    %v516 = vsel %vm361, %v511, 0
    %518 = vmatprep.subr.bf16.mxu0 0
    %519 = vmatpush1.bf16.xpose.msra.mxu0 %v516
    %520 = vmatprep.subr.bf16.mxu0 0
    %521 = vmatpush1.bf16.xpose.msra.mxu0 0
    %522 = vmatprep.subr.bf16.mxu0 0
    %523 = vmatpush1.bf16.xpose.msra.mxu0 0
    %524 = vmatprep.subr.bf16.mxu0 0
    %525 = vmatpush1.bf16.xpose.msra.mxu0 0
    %526 = vmatprep.subr.bf16.mxu0 0
    %527 = vmatpush1.bf16.xpose.msra.mxu0 0
    %528 = vmatprep.subr.bf16.mxu0 0
    %529 = vmatpush1.bf16.xpose.msra.mxu0 0
    %530 = vmatprep.subr.bf16.mxu0 0
    %531 = vmatpush1.bf16.xpose.msra.mxu0 0
    %532 = vmatprep.subr.bf16.mxu0 0
    %533 = vmatpush1.bf16.xpose.msra.mxu0 0
    %534 = vmatprep.subr.bf16.mxu0 0
    %535 = vmatpush1.bf16.xpose.msra.mxu0 0
    %536 = vmatprep.subr.bf16.mxu0 0
    %537 = vmatpush1.bf16.xpose.msra.mxu0 0
    %538 = vmatprep.subr.bf16.mxu0 0
    %539 = vmatpush1.bf16.xpose.msra.mxu0 0
    %540 = vmatprep.subr.bf16.mxu0 0
    %541 = vmatpush1.bf16.xpose.msra.mxu0 0
    %542 = vmatprep.subr.bf16.mxu0 0
    %543 = vmatpush1.bf16.xpose.msra.mxu0 0
    %544 = vmatprep.subr.bf16.mxu0 0
    %545 = vmatpush1.bf16.xpose.msra.mxu0 0
    %546 = vmatprep.subr.bf16.mxu0 0
    %547 = vmatpush1.bf16.xpose.msra.mxu0 0
    %548 = vmatprep.subr.bf16.mxu0 0
    %549 = vmatpush1.bf16.xpose.msra.mxu0 0
    %550 = vmatprep.mubr.bf16.mxu0 0
    %551 = vmatmul.mubr.bf16.gmra.mrb[0].mxu0 %v513
    %v552 = vpop.f32.mrb[0].mxu0
    %v553 = vadd.f32 0.0, %v552
    %v554 = vpop.f32.mrb[0].mxu0
    %v555 = vpop.f32.mrb[0].mxu0
    %v556 = vadd.f32 0.0, %v555
    %v557 = vpop.f32.mrb[0].mxu0
    %558 = vdwg.mxu0
    %560 = vrot.lane.b32.xlu0 %v354, 96
    %v561 = vpop.permute.xlu0 %560
    %v563 = vsel %vm361, %v354, 0
    %v566 = vsel %vm361, %v561, 0
    %568 = vmatprep.subr.bf16.mxu0 0
    %569 = vmatpush1.bf16.xpose.msra.mxu0 %v566
    %570 = vmatprep.subr.bf16.mxu0 0
    %571 = vmatpush1.bf16.xpose.msra.mxu0 0
    %572 = vmatprep.subr.bf16.mxu0 0
    %573 = vmatpush1.bf16.xpose.msra.mxu0 0
    %574 = vmatprep.subr.bf16.mxu0 0
    %575 = vmatpush1.bf16.xpose.msra.mxu0 0
    %576 = vmatprep.subr.bf16.mxu0 0
    %577 = vmatpush1.bf16.xpose.msra.mxu0 0
    %578 = vmatprep.subr.bf16.mxu0 0
    %579 = vmatpush1.bf16.xpose.msra.mxu0 0
    %580 = vmatprep.subr.bf16.mxu0 0
    %581 = vmatpush1.bf16.xpose.msra.mxu0 0
    %582 = vmatprep.subr.bf16.mxu0 0
    %583 = vmatpush1.bf16.xpose.msra.mxu0 0
    %584 = vmatprep.subr.bf16.mxu0 0
    %585 = vmatpush1.bf16.xpose.msra.mxu0 0
    %586 = vmatprep.subr.bf16.mxu0 0
    %587 = vmatpush1.bf16.xpose.msra.mxu0 0
    %588 = vmatprep.subr.bf16.mxu0 0
    %589 = vmatpush1.bf16.xpose.msra.mxu0 0
    %590 = vmatprep.subr.bf16.mxu0 0
    %591 = vmatpush1.bf16.xpose.msra.mxu0 0
    %592 = vmatprep.subr.bf16.mxu0 0
    %593 = vmatpush1.bf16.xpose.msra.mxu0 0
    %594 = vmatprep.subr.bf16.mxu0 0
    %595 = vmatpush1.bf16.xpose.msra.mxu0 0
    %596 = vmatprep.subr.bf16.mxu0 0
    %597 = vmatpush1.bf16.xpose.msra.mxu0 0
    %598 = vmatprep.subr.bf16.mxu0 0
    %599 = vmatpush1.bf16.xpose.msra.mxu0 0
    %600 = vmatprep.mubr.bf16.mxu0 0
    %601 = vmatmul.mubr.bf16.gmra.mrb[0].mxu0 %v563
    %v602 = vpop.f32.mrb[0].mxu0
    %v603 = vadd.f32 0.0, %v602
    %v604 = vpop.f32.mrb[0].mxu0
    %v605 = vpop.f32.mrb[0].mxu0
    %v606 = vadd.f32 0.0, %v605
    %v607 = vpop.f32.mrb[0].mxu0
    %608 = vdwg.mxu0
    %610 = vrot.lane.b32.xlu0 %v355, 96
    %v611 = vpop.permute.xlu0 %610
    %v613 = vsel %vm361, %v355, 0
    %v616 = vsel %vm361, %v611, 0
    %618 = vmatprep.subr.bf16.mxu0 0
    %619 = vmatpush1.bf16.xpose.msra.mxu0 %v616
    %620 = vmatprep.subr.bf16.mxu0 0
    %621 = vmatpush1.bf16.xpose.msra.mxu0 0
    %622 = vmatprep.subr.bf16.mxu0 0
    %623 = vmatpush1.bf16.xpose.msra.mxu0 0
    %624 = vmatprep.subr.bf16.mxu0 0
    %625 = vmatpush1.bf16.xpose.msra.mxu0 0
    %626 = vmatprep.subr.bf16.mxu0 0
    %627 = vmatpush1.bf16.xpose.msra.mxu0 0
    %628 = vmatprep.subr.bf16.mxu0 0
    %629 = vmatpush1.bf16.xpose.msra.mxu0 0
    %630 = vmatprep.subr.bf16.mxu0 0
    %631 = vmatpush1.bf16.xpose.msra.mxu0 0
    %632 = vmatprep.subr.bf16.mxu0 0
    %633 = vmatpush1.bf16.xpose.msra.mxu0 0
    %634 = vmatprep.subr.bf16.mxu0 0
    %635 = vmatpush1.bf16.xpose.msra.mxu0 0
    %636 = vmatprep.subr.bf16.mxu0 0
    %637 = vmatpush1.bf16.xpose.msra.mxu0 0
    %638 = vmatprep.subr.bf16.mxu0 0
    %639 = vmatpush1.bf16.xpose.msra.mxu0 0
    %640 = vmatprep.subr.bf16.mxu0 0
    %641 = vmatpush1.bf16.xpose.msra.mxu0 0
    %642 = vmatprep.subr.bf16.mxu0 0
    %643 = vmatpush1.bf16.xpose.msra.mxu0 0
    %644 = vmatprep.subr.bf16.mxu0 0
    %645 = vmatpush1.bf16.xpose.msra.mxu0 0
    %646 = vmatprep.subr.bf16.mxu0 0
    %647 = vmatpush1.bf16.xpose.msra.mxu0 0
    %648 = vmatprep.subr.bf16.mxu0 0
    %649 = vmatpush1.bf16.xpose.msra.mxu0 0
    %650 = vmatprep.mubr.bf16.mxu0 0
    %651 = vmatmul.mubr.bf16.gmra.mrb[0].mxu0 %v613
    %v652 = vpop.f32.mrb[0].mxu0
    %v653 = vadd.f32 0.0, %v652
    %v654 = vpop.f32.mrb[0].mxu0
    %v655 = vpop.f32.mrb[0].mxu0
    %v656 = vadd.f32 0.0, %v655
    %v657 = vpop.f32.mrb[0].mxu0
    %658 = vdwg.mxu0
    %660 = vrot.lane.b32.xlu0 %v356, 96
    %v661 = vpop.permute.xlu0 %660
    %v663 = vsel %vm361, %v356, 0
    %v666 = vsel %vm361, %v661, 0
    %668 = vmatprep.subr.bf16.mxu0 0
    %669 = vmatpush1.bf16.xpose.msra.mxu0 %v666
    %670 = vmatprep.subr.bf16.mxu0 0
    %671 = vmatpush1.bf16.xpose.msra.mxu0 0
    %672 = vmatprep.subr.bf16.mxu0 0
    %673 = vmatpush1.bf16.xpose.msra.mxu0 0
    %674 = vmatprep.subr.bf16.mxu0 0
    %675 = vmatpush1.bf16.xpose.msra.mxu0 0
    %676 = vmatprep.subr.bf16.mxu0 0
    %677 = vmatpush1.bf16.xpose.msra.mxu0 0
    %678 = vmatprep.subr.bf16.mxu0 0
    %679 = vmatpush1.bf16.xpose.msra.mxu0 0
    %680 = vmatprep.subr.bf16.mxu0 0
    %681 = vmatpush1.bf16.xpose.msra.mxu0 0
    %682 = vmatprep.subr.bf16.mxu0 0
    %683 = vmatpush1.bf16.xpose.msra.mxu0 0
    %684 = vmatprep.subr.bf16.mxu0 0
    %685 = vmatpush1.bf16.xpose.msra.mxu0 0
    %686 = vmatprep.subr.bf16.mxu0 0
    %687 = vmatpush1.bf16.xpose.msra.mxu0 0
    %688 = vmatprep.subr.bf16.mxu0 0
    %689 = vmatpush1.bf16.xpose.msra.mxu0 0
    %690 = vmatprep.subr.bf16.mxu0 0
    %691 = vmatpush1.bf16.xpose.msra.mxu0 0
    %692 = vmatprep.subr.bf16.mxu0 0
    %693 = vmatpush1.bf16.xpose.msra.mxu0 0
    %694 = vmatprep.subr.bf16.mxu0 0
    %695 = vmatpush1.bf16.xpose.msra.mxu0 0
    %696 = vmatprep.subr.bf16.mxu0 0
    %697 = vmatpush1.bf16.xpose.msra.mxu0 0
    %698 = vmatprep.subr.bf16.mxu0 0
    %699 = vmatpush1.bf16.xpose.msra.mxu0 0
    %700 = vmatprep.mubr.bf16.mxu0 0
    %701 = vmatmul.mubr.bf16.gmra.mrb[0].mxu0 %v663
    %v702 = vpop.f32.mrb[0].mxu0
    %v703 = vadd.f32 0.0, %v702
    %v704 = vpop.f32.mrb[0].mxu0
    %v705 = vpop.f32.mrb[0].mxu0
    %v706 = vadd.f32 0.0, %v705
    %v707 = vpop.f32.mrb[0].mxu0
    %708 = vdwg.mxu0
    %710 = vrot.lane.b32.xlu0 %v357, 96
    %v711 = vpop.permute.xlu0 %710
    %v713 = vsel %vm361, %v357, 0
    %v716 = vsel %vm361, %v711, 0
    %718 = vmatprep.subr.bf16.mxu0 0
    %719 = vmatpush1.bf16.xpose.msra.mxu0 %v716
    %720 = vmatprep.subr.bf16.mxu0 0
    %721 = vmatpush1.bf16.xpose.msra.mxu0 0
    %722 = vmatprep.subr.bf16.mxu0 0
    %723 = vmatpush1.bf16.xpose.msra.mxu0 0
    %724 = vmatprep.subr.bf16.mxu0 0
    %725 = vmatpush1.bf16.xpose.msra.mxu0 0
    %726 = vmatprep.subr.bf16.mxu0 0
    %727 = vmatpush1.bf16.xpose.msra.mxu0 0
    %728 = vmatprep.subr.bf16.mxu0 0
    %729 = vmatpush1.bf16.xpose.msra.mxu0 0
    %730 = vmatprep.subr.bf16.mxu0 0
    %731 = vmatpush1.bf16.xpose.msra.mxu0 0
    %732 = vmatprep.subr.bf16.mxu0 0
    %733 = vmatpush1.bf16.xpose.msra.mxu0 0
    %734 = vmatprep.subr.bf16.mxu0 0
    %735 = vmatpush1.bf16.xpose.msra.mxu0 0
    %736 = vmatprep.subr.bf16.mxu0 0
    %737 = vmatpush1.bf16.xpose.msra.mxu0 0
    %738 = vmatprep.subr.bf16.mxu0 0
    %739 = vmatpush1.bf16.xpose.msra.mxu0 0
    %740 = vmatprep.subr.bf16.mxu0 0
    %741 = vmatpush1.bf16.xpose.msra.mxu0 0
    %742 = vmatprep.subr.bf16.mxu0 0
    %743 = vmatpush1.bf16.xpose.msra.mxu0 0
    %744 = vmatprep.subr.bf16.mxu0 0
    %745 = vmatpush1.bf16.xpose.msra.mxu0 0
    %746 = vmatprep.subr.bf16.mxu0 0
    %747 = vmatpush1.bf16.xpose.msra.mxu0 0
    %748 = vmatprep.subr.bf16.mxu0 0
    %749 = vmatpush1.bf16.xpose.msra.mxu0 0
    %750 = vmatprep.mubr.bf16.mxu0 0
    %751 = vmatmul.mubr.bf16.gmra.mrb[0].mxu0 %v713
    %v752 = vpop.f32.mrb[0].mxu0
    %v753 = vadd.f32 0.0, %v752
    %v754 = vpop.f32.mrb[0].mxu0
    %v755 = vpop.f32.mrb[0].mxu0
    %v756 = vadd.f32 0.0, %v755
    %v757 = vpop.f32.mrb[0].mxu0
    %758 = vdwg.mxu0
    %vm759 = vcmask 130048
    %v760 = vsel %vm759, %v403, -inf
    %761 = vmax.xlane.f32.xlu0 %v760
    %v762 = vpop.xlane.xlu0 %761
    %v763 = vsel %vm759, %v406, -inf
    %764 = vmax.xlane.f32.xlu0 %v763
    %v765 = vpop.xlane.xlu0 %764
    %v766 = vsel %vm759, %v453, -inf
    %767 = vmax.xlane.f32.xlu0 %v766
    %v768 = vpop.xlane.xlu0 %767
    %v769 = vsel %vm759, %v456, -inf
    %770 = vmax.xlane.f32.xlu0 %v769
    %v771 = vpop.xlane.xlu0 %770
    %v772 = vsel %vm759, %v503, -inf
    %773 = vmax.xlane.f32.xlu0 %v772
    %v774 = vpop.xlane.xlu0 %773
    %v775 = vsel %vm759, %v506, -inf
    %776 = vmax.xlane.f32.xlu0 %v775
    %v777 = vpop.xlane.xlu0 %776
    %v778 = vsel %vm759, %v553, -inf
    %779 = vmax.xlane.f32.xlu0 %v778
    %v780 = vpop.xlane.xlu0 %779
    %v781 = vsel %vm759, %v556, -inf
    %782 = vmax.xlane.f32.xlu0 %v781
    %v783 = vpop.xlane.xlu0 %782
    %v784 = vsel %vm759, %v603, -inf
    %785 = vmax.xlane.f32.xlu0 %v784
    %v786 = vpop.xlane.xlu0 %785
    %v787 = vsel %vm759, %v606, -inf
    %788 = vmax.xlane.f32.xlu0 %v787
    %v789 = vpop.xlane.xlu0 %788
    %v790 = vsel %vm759, %v653, -inf
    %791 = vmax.xlane.f32.xlu0 %v790
    %v792 = vpop.xlane.xlu0 %791
    %v793 = vsel %vm759, %v656, -inf
    %794 = vmax.xlane.f32.xlu0 %v793
    %v795 = vpop.xlane.xlu0 %794
    %v796 = vsel %vm759, %v703, -inf
    %797 = vmax.xlane.f32.xlu0 %v796
    %v798 = vpop.xlane.xlu0 %797
    %v799 = vsel %vm759, %v706, -inf
    %800 = vmax.xlane.f32.xlu0 %v799
    %v801 = vpop.xlane.xlu0 %800
    %v802 = vsel %vm759, %v753, -inf
    %803 = vmax.xlane.f32.xlu0 %v802
    %v804 = vpop.xlane.xlu0 %803
    %v805 = vsel %vm759, %v756, -inf
    %806 = vmax.xlane.f32.xlu0 %v805
    %v807 = vpop.xlane.xlu0 %806
    %v808 = vsub.f32 %v403, %v762
    %v809 = vsub.f32 %v406, %v765
    %v810 = vsub.f32 %v453, %v768
    %v811 = vsub.f32 %v456, %v771
    %v812 = vsub.f32 %v503, %v774
    %v813 = vsub.f32 %v506, %v777
    %v814 = vsub.f32 %v553, %v780
    %v815 = vsub.f32 %v556, %v783
    %v816 = vsub.f32 %v603, %v786
    %v817 = vsub.f32 %v606, %v789
    %v818 = vsub.f32 %v653, %v792
    %v819 = vsub.f32 %v656, %v795
    %v820 = vsub.f32 %v703, %v798
    %v821 = vsub.f32 %v706, %v801
    %v822 = vsub.f32 %v753, %v804
    %v823 = vsub.f32 %v756, %v807
    %v824 = vmul.f32 %v808, 1.442695
    %v825 = vpow.pop %v824
    %v826 = vmul.f32 %v809, 1.442695
    %v827 = vpow.pop %v826
    %v828 = vmul.f32 %v810, 1.442695
    %v829 = vpow.pop %v828
    %v830 = vmul.f32 %v811, 1.442695
    %v831 = vpow.pop %v830
    %v832 = vmul.f32 %v812, 1.442695
    %v833 = vpow.pop %v832
    %v834 = vmul.f32 %v813, 1.442695
    %v835 = vpow.pop %v834
    %v836 = vmul.f32 %v814, 1.442695
    %v837 = vpow.pop %v836
    %v838 = vmul.f32 %v815, 1.442695
    %v839 = vpow.pop %v838
    %v840 = vmul.f32 %v816, 1.442695
    %v841 = vpow.pop %v840
    %v842 = vmul.f32 %v817, 1.442695
    %v843 = vpow.pop %v842
    %v844 = vmul.f32 %v818, 1.442695
    %v845 = vpow.pop %v844
    %v846 = vmul.f32 %v819, 1.442695
    %v847 = vpow.pop %v846
    %v848 = vmul.f32 %v820, 1.442695
    %v849 = vpow.pop %v848
    %v850 = vmul.f32 %v821, 1.442695
    %v851 = vpow.pop %v850
    %v852 = vmul.f32 %v822, 1.442695
    %v853 = vpow.pop %v852
    %v854 = vmul.f32 %v823, 1.442695
    %v855 = vpow.pop %v854
    %v856 = vsel %vm759, %v825, 0.0
    %857 = vadd.xlane.f32.xlu0 %v856
    %v858 = vpop.xlane.xlu0 %857
    %v859 = vsel %vm759, %v827, 0.0
    %860 = vadd.xlane.f32.xlu0 %v859
    %v861 = vpop.xlane.xlu0 %860
    %v862 = vsel %vm759, %v829, 0.0
    %863 = vadd.xlane.f32.xlu0 %v862
    %v864 = vpop.xlane.xlu0 %863
    %v865 = vsel %vm759, %v831, 0.0
    %866 = vadd.xlane.f32.xlu0 %v865
    %v867 = vpop.xlane.xlu0 %866
    %v868 = vsel %vm759, %v833, 0.0
    %869 = vadd.xlane.f32.xlu0 %v868
    %v870 = vpop.xlane.xlu0 %869
    %v871 = vsel %vm759, %v835, 0.0
    %872 = vadd.xlane.f32.xlu0 %v871
    %v873 = vpop.xlane.xlu0 %872
    %v874 = vsel %vm759, %v837, 0.0
    %875 = vadd.xlane.f32.xlu0 %v874
    %v876 = vpop.xlane.xlu0 %875
    %v877 = vsel %vm759, %v839, 0.0
    %878 = vadd.xlane.f32.xlu0 %v877
    %v879 = vpop.xlane.xlu0 %878
    %v880 = vsel %vm759, %v841, 0.0
    %881 = vadd.xlane.f32.xlu0 %v880
    %v882 = vpop.xlane.xlu0 %881
    %v883 = vsel %vm759, %v843, 0.0
    %884 = vadd.xlane.f32.xlu0 %v883
    %v885 = vpop.xlane.xlu0 %884
    %v886 = vsel %vm759, %v845, 0.0
    %887 = vadd.xlane.f32.xlu0 %v886
    %v888 = vpop.xlane.xlu0 %887
    %v889 = vsel %vm759, %v847, 0.0
    %890 = vadd.xlane.f32.xlu0 %v889
    %v891 = vpop.xlane.xlu0 %890
    %v892 = vsel %vm759, %v849, 0.0
    %893 = vadd.xlane.f32.xlu0 %v892
    %v894 = vpop.xlane.xlu0 %893
    %v895 = vsel %vm759, %v851, 0.0
    %896 = vadd.xlane.f32.xlu0 %v895
    %v897 = vpop.xlane.xlu0 %896
    %v898 = vsel %vm759, %v853, 0.0
    %899 = vadd.xlane.f32.xlu0 %v898
    %v900 = vpop.xlane.xlu0 %899
    %v901 = vsel %vm759, %v855, 0.0
    %902 = vadd.xlane.f32.xlu0 %v901
    %v903 = vpop.xlane.xlu0 %902
    %v904 = vrcp.pop %v858
    %v905 = vrcp.pop %v861
    %v906 = vrcp.pop %v864
    %v907 = vrcp.pop %v867
    %v908 = vrcp.pop %v870
    %v909 = vrcp.pop %v873
    %v910 = vrcp.pop %v876
    %v911 = vrcp.pop %v879
    %v912 = vrcp.pop %v882
    %v913 = vrcp.pop %v885
    %v914 = vrcp.pop %v888
    %v915 = vrcp.pop %v891
    %v916 = vrcp.pop %v894
    %v917 = vrcp.pop %v897
    %v918 = vrcp.pop %v900
    %v919 = vrcp.pop %v903
    %v920 = vmul.f32 %v825, %v904
    %v921 = vmul.f32 %v827, %v905
    %v922 = vmul.f32 %v829, %v906
    %v923 = vmul.f32 %v831, %v907
    %v924 = vmul.f32 %v833, %v908
    %v925 = vmul.f32 %v835, %v909
    %v926 = vmul.f32 %v837, %v910
    %v927 = vmul.f32 %v839, %v911
    %v928 = vmul.f32 %v841, %v912
    %v929 = vmul.f32 %v843, %v913
    %v930 = vmul.f32 %v845, %v914
    %v931 = vmul.f32 %v847, %v915
    %v932 = vmul.f32 %v849, %v916
    %v933 = vmul.f32 %v851, %v917
    %v934 = vmul.f32 %v853, %v918
    %v935 = vmul.f32 %v855, %v919
    %v936 = vpack.c.bf16 %v921, %v920
    %v937 = vpack.c.bf16 %v923, %v922
    %v938 = vpack.c.bf16 %v925, %v924
    %v939 = vpack.c.bf16 %v927, %v926
    %v940 = vpack.c.bf16 %v929, %v928
    %v941 = vpack.c.bf16 %v931, %v930
    %v942 = vpack.c.bf16 %v933, %v932
    %v943 = vpack.c.bf16 %v935, %v934
    %944 = vrot.lane.b32.xlu0 %v350, 64
    %v945 = vpop.permute.xlu0 %944
    %v948 = vsel %vm759, %v936, 0
    %950 = vmatprep.subr.bf16.mxu0 0
    %951 = vmatpush1.bf16.msra.mxu0 %v945
    %952 = vmatprep.subr.bf16.mxu0 0
    %953 = vmatpush1.bf16.msra.mxu0 0
    %954 = vmatprep.subr.bf16.mxu0 0
    %955 = vmatpush1.bf16.msra.mxu0 0
    %956 = vmatprep.subr.bf16.mxu0 0
    %957 = vmatpush1.bf16.msra.mxu0 0
    %958 = vmatprep.subr.bf16.mxu0 0
    %959 = vmatpush1.bf16.msra.mxu0 0
    %960 = vmatprep.subr.bf16.mxu0 0
    %961 = vmatpush1.bf16.msra.mxu0 0
    %962 = vmatprep.subr.bf16.mxu0 0
    %963 = vmatpush1.bf16.msra.mxu0 0
    %964 = vmatprep.subr.bf16.mxu0 0
    %965 = vmatpush1.bf16.msra.mxu0 0
    %966 = vmatprep.subr.bf16.mxu0 0
    %967 = vmatpush1.bf16.msra.mxu0 0
    %968 = vmatprep.subr.bf16.mxu0 0
    %969 = vmatpush1.bf16.msra.mxu0 0
    %970 = vmatprep.subr.bf16.mxu0 0
    %971 = vmatpush1.bf16.msra.mxu0 0
    %972 = vmatprep.subr.bf16.mxu0 0
    %973 = vmatpush1.bf16.msra.mxu0 0
    %974 = vmatprep.subr.bf16.mxu0 0
    %975 = vmatpush1.bf16.msra.mxu0 0
    %976 = vmatprep.subr.bf16.mxu0 0
    %977 = vmatpush1.bf16.msra.mxu0 0
    %978 = vmatprep.subr.bf16.mxu0 0
    %979 = vmatpush1.bf16.msra.mxu0 0
    %980 = vmatprep.subr.bf16.mxu0 0
    %981 = vmatpush1.bf16.msra.mxu0 0
    %982 = vmatprep.mubr.bf16.mxu0 0
    %983 = vmatmul.mubr.bf16.gmra.mrb[0].mxu0 %v948
    %v984 = vpop.f32.mrb[0].mxu0
    %v985 = vadd.f32 0.0, %v984
    %v986 = vpop.f32.mrb[0].mxu0
    %v987 = vpop.f32.mrb[0].mxu0
    %v988 = vadd.f32 0.0, %v987
    %v989 = vpop.f32.mrb[0].mxu0
    %990 = vdwg.mxu0
    %991 = vrot.lane.b32.xlu0 %v351, 64
    %v992 = vpop.permute.xlu0 %991
    %v995 = vsel %vm759, %v937, 0
    %997 = vmatprep.subr.bf16.mxu0 0
    %998 = vmatpush1.bf16.msra.mxu0 %v992
    %999 = vmatprep.subr.bf16.mxu0 0
    %1000 = vmatpush1.bf16.msra.mxu0 0
    %1001 = vmatprep.subr.bf16.mxu0 0
    %1002 = vmatpush1.bf16.msra.mxu0 0
    %1003 = vmatprep.subr.bf16.mxu0 0
    %1004 = vmatpush1.bf16.msra.mxu0 0
    %1005 = vmatprep.subr.bf16.mxu0 0
    %1006 = vmatpush1.bf16.msra.mxu0 0
    %1007 = vmatprep.subr.bf16.mxu0 0
    %1008 = vmatpush1.bf16.msra.mxu0 0
    %1009 = vmatprep.subr.bf16.mxu0 0
    %1010 = vmatpush1.bf16.msra.mxu0 0
    %1011 = vmatprep.subr.bf16.mxu0 0
    %1012 = vmatpush1.bf16.msra.mxu0 0
    %1013 = vmatprep.subr.bf16.mxu0 0
    %1014 = vmatpush1.bf16.msra.mxu0 0
    %1015 = vmatprep.subr.bf16.mxu0 0
    %1016 = vmatpush1.bf16.msra.mxu0 0
    %1017 = vmatprep.subr.bf16.mxu0 0
    %1018 = vmatpush1.bf16.msra.mxu0 0
    %1019 = vmatprep.subr.bf16.mxu0 0
    %1020 = vmatpush1.bf16.msra.mxu0 0
    %1021 = vmatprep.subr.bf16.mxu0 0
    %1022 = vmatpush1.bf16.msra.mxu0 0
    %1023 = vmatprep.subr.bf16.mxu0 0
    %1024 = vmatpush1.bf16.msra.mxu0 0
    %1025 = vmatprep.subr.bf16.mxu0 0
    %1026 = vmatpush1.bf16.msra.mxu0 0
    %1027 = vmatprep.subr.bf16.mxu0 0
    %1028 = vmatpush1.bf16.msra.mxu0 0
    %1029 = vmatprep.mubr.bf16.mxu0 0
    %1030 = vmatmul.mubr.bf16.gmra.mrb[0].mxu0 %v995
    %v1031 = vpop.f32.mrb[0].mxu0
    %v1032 = vadd.f32 0.0, %v1031
    %v1033 = vpop.f32.mrb[0].mxu0
    %v1034 = vpop.f32.mrb[0].mxu0
    %v1035 = vadd.f32 0.0, %v1034
    %v1036 = vpop.f32.mrb[0].mxu0
    %1037 = vdwg.mxu0
    %1038 = vrot.lane.b32.xlu0 %v352, 64
    %v1039 = vpop.permute.xlu0 %1038
    %v1042 = vsel %vm759, %v938, 0
    %1044 = vmatprep.subr.bf16.mxu0 0
    %1045 = vmatpush1.bf16.msra.mxu0 %v1039
    %1046 = vmatprep.subr.bf16.mxu0 0
    %1047 = vmatpush1.bf16.msra.mxu0 0
    %1048 = vmatprep.subr.bf16.mxu0 0
    %1049 = vmatpush1.bf16.msra.mxu0 0
    %1050 = vmatprep.subr.bf16.mxu0 0
    %1051 = vmatpush1.bf16.msra.mxu0 0
    %1052 = vmatprep.subr.bf16.mxu0 0
    %1053 = vmatpush1.bf16.msra.mxu0 0
    %1054 = vmatprep.subr.bf16.mxu0 0
    %1055 = vmatpush1.bf16.msra.mxu0 0
    %1056 = vmatprep.subr.bf16.mxu0 0
    %1057 = vmatpush1.bf16.msra.mxu0 0
    %1058 = vmatprep.subr.bf16.mxu0 0
    %1059 = vmatpush1.bf16.msra.mxu0 0
    %1060 = vmatprep.subr.bf16.mxu0 0
    %1061 = vmatpush1.bf16.msra.mxu0 0
    %1062 = vmatprep.subr.bf16.mxu0 0
    %1063 = vmatpush1.bf16.msra.mxu0 0
    %1064 = vmatprep.subr.bf16.mxu0 0
    %1065 = vmatpush1.bf16.msra.mxu0 0
    %1066 = vmatprep.subr.bf16.mxu0 0
    %1067 = vmatpush1.bf16.msra.mxu0 0
    %1068 = vmatprep.subr.bf16.mxu0 0
    %1069 = vmatpush1.bf16.msra.mxu0 0
    %1070 = vmatprep.subr.bf16.mxu0 0
    %1071 = vmatpush1.bf16.msra.mxu0 0
    %1072 = vmatprep.subr.bf16.mxu0 0
    %1073 = vmatpush1.bf16.msra.mxu0 0
    %1074 = vmatprep.subr.bf16.mxu0 0
    %1075 = vmatpush1.bf16.msra.mxu0 0
    %1076 = vmatprep.mubr.bf16.mxu0 0
    %1077 = vmatmul.mubr.bf16.gmra.mrb[0].mxu0 %v1042
    %v1078 = vpop.f32.mrb[0].mxu0
    %v1079 = vadd.f32 0.0, %v1078
    %v1080 = vpop.f32.mrb[0].mxu0
    %v1081 = vpop.f32.mrb[0].mxu0
    %v1082 = vadd.f32 0.0, %v1081
    %v1083 = vpop.f32.mrb[0].mxu0
    %1084 = vdwg.mxu0
    %1085 = vrot.lane.b32.xlu0 %v353, 64
    %v1086 = vpop.permute.xlu0 %1085
    %v1089 = vsel %vm759, %v939, 0
    %1091 = vmatprep.subr.bf16.mxu0 0
    %1092 = vmatpush1.bf16.msra.mxu0 %v1086
    %1093 = vmatprep.subr.bf16.mxu0 0
    %1094 = vmatpush1.bf16.msra.mxu0 0
    %1095 = vmatprep.subr.bf16.mxu0 0
    %1096 = vmatpush1.bf16.msra.mxu0 0
    %1097 = vmatprep.subr.bf16.mxu0 0
    %1098 = vmatpush1.bf16.msra.mxu0 0
    %1099 = vmatprep.subr.bf16.mxu0 0
    %1100 = vmatpush1.bf16.msra.mxu0 0
    %1101 = vmatprep.subr.bf16.mxu0 0
    %1102 = vmatpush1.bf16.msra.mxu0 0
    %1103 = vmatprep.subr.bf16.mxu0 0
    %1104 = vmatpush1.bf16.msra.mxu0 0
    %1105 = vmatprep.subr.bf16.mxu0 0
    %1106 = vmatpush1.bf16.msra.mxu0 0
    %1107 = vmatprep.subr.bf16.mxu0 0
    %1108 = vmatpush1.bf16.msra.mxu0 0
    %1109 = vmatprep.subr.bf16.mxu0 0
    %1110 = vmatpush1.bf16.msra.mxu0 0
    %1111 = vmatprep.subr.bf16.mxu0 0
    %1112 = vmatpush1.bf16.msra.mxu0 0
    %1113 = vmatprep.subr.bf16.mxu0 0
    %1114 = vmatpush1.bf16.msra.mxu0 0
    %1115 = vmatprep.subr.bf16.mxu0 0
    %1116 = vmatpush1.bf16.msra.mxu0 0
    %1117 = vmatprep.subr.bf16.mxu0 0
    %1118 = vmatpush1.bf16.msra.mxu0 0
    %1119 = vmatprep.subr.bf16.mxu0 0
    %1120 = vmatpush1.bf16.msra.mxu0 0
    %1121 = vmatprep.subr.bf16.mxu0 0
    %1122 = vmatpush1.bf16.msra.mxu0 0
    %1123 = vmatprep.mubr.bf16.mxu0 0
    %1124 = vmatmul.mubr.bf16.gmra.mrb[0].mxu0 %v1089
    %v1125 = vpop.f32.mrb[0].mxu0
    %v1126 = vadd.f32 0.0, %v1125
    %v1127 = vpop.f32.mrb[0].mxu0
    %v1128 = vpop.f32.mrb[0].mxu0
    %v1129 = vadd.f32 0.0, %v1128
    %v1130 = vpop.f32.mrb[0].mxu0
    %1131 = vdwg.mxu0
    %1132 = vrot.lane.b32.xlu0 %v354, 64
    %v1133 = vpop.permute.xlu0 %1132
    %v1136 = vsel %vm759, %v940, 0
    %1138 = vmatprep.subr.bf16.mxu0 0
    %1139 = vmatpush1.bf16.msra.mxu0 %v1133
    %1140 = vmatprep.subr.bf16.mxu0 0
    %1141 = vmatpush1.bf16.msra.mxu0 0
    %1142 = vmatprep.subr.bf16.mxu0 0
    %1143 = vmatpush1.bf16.msra.mxu0 0
    %1144 = vmatprep.subr.bf16.mxu0 0
    %1145 = vmatpush1.bf16.msra.mxu0 0
    %1146 = vmatprep.subr.bf16.mxu0 0
    %1147 = vmatpush1.bf16.msra.mxu0 0
    %1148 = vmatprep.subr.bf16.mxu0 0
    %1149 = vmatpush1.bf16.msra.mxu0 0
    %1150 = vmatprep.subr.bf16.mxu0 0
    %1151 = vmatpush1.bf16.msra.mxu0 0
    %1152 = vmatprep.subr.bf16.mxu0 0
    %1153 = vmatpush1.bf16.msra.mxu0 0
    %1154 = vmatprep.subr.bf16.mxu0 0
    %1155 = vmatpush1.bf16.msra.mxu0 0
    %1156 = vmatprep.subr.bf16.mxu0 0
    %1157 = vmatpush1.bf16.msra.mxu0 0
    %1158 = vmatprep.subr.bf16.mxu0 0
    %1159 = vmatpush1.bf16.msra.mxu0 0
    %1160 = vmatprep.subr.bf16.mxu0 0
    %1161 = vmatpush1.bf16.msra.mxu0 0
    %1162 = vmatprep.subr.bf16.mxu0 0
    %1163 = vmatpush1.bf16.msra.mxu0 0
    %1164 = vmatprep.subr.bf16.mxu0 0
    %1165 = vmatpush1.bf16.msra.mxu0 0
    %1166 = vmatprep.subr.bf16.mxu0 0
    %1167 = vmatpush1.bf16.msra.mxu0 0
    %1168 = vmatprep.subr.bf16.mxu0 0
    %1169 = vmatpush1.bf16.msra.mxu0 0
    %1170 = vmatprep.mubr.bf16.mxu0 0
    %1171 = vmatmul.mubr.bf16.gmra.mrb[0].mxu0 %v1136
    %v1172 = vpop.f32.mrb[0].mxu0
    %v1173 = vadd.f32 0.0, %v1172
    %v1174 = vpop.f32.mrb[0].mxu0
    %v1175 = vpop.f32.mrb[0].mxu0
    %v1176 = vadd.f32 0.0, %v1175
    %v1177 = vpop.f32.mrb[0].mxu0
    %1178 = vdwg.mxu0
    %1179 = vrot.lane.b32.xlu0 %v355, 64
    %v1180 = vpop.permute.xlu0 %1179
    %v1183 = vsel %vm759, %v941, 0
    %1185 = vmatprep.subr.bf16.mxu0 0
    %1186 = vmatpush1.bf16.msra.mxu0 %v1180
    %1187 = vmatprep.subr.bf16.mxu0 0
    %1188 = vmatpush1.bf16.msra.mxu0 0
    %1189 = vmatprep.subr.bf16.mxu0 0
    %1190 = vmatpush1.bf16.msra.mxu0 0
    %1191 = vmatprep.subr.bf16.mxu0 0
    %1192 = vmatpush1.bf16.msra.mxu0 0
    %1193 = vmatprep.subr.bf16.mxu0 0
    %1194 = vmatpush1.bf16.msra.mxu0 0
    %1195 = vmatprep.subr.bf16.mxu0 0
    %1196 = vmatpush1.bf16.msra.mxu0 0
    %1197 = vmatprep.subr.bf16.mxu0 0
    %1198 = vmatpush1.bf16.msra.mxu0 0
    %1199 = vmatprep.subr.bf16.mxu0 0
    %1200 = vmatpush1.bf16.msra.mxu0 0
    %1201 = vmatprep.subr.bf16.mxu0 0
    %1202 = vmatpush1.bf16.msra.mxu0 0
    %1203 = vmatprep.subr.bf16.mxu0 0
    %1204 = vmatpush1.bf16.msra.mxu0 0
    %1205 = vmatprep.subr.bf16.mxu0 0
    %1206 = vmatpush1.bf16.msra.mxu0 0
    %1207 = vmatprep.subr.bf16.mxu0 0
    %1208 = vmatpush1.bf16.msra.mxu0 0
    %1209 = vmatprep.subr.bf16.mxu0 0
    %1210 = vmatpush1.bf16.msra.mxu0 0
    %1211 = vmatprep.subr.bf16.mxu0 0
    %1212 = vmatpush1.bf16.msra.mxu0 0
    %1213 = vmatprep.subr.bf16.mxu0 0
    %1214 = vmatpush1.bf16.msra.mxu0 0
    %1215 = vmatprep.subr.bf16.mxu0 0
    %1216 = vmatpush1.bf16.msra.mxu0 0
    %1217 = vmatprep.mubr.bf16.mxu0 0
    %1218 = vmatmul.mubr.bf16.gmra.mrb[0].mxu0 %v1183
    %v1219 = vpop.f32.mrb[0].mxu0
    %v1220 = vadd.f32 0.0, %v1219
    %v1221 = vpop.f32.mrb[0].mxu0
    %v1222 = vpop.f32.mrb[0].mxu0
    %v1223 = vadd.f32 0.0, %v1222
    %v1224 = vpop.f32.mrb[0].mxu0
    %1225 = vdwg.mxu0
    %1226 = vrot.lane.b32.xlu0 %v356, 64
    %v1227 = vpop.permute.xlu0 %1226
    %v1230 = vsel %vm759, %v942, 0
    %1232 = vmatprep.subr.bf16.mxu0 0
    %1233 = vmatpush1.bf16.msra.mxu0 %v1227
    %1234 = vmatprep.subr.bf16.mxu0 0
    %1235 = vmatpush1.bf16.msra.mxu0 0
    %1236 = vmatprep.subr.bf16.mxu0 0
    %1237 = vmatpush1.bf16.msra.mxu0 0
    %1238 = vmatprep.subr.bf16.mxu0 0
    %1239 = vmatpush1.bf16.msra.mxu0 0
    %1240 = vmatprep.subr.bf16.mxu0 0
    %1241 = vmatpush1.bf16.msra.mxu0 0
    %1242 = vmatprep.subr.bf16.mxu0 0
    %1243 = vmatpush1.bf16.msra.mxu0 0
    %1244 = vmatprep.subr.bf16.mxu0 0
    %1245 = vmatpush1.bf16.msra.mxu0 0
    %1246 = vmatprep.subr.bf16.mxu0 0
    %1247 = vmatpush1.bf16.msra.mxu0 0
    %1248 = vmatprep.subr.bf16.mxu0 0
    %1249 = vmatpush1.bf16.msra.mxu0 0
    %1250 = vmatprep.subr.bf16.mxu0 0
    %1251 = vmatpush1.bf16.msra.mxu0 0
    %1252 = vmatprep.subr.bf16.mxu0 0
    %1253 = vmatpush1.bf16.msra.mxu0 0
    %1254 = vmatprep.subr.bf16.mxu0 0
    %1255 = vmatpush1.bf16.msra.mxu0 0
    %1256 = vmatprep.subr.bf16.mxu0 0
    %1257 = vmatpush1.bf16.msra.mxu0 0
    %1258 = vmatprep.subr.bf16.mxu0 0
    %1259 = vmatpush1.bf16.msra.mxu0 0
    %1260 = vmatprep.subr.bf16.mxu0 0
    %1261 = vmatpush1.bf16.msra.mxu0 0
    %1262 = vmatprep.subr.bf16.mxu0 0
    %1263 = vmatpush1.bf16.msra.mxu0 0
    %1264 = vmatprep.mubr.bf16.mxu0 0
    %1265 = vmatmul.mubr.bf16.gmra.mrb[0].mxu0 %v1230
    %v1266 = vpop.f32.mrb[0].mxu0
    %v1267 = vadd.f32 0.0, %v1266
    %v1268 = vpop.f32.mrb[0].mxu0
    %v1269 = vpop.f32.mrb[0].mxu0
    %v1270 = vadd.f32 0.0, %v1269
    %v1271 = vpop.f32.mrb[0].mxu0
    %1272 = vdwg.mxu0
    %1273 = vrot.lane.b32.xlu0 %v357, 64
    %v1274 = vpop.permute.xlu0 %1273
    %v1277 = vsel %vm759, %v943, 0
    %1279 = vmatprep.subr.bf16.mxu0 0
    %1280 = vmatpush1.bf16.msra.mxu0 %v1274
    %1281 = vmatprep.subr.bf16.mxu0 0
    %1282 = vmatpush1.bf16.msra.mxu0 0
    %1283 = vmatprep.subr.bf16.mxu0 0
    %1284 = vmatpush1.bf16.msra.mxu0 0
    %1285 = vmatprep.subr.bf16.mxu0 0
    %1286 = vmatpush1.bf16.msra.mxu0 0
    %1287 = vmatprep.subr.bf16.mxu0 0
    %1288 = vmatpush1.bf16.msra.mxu0 0
    %1289 = vmatprep.subr.bf16.mxu0 0
    %1290 = vmatpush1.bf16.msra.mxu0 0
    %1291 = vmatprep.subr.bf16.mxu0 0
    %1292 = vmatpush1.bf16.msra.mxu0 0
    %1293 = vmatprep.subr.bf16.mxu0 0
    %1294 = vmatpush1.bf16.msra.mxu0 0
    %1295 = vmatprep.subr.bf16.mxu0 0
    %1296 = vmatpush1.bf16.msra.mxu0 0
    %1297 = vmatprep.subr.bf16.mxu0 0
    %1298 = vmatpush1.bf16.msra.mxu0 0
    %1299 = vmatprep.subr.bf16.mxu0 0
    %1300 = vmatpush1.bf16.msra.mxu0 0
    %1301 = vmatprep.subr.bf16.mxu0 0
    %1302 = vmatpush1.bf16.msra.mxu0 0
    %1303 = vmatprep.subr.bf16.mxu0 0
    %1304 = vmatpush1.bf16.msra.mxu0 0
    %1305 = vmatprep.subr.bf16.mxu0 0
    %1306 = vmatpush1.bf16.msra.mxu0 0
    %1307 = vmatprep.subr.bf16.mxu0 0
    %1308 = vmatpush1.bf16.msra.mxu0 0
    %1309 = vmatprep.subr.bf16.mxu0 0
    %1310 = vmatpush1.bf16.msra.mxu0 0
    %1311 = vmatprep.mubr.bf16.mxu0 0
    %1312 = vmatmul.mubr.bf16.gmra.mrb[0].mxu0 %v1277
    %v1313 = vpop.f32.mrb[0].mxu0
    %v1314 = vadd.f32 0.0, %v1313
    %v1315 = vpop.f32.mrb[0].mxu0
    %v1316 = vpop.f32.mrb[0].mxu0
    %v1317 = vadd.f32 0.0, %v1316
    %v1318 = vpop.f32.mrb[0].mxu0
    %1319 = vdwg.mxu0
    %1324 = vrot.lane.b32.xlu0 %v1079, 8
    %v1325 = vpop.permute.xlu0 %1324
    %1326 = vrot.lane.b32.xlu0 %v1082, 8
    %v1327 = vpop.permute.xlu0 %1326
    %1328 = vrot.lane.b32.xlu0 %v1126, 8
    %v1329 = vpop.permute.xlu0 %1328
    %1330 = vrot.lane.b32.xlu0 %v1129, 8
    %v1331 = vpop.permute.xlu0 %1330
    %1340 = vrot.lane.b32.xlu0 %v1173, 16
    %v1341 = vpop.permute.xlu0 %1340
    %1342 = vrot.lane.b32.xlu0 %v1176, 16
    %v1343 = vpop.permute.xlu0 %1342
    %1344 = vrot.lane.b32.xlu0 %v1220, 16
    %v1345 = vpop.permute.xlu0 %1344
    %1346 = vrot.lane.b32.xlu0 %v1223, 16
    %v1347 = vpop.permute.xlu0 %1346
    %1356 = vrot.lane.b32.xlu0 %v1267, 24
    %v1357 = vpop.permute.xlu0 %1356
    %1358 = vrot.lane.b32.xlu0 %v1270, 24
    %v1359 = vpop.permute.xlu0 %1358
    %1360 = vrot.lane.b32.xlu0 %v1314, 24
    %v1361 = vpop.permute.xlu0 %1360
    %1362 = vrot.lane.b32.xlu0 %v1317, 24
    %v1363 = vpop.permute.xlu0 %1362
    %v1368 = vsel %vm361, %v985, %v1325
    %v1369 = vsel %vm361, %v988, %v1327
    %v1370 = vsel %vm361, %v1032, %v1329
    %v1371 = vsel %vm361, %v1035, %v1331
    %v1372 = vsel %vm759, %v1368, %v1341
    %v1373 = vsel %vm759, %v1369, %v1343
    %v1374 = vsel %vm759, %v1370, %v1345
    %v1375 = vsel %vm759, %v1371, %v1347
    %vm1376 = vcmask 195584
    %v1377 = vsel %vm1376, %v1372, %v1357
    %v1378 = vsel %vm1376, %v1373, %v1359
    %v1379 = vsel %vm1376, %v1374, %v1361
    %v1380 = vsel %vm1376, %v1375, %v1363
    %v1381 = vpack.c.bf16 %v1378, %v1377
    %v1382 = vpack.c.bf16 %v1380, %v1379
    %v1383 = vlaneseq
    %v1384 = vshrl.u32 %v1383, 7
    %v1385 = vsub.s32 0, %v1384
    %v1386 = vrot.slane %v161, %v1385
    %v1391 = vunpack.c.l.b16 %v137
    %v1392 = vunpack.c.l.b16 %v138
    %v1393 = vunpack.c.l.b16 %v139
    %v1394 = vunpack.c.l.b16 %v140
    %v1395 = vpack.c.b16 %v1392, %v1391
    %v1396 = vpack.c.b16 %v1394, %v1393
    %v1400 = vsel %vm165, %v1381, 0
    %v1403 = vsel %vm165, %v1382, 0
    %1405 = vmatprep.subr.bf16.mxu0 0
    %1406 = vmatpush1.bf16.msra.mxu0 %v1395
    %1407 = vmatprep.subr.bf16.mxu0 0
    %1408 = vmatpush1.bf16.msra.mxu0 %v1396
    %1409 = vmatprep.subr.bf16.mxu0 0
    %1410 = vmatpush1.bf16.msra.mxu0 0
    %1411 = vmatprep.subr.bf16.mxu0 0
    %1412 = vmatpush1.bf16.msra.mxu0 0
    %1413 = vmatprep.subr.bf16.mxu0 0
    %1414 = vmatpush1.bf16.msra.mxu0 0
    %1415 = vmatprep.subr.bf16.mxu0 0
    %1416 = vmatpush1.bf16.msra.mxu0 0
    %1417 = vmatprep.subr.bf16.mxu0 0
    %1418 = vmatpush1.bf16.msra.mxu0 0
    %1419 = vmatprep.subr.bf16.mxu0 0
    %1420 = vmatpush1.bf16.msra.mxu0 0
    %1421 = vmatprep.subr.bf16.mxu0 0
    %1422 = vmatpush1.bf16.msra.mxu0 0
    %1423 = vmatprep.subr.bf16.mxu0 0
    %1424 = vmatpush1.bf16.msra.mxu0 0
    %1425 = vmatprep.subr.bf16.mxu0 0
    %1426 = vmatpush1.bf16.msra.mxu0 0
    %1427 = vmatprep.subr.bf16.mxu0 0
    %1428 = vmatpush1.bf16.msra.mxu0 0
    %1429 = vmatprep.subr.bf16.mxu0 0
    %1430 = vmatpush1.bf16.msra.mxu0 0
    %1431 = vmatprep.subr.bf16.mxu0 0
    %1432 = vmatpush1.bf16.msra.mxu0 0
    %1433 = vmatprep.subr.bf16.mxu0 0
    %1434 = vmatpush1.bf16.msra.mxu0 0
    %1435 = vmatprep.subr.bf16.mxu0 0
    %1436 = vmatpush1.bf16.msra.mxu0 0
    %1437 = vmatprep.mubr.bf16.mxu0 0
    %1438 = vmatmul.mubr.bf16.gmra.mrb[0].mxu0 %v1400
    %v1439 = vpop.f32.mrb[0].mxu0
    %v1440 = vadd.f32 %v1386, %v1439
    %v1441 = vpop.f32.mrb[0].mxu0
    %v1442 = vpop.f32.mrb[0].mxu0
    %v1443 = vadd.f32 %v1386, %v1442
    %v1444 = vpop.f32.mrb[0].mxu0
    %1445 = vmatprep.mubr.bf16.mxu0 0
    %1446 = vmatmul.mubr.bf16.gmra.mrb[0].mxu0 %v1403
    %v1447 = vpop.f32.mrb[0].mxu0
    %v1448 = vadd.f32 %v1386, %v1447
    %v1449 = vpop.f32.mrb[0].mxu0
    %v1450 = vpop.f32.mrb[0].mxu0
    %v1451 = vadd.f32 %v1386, %v1450
    %v1452 = vpop.f32.mrb[0].mxu0
    %1453 = vdwg.mxu0
    %v1454 = vadd.f32 %v125, %v1440
    %v1455 = vadd.f32 %v126, %v1443
    %v1456 = vadd.f32 %v127, %v1448
    %v1457 = vadd.f32 %v128, %v1451
    %v1458 = vsel %vm165, %v1454, 0.0
    %1459 = vadd.xlane.f32.xlu0 %v1458
    %v1460 = vpop.xlane.xlu0 %1459
    %v1461 = vsel %vm165, %v1455, 0.0
    %1462 = vadd.xlane.f32.xlu0 %v1461
    %v1463 = vpop.xlane.xlu0 %1462
    %v1464 = vsel %vm165, %v1456, 0.0
    %1465 = vadd.xlane.f32.xlu0 %v1464
    %v1466 = vpop.xlane.xlu0 %1465
    %v1467 = vsel %vm165, %v1457, 0.0
    %1468 = vadd.xlane.f32.xlu0 %v1467
    %v1469 = vpop.xlane.xlu0 %1468
    %v1470 = vmul.f32 %v1460, %v178
    %v1471 = vmul.f32 %v1463, %v178
    %v1472 = vmul.f32 %v1466, %v178
    %v1473 = vmul.f32 %v1469, %v178
    %v1474 = vsub.f32 %v1454, %v1470
    %v1475 = vsub.f32 %v1455, %v1471
    %v1476 = vsub.f32 %v1456, %v1472
    %v1477 = vsub.f32 %v1457, %v1473
    %v1478 = vmul.f32 %v1474, %v1474
    %v1479 = vmul.f32 %v1475, %v1475
    %v1480 = vmul.f32 %v1476, %v1476
    %v1481 = vmul.f32 %v1477, %v1477
    %v1482 = vsel %vm165, %v1478, 0.0
    %1483 = vadd.xlane.f32.xlu0 %v1482
    %v1484 = vpop.xlane.xlu0 %1483
    %v1485 = vsel %vm165, %v1479, 0.0
    %1486 = vadd.xlane.f32.xlu0 %v1485
    %v1487 = vpop.xlane.xlu0 %1486
    %v1488 = vsel %vm165, %v1480, 0.0
    %1489 = vadd.xlane.f32.xlu0 %v1488
    %v1490 = vpop.xlane.xlu0 %1489
    %v1491 = vsel %vm165, %v1481, 0.0
    %1492 = vadd.xlane.f32.xlu0 %v1491
    %v1493 = vpop.xlane.xlu0 %1492
    %v1494 = vmul.f32 %v1484, %v178
    %v1495 = vmul.f32 %v1487, %v178
    %v1496 = vmul.f32 %v1490, %v178
    %v1497 = vmul.f32 %v1493, %v178
    %v1498 = vadd.f32 %v1494, 1e-05
    %v1499 = vadd.f32 %v1495, 1e-05
    %v1500 = vadd.f32 %v1496, 1e-05
    %v1501 = vadd.f32 %v1497, 1e-05
    %v1502 = vrsqrt.pop %v1498
    %v1503 = vrsqrt.pop %v1499
    %v1504 = vrsqrt.pop %v1500
    %v1505 = vrsqrt.pop %v1501
    %v1506 = vmul.f32 %v1474, %v1502
    %v1507 = vmul.f32 %v1475, %v1503
    %v1508 = vmul.f32 %v1476, %v1504
    %v1509 = vmul.f32 %v1477, %v1505
    %v1510 = vlaneseq
    %v1511 = vshrl.u32 %v1510, 7
    %v1512 = vsub.s32 0, %v1511
    %v1513 = vrot.slane %v162, %v1512
    %v1514 = vmul.f32 %v1506, %v1513
    %v1515 = vmul.f32 %v1507, %v1513
    %v1516 = vmul.f32 %v1508, %v1513
    %v1517 = vmul.f32 %v1509, %v1513
    %v1518 = vlaneseq
    %v1519 = vshrl.u32 %v1518, 7
    %v1520 = vsub.s32 0, %v1519
    %v1521 = vrot.slane %v163, %v1520
    %v1522 = vadd.f32 %v1514, %v1521
    %v1523 = vadd.f32 %v1515, %v1521
    %v1524 = vadd.f32 %v1516, %v1521
    %v1525 = vadd.f32 %v1517, %v1521
    %v1526 = vpack.c.bf16 %v1523, %v1522
    %v1527 = vpack.c.bf16 %v1525, %v1524
    %v1529 = vlaneseq
    %v1530 = vshrl.u32 %v1529, 7
    %v1531 = vsub.s32 0, %v1530
    %v1532 = vrot.slane %v158, %v1531
    %v1538 = vunpack.c.l.b16 %v133
    %v1539 = vunpack.c.l.b16 %v134
    %v1540 = vunpack.c.l.b16 %v135
    %v1541 = vunpack.c.l.b16 %v136
    %v1542 = vpack.c.b16 %v1539, %v1538
    %v1543 = vpack.c.b16 %v1541, %v1540
    %v1547 = vsel %vm165, %v1526, 0
    %v1550 = vsel %vm165, %v1527, 0
    %1552 = vmatprep.subr.bf16.mxu0 0
    %1553 = vmatpush1.bf16.msra.mxu0 %v1542
    %1554 = vmatprep.subr.bf16.mxu0 0
    %1555 = vmatpush1.bf16.msra.mxu0 %v1543
    %1556 = vmatprep.subr.bf16.mxu0 0
    %1557 = vmatpush1.bf16.msra.mxu0 0
    %1558 = vmatprep.subr.bf16.mxu0 0
    %1559 = vmatpush1.bf16.msra.mxu0 0
    %1560 = vmatprep.subr.bf16.mxu0 0
    %1561 = vmatpush1.bf16.msra.mxu0 0
    %1562 = vmatprep.subr.bf16.mxu0 0
    %1563 = vmatpush1.bf16.msra.mxu0 0
    %1564 = vmatprep.subr.bf16.mxu0 0
    %1565 = vmatpush1.bf16.msra.mxu0 0
    %1566 = vmatprep.subr.bf16.mxu0 0
    %1567 = vmatpush1.bf16.msra.mxu0 0
    %1568 = vmatprep.subr.bf16.mxu0 0
    %1569 = vmatpush1.bf16.msra.mxu0 0
    %1570 = vmatprep.subr.bf16.mxu0 0
    %1571 = vmatpush1.bf16.msra.mxu0 0
    %1572 = vmatprep.subr.bf16.mxu0 0
    %1573 = vmatpush1.bf16.msra.mxu0 0
    %1574 = vmatprep.subr.bf16.mxu0 0
    %1575 = vmatpush1.bf16.msra.mxu0 0
    %1576 = vmatprep.subr.bf16.mxu0 0
    %1577 = vmatpush1.bf16.msra.mxu0 0
    %1578 = vmatprep.subr.bf16.mxu0 0
    %1579 = vmatpush1.bf16.msra.mxu0 0
    %1580 = vmatprep.subr.bf16.mxu0 0
    %1581 = vmatpush1.bf16.msra.mxu0 0
    %1582 = vmatprep.subr.bf16.mxu0 0
    %1583 = vmatpush1.bf16.msra.mxu0 0
    %1584 = vmatprep.mubr.bf16.mxu0 0
    %1585 = vmatmul.mubr.bf16.gmra.mrb[0].mxu0 %v1547
    %v1586 = vpop.f32.mrb[0].mxu0
    %v1587 = vadd.f32 %v1532, %v1586
    %v1588 = vpop.f32.mrb[0].mxu0
    %v1589 = vpop.f32.mrb[0].mxu0
    %v1590 = vadd.f32 %v1532, %v1589
    %v1591 = vpop.f32.mrb[0].mxu0
    %1592 = vmatprep.mubr.bf16.mxu0 0
    %1593 = vmatmul.mubr.bf16.gmra.mrb[0].mxu0 %v1550
    %v1594 = vpop.f32.mrb[0].mxu0
    %v1595 = vadd.f32 %v1532, %v1594
    %v1596 = vpop.f32.mrb[0].mxu0
    %v1597 = vpop.f32.mrb[0].mxu0
    %v1598 = vadd.f32 %v1532, %v1597
    %v1599 = vpop.f32.mrb[0].mxu0
    %1600 = vdwg.mxu0
    %v1601 = vmul.f32 %v1587, 0.5
    %v1602 = vmul.f32 %v1590, 0.5
    %v1603 = vmul.f32 %v1595, 0.5
    %v1604 = vmul.f32 %v1598, 0.5
    %v1605 = vmul.f32 %v1587, 0.70710677
    %v1606 = vmul.f32 %v1590, 0.70710677
    %v1607 = vmul.f32 %v1595, 0.70710677
    %v1608 = vmul.f32 %v1598, 0.70710677
    %v1609 = vand.u32 2147483647, %v1605
    %v1610 = vand.u32 2147483647, %v1606
    %v1611 = vand.u32 2147483647, %v1607
    %v1612 = vand.u32 2147483647, %v1608
    %v1613 = vmul.f32 %v1609, 0.3275911
    %v1614 = vmul.f32 %v1610, 0.3275911
    %v1615 = vmul.f32 %v1611, 0.3275911
    %v1616 = vmul.f32 %v1612, 0.3275911
    %v1617 = vadd.f32 %v1613, 1.0
    %v1618 = vadd.f32 %v1614, 1.0
    %v1619 = vadd.f32 %v1615, 1.0
    %v1620 = vadd.f32 %v1616, 1.0
    %v1621 = vrcp.pop %v1617
    %v1622 = vmul.f32 1.0, %v1621
    %v1623 = vrcp.pop %v1618
    %v1624 = vmul.f32 1.0, %v1623
    %v1625 = vrcp.pop %v1619
    %v1626 = vmul.f32 1.0, %v1625
    %v1627 = vrcp.pop %v1620
    %v1628 = vmul.f32 1.0, %v1627
    %v1629 = vmul.f32 %v1622, 1.0614054
    %v1630 = vmul.f32 %v1624, 1.0614054
    %v1631 = vmul.f32 %v1626, 1.0614054
    %v1632 = vmul.f32 %v1628, 1.0614054
    %v1633 = vadd.f32 %v1629, -1.4531521
    %v1634 = vadd.f32 %v1630, -1.4531521
    %v1635 = vadd.f32 %v1631, -1.4531521
    %v1636 = vadd.f32 %v1632, -1.4531521
    %v1637 = vmul.f32 %v1622, %v1633
    %v1638 = vmul.f32 %v1624, %v1634
    %v1639 = vmul.f32 %v1626, %v1635
    %v1640 = vmul.f32 %v1628, %v1636
    %v1641 = vadd.f32 %v1637, 1.4214138
    %v1642 = vadd.f32 %v1638, 1.4214138
    %v1643 = vadd.f32 %v1639, 1.4214138
    %v1644 = vadd.f32 %v1640, 1.4214138
    %v1645 = vmul.f32 %v1622, %v1641
    %v1646 = vmul.f32 %v1624, %v1642
    %v1647 = vmul.f32 %v1626, %v1643
    %v1648 = vmul.f32 %v1628, %v1644
    %v1649 = vadd.f32 %v1645, -0.28449672
    %v1650 = vadd.f32 %v1646, -0.28449672
    %v1651 = vadd.f32 %v1647, -0.28449672
    %v1652 = vadd.f32 %v1648, -0.28449672
    %v1653 = vmul.f32 %v1622, %v1649
    %v1654 = vmul.f32 %v1624, %v1650
    %v1655 = vmul.f32 %v1626, %v1651
    %v1656 = vmul.f32 %v1628, %v1652
    %v1657 = vadd.f32 %v1653, 0.2548296
    %v1658 = vadd.f32 %v1654, 0.2548296
    %v1659 = vadd.f32 %v1655, 0.2548296
    %v1660 = vadd.f32 %v1656, 0.2548296
    %v1661 = vmul.f32 %v1622, %v1657
    %v1662 = vmul.f32 %v1624, %v1658
    %v1663 = vmul.f32 %v1626, %v1659
    %v1664 = vmul.f32 %v1628, %v1660
    %v1665 = vsub.f32 0.0, %v1609
    %v1666 = vsub.f32 0.0, %v1610
    %v1667 = vsub.f32 0.0, %v1611
    %v1668 = vsub.f32 0.0, %v1612
    %v1669 = vmul.f32 %v1665, %v1609
    %v1670 = vmul.f32 %v1666, %v1610
    %v1671 = vmul.f32 %v1667, %v1611
    %v1672 = vmul.f32 %v1668, %v1612
    %v1673 = vmul.f32 %v1669, 1.442695
    %v1674 = vpow.pop %v1673
    %v1675 = vmul.f32 %v1670, 1.442695
    %v1676 = vpow.pop %v1675
    %v1677 = vmul.f32 %v1671, 1.442695
    %v1678 = vpow.pop %v1677
    %v1679 = vmul.f32 %v1672, 1.442695
    %v1680 = vpow.pop %v1679
    %v1681 = vmul.f32 %v1661, %v1674
    %v1682 = vmul.f32 %v1662, %v1676
    %v1683 = vmul.f32 %v1663, %v1678
    %v1684 = vmul.f32 %v1664, %v1680
    %v1685 = vsub.f32 1.0, %v1681
    %v1686 = vsub.f32 1.0, %v1682
    %v1687 = vsub.f32 1.0, %v1683
    %v1688 = vsub.f32 1.0, %v1684
    %vm1689 = vcmp.lt.f32.partialorder %v1605, 0.0
    %vm1690 = vcmp.lt.f32.partialorder %v1606, 0.0
    %vm1691 = vcmp.lt.f32.partialorder %v1607, 0.0
    %vm1692 = vcmp.lt.f32.partialorder %v1608, 0.0
    %v1693 = vsub.f32 0.0, %v1685
    %v1694 = vsub.f32 0.0, %v1686
    %v1695 = vsub.f32 0.0, %v1687
    %v1696 = vsub.f32 0.0, %v1688
    %v1697 = vsel %vm1689, %v1693, %v1685
    %v1698 = vsel %vm1690, %v1694, %v1686
    %v1699 = vsel %vm1691, %v1695, %v1687
    %v1700 = vsel %vm1692, %v1696, %v1688
    %v1701 = vadd.f32 %v1697, 1.0
    %v1702 = vadd.f32 %v1698, 1.0
    %v1703 = vadd.f32 %v1699, 1.0
    %v1704 = vadd.f32 %v1700, 1.0
    %v1705 = vmul.f32 %v1601, %v1701
    %v1706 = vmul.f32 %v1602, %v1702
    %v1707 = vmul.f32 %v1603, %v1703
    %v1708 = vmul.f32 %v1604, %v1704
    %v1709 = vpack.c.bf16 %v1706, %v1705
    %v1710 = vpack.c.bf16 %v1708, %v1707
    %v1711 = vlaneseq
    %v1712 = vshrl.u32 %v1711, 7
    %v1713 = vsub.s32 0, %v1712
    %v1714 = vrot.slane %v164, %v1713
    %v1731 = vunpack.c.l.b16 %v141
    %v1732 = vunpack.c.l.b16 %v142
    %v1733 = vunpack.c.l.b16 %v143
    %v1734 = vunpack.c.l.b16 %v144
    %v1735 = vunpack.c.l.b16 %v145
    %v1736 = vunpack.c.l.b16 %v146
    %v1737 = vunpack.c.l.b16 %v147
    %v1738 = vunpack.c.l.b16 %v148
    %v1739 = vunpack.c.l.b16 %v149
    %v1740 = vunpack.c.l.b16 %v150
    %v1741 = vunpack.c.l.b16 %v151
    %v1742 = vunpack.c.l.b16 %v152
    %v1743 = vunpack.c.l.b16 %v153
    %v1744 = vunpack.c.l.b16 %v154
    %v1745 = vunpack.c.l.b16 %v155
    %v1746 = vunpack.c.l.b16 %v156
    %v1747 = vpack.c.b16 %v1732, %v1731
    %v1748 = vpack.c.b16 %v1734, %v1733
    %v1749 = vpack.c.b16 %v1736, %v1735
    %v1750 = vpack.c.b16 %v1738, %v1737
    %v1751 = vpack.c.b16 %v1740, %v1739
    %v1752 = vpack.c.b16 %v1742, %v1741
    %v1753 = vpack.c.b16 %v1744, %v1743
    %v1754 = vpack.c.b16 %v1746, %v1745
    %1763 = vmatprep.subr.bf16.mxu0 0
    %1764 = vmatpush1.bf16.msra.mxu0 %v1747
    %1765 = vmatprep.subr.bf16.mxu0 0
    %1766 = vmatpush1.bf16.msra.mxu0 %v1748
    %1767 = vmatprep.subr.bf16.mxu0 0
    %1768 = vmatpush1.bf16.msra.mxu0 %v1749
    %1769 = vmatprep.subr.bf16.mxu0 0
    %1770 = vmatpush1.bf16.msra.mxu0 %v1750
    %1771 = vmatprep.subr.bf16.mxu0 0
    %1772 = vmatpush1.bf16.msra.mxu0 %v1751
    %1773 = vmatprep.subr.bf16.mxu0 0
    %1774 = vmatpush1.bf16.msra.mxu0 %v1752
    %1775 = vmatprep.subr.bf16.mxu0 0
    %1776 = vmatpush1.bf16.msra.mxu0 %v1753
    %1777 = vmatprep.subr.bf16.mxu0 0
    %1778 = vmatpush1.bf16.msra.mxu0 %v1754
    %1779 = vmatprep.subr.bf16.mxu0 0
    %1780 = vmatpush1.bf16.msra.mxu0 0
    %1781 = vmatprep.subr.bf16.mxu0 0
    %1782 = vmatpush1.bf16.msra.mxu0 0
    %1783 = vmatprep.subr.bf16.mxu0 0
    %1784 = vmatpush1.bf16.msra.mxu0 0
    %1785 = vmatprep.subr.bf16.mxu0 0
    %1786 = vmatpush1.bf16.msra.mxu0 0
    %1787 = vmatprep.subr.bf16.mxu0 0
    %1788 = vmatpush1.bf16.msra.mxu0 0
    %1789 = vmatprep.subr.bf16.mxu0 0
    %1790 = vmatpush1.bf16.msra.mxu0 0
    %1791 = vmatprep.subr.bf16.mxu0 0
    %1792 = vmatpush1.bf16.msra.mxu0 0
    %1793 = vmatprep.subr.bf16.mxu0 0
    %1794 = vmatpush1.bf16.msra.mxu0 0
    %1795 = vmatprep.mubr.bf16.mxu0 0
    %1796 = vmatmul.mubr.bf16.gmra.mrb[0].mxu0 %v1709
    %v1797 = vpop.f32.mrb[0].mxu0
    %v1798 = vadd.f32 %v1714, %v1797
    %v1799 = vpop.f32.mrb[0].mxu0
    %v1800 = vpop.f32.mrb[0].mxu0
    %v1801 = vadd.f32 %v1714, %v1800
    %v1802 = vpop.f32.mrb[0].mxu0
    %1803 = vmatprep.mubr.bf16.mxu0 0
    %1804 = vmatmul.mubr.bf16.gmra.mrb[0].mxu0 %v1710
    %v1805 = vpop.f32.mrb[0].mxu0
    %v1806 = vadd.f32 %v1714, %v1805
    %v1807 = vpop.f32.mrb[0].mxu0
    %v1808 = vpop.f32.mrb[0].mxu0
    %v1809 = vadd.f32 %v1714, %v1808
    %v1810 = vpop.f32.mrb[0].mxu0
    %1811 = vdwg.mxu0
    %v1812 = vadd.f32 %v1454, %v1798
    %v1813 = vadd.f32 %v1455, %v1801
    %v1814 = vadd.f32 %v1456, %v1806
    %v1815 = vadd.f32 %v1457, %v1809
    %s1816 = scalar_lea.vmem %s3, 32
    %v1817 = vld [vmem:[%s1816] sm:$0xf]
    %v1818 = vld [vmem:[%s1816 + $0x8] sm:$0xf]
    %v1819 = vld [vmem:[%s1816 + $0x10] sm:$0xf]
    %v1820 = vld [vmem:[%s1816 + $0x18] sm:$0xf]
    %v1821 = vld [vmem:[%s1816 + $0x4] sm:$0xf]
    %v1822 = vld [vmem:[%s1816 + $0xc] sm:$0xf]
    %v1823 = vld [vmem:[%s1816 + $0x14] sm:$0xf]
    %v1824 = vld [vmem:[%s1816 + $0x1c] sm:$0xf]
    %s1825 = scalar_lea.vmem %s4, 16
    %v1826 = vld [vmem:[%s1825] sm:$0xf]
    %v1827 = vld [vmem:[%s1825 + $0x4] sm:$0xf]
    %v1828 = vld [vmem:[%s1825 + $0x8] sm:$0xf]
    %v1829 = vld [vmem:[%s1825 + $0xc] sm:$0xf]
    %s1830 = scalar_lea.vmem %s5, 64
    %v1831 = vld [vmem:[%s1830] sm:$0xf]
    %v1832 = vld [vmem:[%s1830 + $0x4] sm:$0xf]
    %v1833 = vld [vmem:[%s1830 + $0x8] sm:$0xf]
    %v1834 = vld [vmem:[%s1830 + $0xc] sm:$0xf]
    %v1835 = vld [vmem:[%s1830 + $0x10] sm:$0xf]
    %v1836 = vld [vmem:[%s1830 + $0x14] sm:$0xf]
    %v1837 = vld [vmem:[%s1830 + $0x18] sm:$0xf]
    %v1838 = vld [vmem:[%s1830 + $0x1c] sm:$0xf]
    %v1839 = vld [vmem:[%s1830 + $0x20] sm:$0xf]
    %v1840 = vld [vmem:[%s1830 + $0x24] sm:$0xf]
    %v1841 = vld [vmem:[%s1830 + $0x28] sm:$0xf]
    %v1842 = vld [vmem:[%s1830 + $0x2c] sm:$0xf]
    %v1843 = vld [vmem:[%s1830 + $0x30] sm:$0xf]
    %v1844 = vld [vmem:[%s1830 + $0x34] sm:$0xf]
    %v1845 = vld [vmem:[%s1830 + $0x38] sm:$0xf]
    %v1846 = vld [vmem:[%s1830 + $0x3c] sm:$0xf]
    %s1847 = scalar_lea.vmem %s6, 1
    %v1848 = vld [vmem:[%s1847] sm:$0x1]
    %s1849 = scalar_lea.vmem %s7, 1
    %v1850 = vld [vmem:[%s1849] sm:$0x1]
    %s1851 = scalar_lea.vmem %s8, 8
    %v1852 = vld [vmem:[%s1851] sm:$0x1]
    %v1853 = vld [vmem:[%s1851 + $0x1] sm:$0x1]
    %v1854 = vld [vmem:[%s1851 + $0x2] sm:$0x1]
    %v1855 = vld [vmem:[%s1851 + $0x3] sm:$0x1]
    %v1856 = vld [vmem:[%s1851 + $0x4] sm:$0x1]
    %v1857 = vld [vmem:[%s1851 + $0x5] sm:$0x1]
    %v1858 = vsel %vm165, %v1812, 0.0
    %1859 = vadd.xlane.f32.xlu0 %v1858
    %v1860 = vpop.xlane.xlu0 %1859
    %v1861 = vsel %vm165, %v1813, 0.0
    %1862 = vadd.xlane.f32.xlu0 %v1861
    %v1863 = vpop.xlane.xlu0 %1862
    %v1864 = vsel %vm165, %v1814, 0.0
    %1865 = vadd.xlane.f32.xlu0 %v1864
    %v1866 = vpop.xlane.xlu0 %1865
    %v1867 = vsel %vm165, %v1815, 0.0
    %1868 = vadd.xlane.f32.xlu0 %v1867
    %v1869 = vpop.xlane.xlu0 %1868
    %v1870 = vmul.f32 %v1860, %v178
    %v1871 = vmul.f32 %v1863, %v178
    %v1872 = vmul.f32 %v1866, %v178
    %v1873 = vmul.f32 %v1869, %v178
    %v1874 = vsub.f32 %v1812, %v1870
    %v1875 = vsub.f32 %v1813, %v1871
    %v1876 = vsub.f32 %v1814, %v1872
    %v1877 = vsub.f32 %v1815, %v1873
    %v1878 = vmul.f32 %v1874, %v1874
    %v1879 = vmul.f32 %v1875, %v1875
    %v1880 = vmul.f32 %v1876, %v1876
    %v1881 = vmul.f32 %v1877, %v1877
    %v1882 = vsel %vm165, %v1878, 0.0
    %1883 = vadd.xlane.f32.xlu0 %v1882
    %v1884 = vpop.xlane.xlu0 %1883
    %v1885 = vsel %vm165, %v1879, 0.0
    %1886 = vadd.xlane.f32.xlu0 %v1885
    %v1887 = vpop.xlane.xlu0 %1886
    %v1888 = vsel %vm165, %v1880, 0.0
    %1889 = vadd.xlane.f32.xlu0 %v1888
    %v1890 = vpop.xlane.xlu0 %1889
    %v1891 = vsel %vm165, %v1881, 0.0
    %1892 = vadd.xlane.f32.xlu0 %v1891
    %v1893 = vpop.xlane.xlu0 %1892
    %v1894 = vmul.f32 %v1884, %v178
    %v1895 = vmul.f32 %v1887, %v178
    %v1896 = vmul.f32 %v1890, %v178
    %v1897 = vmul.f32 %v1893, %v178
    %v1898 = vadd.f32 %v1894, 1e-05
    %v1899 = vadd.f32 %v1895, 1e-05
    %v1900 = vadd.f32 %v1896, 1e-05
    %v1901 = vadd.f32 %v1897, 1e-05
    %v1902 = vrsqrt.pop %v1898
    %v1903 = vrsqrt.pop %v1899
    %v1904 = vrsqrt.pop %v1900
    %v1905 = vrsqrt.pop %v1901
    %v1906 = vmul.f32 %v1874, %v1902
    %v1907 = vmul.f32 %v1875, %v1903
    %v1908 = vmul.f32 %v1876, %v1904
    %v1909 = vmul.f32 %v1877, %v1905
    %v1910 = vlaneseq
    %v1911 = vshrl.u32 %v1910, 7
    %v1912 = vsub.s32 0, %v1911
    %v1913 = vrot.slane %v1852, %v1912
    %v1914 = vmul.f32 %v1906, %v1913
    %v1915 = vmul.f32 %v1907, %v1913
    %v1916 = vmul.f32 %v1908, %v1913
    %v1917 = vmul.f32 %v1909, %v1913
    %v1918 = vlaneseq
    %v1919 = vshrl.u32 %v1918, 7
    %v1920 = vsub.s32 0, %v1919
    %v1921 = vrot.slane %v1853, %v1920
    %v1922 = vadd.f32 %v1914, %v1921
    %v1923 = vadd.f32 %v1915, %v1921
    %v1924 = vadd.f32 %v1916, %v1921
    %v1925 = vadd.f32 %v1917, %v1921
    %v1926 = vpack.c.bf16 %v1923, %v1922
    %v1927 = vpack.c.bf16 %v1925, %v1924
    %v1929 = vlaneseq
    %v1930 = vshrl.u32 %v1929, 7
    %v1931 = vsub.s32 0, %v1930
    %v1932 = vrot.slane %v1848, %v1931
    %v1938 = vunpack.c.l.b16 %v1817
    %v1939 = vunpack.c.l.b16 %v1818
    %v1940 = vunpack.c.l.b16 %v1819
    %v1941 = vunpack.c.l.b16 %v1820
    %v1942 = vpack.c.b16 %v1939, %v1938
    %v1943 = vpack.c.b16 %v1941, %v1940
    %v1947 = vsel %vm165, %v1926, 0
    %v1950 = vsel %vm165, %v1927, 0
    %1952 = vmatprep.subr.bf16.mxu0 0
    %1953 = vmatpush1.bf16.msra.mxu0 %v1942
    %1954 = vmatprep.subr.bf16.mxu0 0
    %1955 = vmatpush1.bf16.msra.mxu0 %v1943
    %1956 = vmatprep.subr.bf16.mxu0 0
    %1957 = vmatpush1.bf16.msra.mxu0 0
    %1958 = vmatprep.subr.bf16.mxu0 0
    %1959 = vmatpush1.bf16.msra.mxu0 0
    %1960 = vmatprep.subr.bf16.mxu0 0
    %1961 = vmatpush1.bf16.msra.mxu0 0
    %1962 = vmatprep.subr.bf16.mxu0 0
    %1963 = vmatpush1.bf16.msra.mxu0 0
    %1964 = vmatprep.subr.bf16.mxu0 0
    %1965 = vmatpush1.bf16.msra.mxu0 0
    %1966 = vmatprep.subr.bf16.mxu0 0
    %1967 = vmatpush1.bf16.msra.mxu0 0
    %1968 = vmatprep.subr.bf16.mxu0 0
    %1969 = vmatpush1.bf16.msra.mxu0 0
    %1970 = vmatprep.subr.bf16.mxu0 0
    %1971 = vmatpush1.bf16.msra.mxu0 0
    %1972 = vmatprep.subr.bf16.mxu0 0
    %1973 = vmatpush1.bf16.msra.mxu0 0
    %1974 = vmatprep.subr.bf16.mxu0 0
    %1975 = vmatpush1.bf16.msra.mxu0 0
    %1976 = vmatprep.subr.bf16.mxu0 0
    %1977 = vmatpush1.bf16.msra.mxu0 0
    %1978 = vmatprep.subr.bf16.mxu0 0
    %1979 = vmatpush1.bf16.msra.mxu0 0
    %1980 = vmatprep.subr.bf16.mxu0 0
    %1981 = vmatpush1.bf16.msra.mxu0 0
    %1982 = vmatprep.subr.bf16.mxu0 0
    %1983 = vmatpush1.bf16.msra.mxu0 0
    %1984 = vmatprep.mubr.bf16.mxu0 0
    %1985 = vmatmul.mubr.bf16.gmra.mrb[0].mxu0 %v1947
    %v1986 = vpop.f32.mrb[0].mxu0
    %v1987 = vadd.f32 %v1932, %v1986
    %v1988 = vpop.f32.mrb[0].mxu0
    %v1989 = vpop.f32.mrb[0].mxu0
    %v1990 = vadd.f32 %v1932, %v1989
    %v1991 = vpop.f32.mrb[0].mxu0
    %1992 = vmatprep.mubr.bf16.mxu0 0
    %1993 = vmatmul.mubr.bf16.gmra.mrb[0].mxu0 %v1950
    %v1994 = vpop.f32.mrb[0].mxu0
    %v1995 = vadd.f32 %v1932, %v1994
    %v1996 = vpop.f32.mrb[0].mxu0
    %v1997 = vpop.f32.mrb[0].mxu0
    %v1998 = vadd.f32 %v1932, %v1997
    %v1999 = vpop.f32.mrb[0].mxu0
    %2000 = vdwg.mxu0
    %2005 = vrot.lane.b32.xlu0 %v1987, 120
    %v2006 = vpop.permute.xlu0 %2005
    %2007 = vrot.lane.b32.xlu0 %v1990, 120
    %v2008 = vpop.permute.xlu0 %2007
    %2009 = vrot.lane.b32.xlu0 %v1995, 120
    %v2010 = vpop.permute.xlu0 %2009
    %2011 = vrot.lane.b32.xlu0 %v1998, 120
    %v2012 = vpop.permute.xlu0 %2011
    %2017 = vrot.lane.b32.xlu0 %v1987, 112
    %v2018 = vpop.permute.xlu0 %2017
    %2019 = vrot.lane.b32.xlu0 %v1990, 112
    %v2020 = vpop.permute.xlu0 %2019
    %2021 = vrot.lane.b32.xlu0 %v1995, 112
    %v2022 = vpop.permute.xlu0 %2021
    %2023 = vrot.lane.b32.xlu0 %v1998, 112
    %v2024 = vpop.permute.xlu0 %2023
    %2029 = vrot.lane.b32.xlu0 %v1987, 104
    %v2030 = vpop.permute.xlu0 %2029
    %2031 = vrot.lane.b32.xlu0 %v1990, 104
    %v2032 = vpop.permute.xlu0 %2031
    %2033 = vrot.lane.b32.xlu0 %v1995, 104
    %v2034 = vpop.permute.xlu0 %2033
    %2035 = vrot.lane.b32.xlu0 %v1998, 104
    %v2036 = vpop.permute.xlu0 %2035
    %v2041 = vpack.c.bf16 %v1990, %v1987
    %v2042 = vpack.c.bf16 %v1998, %v1995
    %v2043 = vpack.c.bf16 %v2008, %v2006
    %v2044 = vpack.c.bf16 %v2012, %v2010
    %v2045 = vpack.c.bf16 %v2020, %v2018
    %v2046 = vpack.c.bf16 %v2024, %v2022
    %v2047 = vpack.c.bf16 %v2032, %v2030
    %v2048 = vpack.c.bf16 %v2036, %v2034
    %2050 = vrot.lane.b32.xlu0 %v2041, 96
    %v2051 = vpop.permute.xlu0 %2050
    %v2053 = vsel %vm361, %v2041, 0
    %v2056 = vsel %vm361, %v2051, 0
    %2058 = vmatprep.subr.bf16.mxu0 0
    %2059 = vmatpush1.bf16.xpose.msra.mxu0 %v2056
    %2060 = vmatprep.subr.bf16.mxu0 0
    %2061 = vmatpush1.bf16.xpose.msra.mxu0 0
    %2062 = vmatprep.subr.bf16.mxu0 0
    %2063 = vmatpush1.bf16.xpose.msra.mxu0 0
    %2064 = vmatprep.subr.bf16.mxu0 0
    %2065 = vmatpush1.bf16.xpose.msra.mxu0 0
    %2066 = vmatprep.subr.bf16.mxu0 0
    %2067 = vmatpush1.bf16.xpose.msra.mxu0 0
    %2068 = vmatprep.subr.bf16.mxu0 0
    %2069 = vmatpush1.bf16.xpose.msra.mxu0 0
    %2070 = vmatprep.subr.bf16.mxu0 0
    %2071 = vmatpush1.bf16.xpose.msra.mxu0 0
    %2072 = vmatprep.subr.bf16.mxu0 0
    %2073 = vmatpush1.bf16.xpose.msra.mxu0 0
    %2074 = vmatprep.subr.bf16.mxu0 0
    %2075 = vmatpush1.bf16.xpose.msra.mxu0 0
    %2076 = vmatprep.subr.bf16.mxu0 0
    %2077 = vmatpush1.bf16.xpose.msra.mxu0 0
    %2078 = vmatprep.subr.bf16.mxu0 0
    %2079 = vmatpush1.bf16.xpose.msra.mxu0 0
    %2080 = vmatprep.subr.bf16.mxu0 0
    %2081 = vmatpush1.bf16.xpose.msra.mxu0 0
    %2082 = vmatprep.subr.bf16.mxu0 0
    %2083 = vmatpush1.bf16.xpose.msra.mxu0 0
    %2084 = vmatprep.subr.bf16.mxu0 0
    %2085 = vmatpush1.bf16.xpose.msra.mxu0 0
    %2086 = vmatprep.subr.bf16.mxu0 0
    %2087 = vmatpush1.bf16.xpose.msra.mxu0 0
    %2088 = vmatprep.subr.bf16.mxu0 0
    %2089 = vmatpush1.bf16.xpose.msra.mxu0 0
    %2090 = vmatprep.mubr.bf16.mxu0 0
    %2091 = vmatmul.mubr.bf16.gmra.mrb[0].mxu0 %v2053
    %v2092 = vpop.f32.mrb[0].mxu0
    %v2093 = vadd.f32 0.0, %v2092
    %v2094 = vpop.f32.mrb[0].mxu0
    %v2095 = vpop.f32.mrb[0].mxu0
    %v2096 = vadd.f32 0.0, %v2095
    %v2097 = vpop.f32.mrb[0].mxu0
    %2098 = vdwg.mxu0
    %2100 = vrot.lane.b32.xlu0 %v2042, 96
    %v2101 = vpop.permute.xlu0 %2100
    %v2103 = vsel %vm361, %v2042, 0
    %v2106 = vsel %vm361, %v2101, 0
    %2108 = vmatprep.subr.bf16.mxu0 0
    %2109 = vmatpush1.bf16.xpose.msra.mxu0 %v2106
    %2110 = vmatprep.subr.bf16.mxu0 0
    %2111 = vmatpush1.bf16.xpose.msra.mxu0 0
    %2112 = vmatprep.subr.bf16.mxu0 0
    %2113 = vmatpush1.bf16.xpose.msra.mxu0 0
    %2114 = vmatprep.subr.bf16.mxu0 0
    %2115 = vmatpush1.bf16.xpose.msra.mxu0 0
    %2116 = vmatprep.subr.bf16.mxu0 0
    %2117 = vmatpush1.bf16.xpose.msra.mxu0 0
    %2118 = vmatprep.subr.bf16.mxu0 0
    %2119 = vmatpush1.bf16.xpose.msra.mxu0 0
    %2120 = vmatprep.subr.bf16.mxu0 0
    %2121 = vmatpush1.bf16.xpose.msra.mxu0 0
    %2122 = vmatprep.subr.bf16.mxu0 0
    %2123 = vmatpush1.bf16.xpose.msra.mxu0 0
    %2124 = vmatprep.subr.bf16.mxu0 0
    %2125 = vmatpush1.bf16.xpose.msra.mxu0 0
    %2126 = vmatprep.subr.bf16.mxu0 0
    %2127 = vmatpush1.bf16.xpose.msra.mxu0 0
    %2128 = vmatprep.subr.bf16.mxu0 0
    %2129 = vmatpush1.bf16.xpose.msra.mxu0 0
    %2130 = vmatprep.subr.bf16.mxu0 0
    %2131 = vmatpush1.bf16.xpose.msra.mxu0 0
    %2132 = vmatprep.subr.bf16.mxu0 0
    %2133 = vmatpush1.bf16.xpose.msra.mxu0 0
    %2134 = vmatprep.subr.bf16.mxu0 0
    %2135 = vmatpush1.bf16.xpose.msra.mxu0 0
    %2136 = vmatprep.subr.bf16.mxu0 0
    %2137 = vmatpush1.bf16.xpose.msra.mxu0 0
    %2138 = vmatprep.subr.bf16.mxu0 0
    %2139 = vmatpush1.bf16.xpose.msra.mxu0 0
    %2140 = vmatprep.mubr.bf16.mxu0 0
    %2141 = vmatmul.mubr.bf16.gmra.mrb[0].mxu0 %v2103
    %v2142 = vpop.f32.mrb[0].mxu0
    %v2143 = vadd.f32 0.0, %v2142
    %v2144 = vpop.f32.mrb[0].mxu0
    %v2145 = vpop.f32.mrb[0].mxu0
    %v2146 = vadd.f32 0.0, %v2145
    %v2147 = vpop.f32.mrb[0].mxu0
    %2148 = vdwg.mxu0
    %2150 = vrot.lane.b32.xlu0 %v2043, 96
    %v2151 = vpop.permute.xlu0 %2150
    %v2153 = vsel %vm361, %v2043, 0
    %v2156 = vsel %vm361, %v2151, 0
    %2158 = vmatprep.subr.bf16.mxu0 0
    %2159 = vmatpush1.bf16.xpose.msra.mxu0 %v2156
    %2160 = vmatprep.subr.bf16.mxu0 0
    %2161 = vmatpush1.bf16.xpose.msra.mxu0 0
    %2162 = vmatprep.subr.bf16.mxu0 0
    %2163 = vmatpush1.bf16.xpose.msra.mxu0 0
    %2164 = vmatprep.subr.bf16.mxu0 0
    %2165 = vmatpush1.bf16.xpose.msra.mxu0 0
    %2166 = vmatprep.subr.bf16.mxu0 0
    %2167 = vmatpush1.bf16.xpose.msra.mxu0 0
    %2168 = vmatprep.subr.bf16.mxu0 0
    %2169 = vmatpush1.bf16.xpose.msra.mxu0 0
    %2170 = vmatprep.subr.bf16.mxu0 0
    %2171 = vmatpush1.bf16.xpose.msra.mxu0 0
    %2172 = vmatprep.subr.bf16.mxu0 0
    %2173 = vmatpush1.bf16.xpose.msra.mxu0 0
    %2174 = vmatprep.subr.bf16.mxu0 0
    %2175 = vmatpush1.bf16.xpose.msra.mxu0 0
    %2176 = vmatprep.subr.bf16.mxu0 0
    %2177 = vmatpush1.bf16.xpose.msra.mxu0 0
    %2178 = vmatprep.subr.bf16.mxu0 0
    %2179 = vmatpush1.bf16.xpose.msra.mxu0 0
    %2180 = vmatprep.subr.bf16.mxu0 0
    %2181 = vmatpush1.bf16.xpose.msra.mxu0 0
    %2182 = vmatprep.subr.bf16.mxu0 0
    %2183 = vmatpush1.bf16.xpose.msra.mxu0 0
    %2184 = vmatprep.subr.bf16.mxu0 0
    %2185 = vmatpush1.bf16.xpose.msra.mxu0 0
    %2186 = vmatprep.subr.bf16.mxu0 0
    %2187 = vmatpush1.bf16.xpose.msra.mxu0 0
    %2188 = vmatprep.subr.bf16.mxu0 0
    %2189 = vmatpush1.bf16.xpose.msra.mxu0 0
    %2190 = vmatprep.mubr.bf16.mxu0 0
    %2191 = vmatmul.mubr.bf16.gmra.mrb[0].mxu0 %v2153
    %v2192 = vpop.f32.mrb[0].mxu0
    %v2193 = vadd.f32 0.0, %v2192
    %v2194 = vpop.f32.mrb[0].mxu0
    %v2195 = vpop.f32.mrb[0].mxu0
    %v2196 = vadd.f32 0.0, %v2195
    %v2197 = vpop.f32.mrb[0].mxu0
    %2198 = vdwg.mxu0
    %2200 = vrot.lane.b32.xlu0 %v2044, 96
    %v2201 = vpop.permute.xlu0 %2200
    %v2203 = vsel %vm361, %v2044, 0
    %v2206 = vsel %vm361, %v2201, 0
    %2208 = vmatprep.subr.bf16.mxu0 0
    %2209 = vmatpush1.bf16.xpose.msra.mxu0 %v2206
    %2210 = vmatprep.subr.bf16.mxu0 0
    %2211 = vmatpush1.bf16.xpose.msra.mxu0 0
    %2212 = vmatprep.subr.bf16.mxu0 0
    %2213 = vmatpush1.bf16.xpose.msra.mxu0 0
    %2214 = vmatprep.subr.bf16.mxu0 0
    %2215 = vmatpush1.bf16.xpose.msra.mxu0 0
    %2216 = vmatprep.subr.bf16.mxu0 0
    %2217 = vmatpush1.bf16.xpose.msra.mxu0 0
    %2218 = vmatprep.subr.bf16.mxu0 0
    %2219 = vmatpush1.bf16.xpose.msra.mxu0 0
    %2220 = vmatprep.subr.bf16.mxu0 0
    %2221 = vmatpush1.bf16.xpose.msra.mxu0 0
    %2222 = vmatprep.subr.bf16.mxu0 0
    %2223 = vmatpush1.bf16.xpose.msra.mxu0 0
    %2224 = vmatprep.subr.bf16.mxu0 0
    %2225 = vmatpush1.bf16.xpose.msra.mxu0 0
    %2226 = vmatprep.subr.bf16.mxu0 0
    %2227 = vmatpush1.bf16.xpose.msra.mxu0 0
    %2228 = vmatprep.subr.bf16.mxu0 0
    %2229 = vmatpush1.bf16.xpose.msra.mxu0 0
    %2230 = vmatprep.subr.bf16.mxu0 0
    %2231 = vmatpush1.bf16.xpose.msra.mxu0 0
    %2232 = vmatprep.subr.bf16.mxu0 0
    %2233 = vmatpush1.bf16.xpose.msra.mxu0 0
    %2234 = vmatprep.subr.bf16.mxu0 0
    %2235 = vmatpush1.bf16.xpose.msra.mxu0 0
    %2236 = vmatprep.subr.bf16.mxu0 0
    %2237 = vmatpush1.bf16.xpose.msra.mxu0 0
    %2238 = vmatprep.subr.bf16.mxu0 0
    %2239 = vmatpush1.bf16.xpose.msra.mxu0 0
    %2240 = vmatprep.mubr.bf16.mxu0 0
    %2241 = vmatmul.mubr.bf16.gmra.mrb[0].mxu0 %v2203
    %v2242 = vpop.f32.mrb[0].mxu0
    %v2243 = vadd.f32 0.0, %v2242
    %v2244 = vpop.f32.mrb[0].mxu0
    %v2245 = vpop.f32.mrb[0].mxu0
    %v2246 = vadd.f32 0.0, %v2245
    %v2247 = vpop.f32.mrb[0].mxu0
    %2248 = vdwg.mxu0
    %2250 = vrot.lane.b32.xlu0 %v2045, 96
    %v2251 = vpop.permute.xlu0 %2250
    %v2253 = vsel %vm361, %v2045, 0
    %v2256 = vsel %vm361, %v2251, 0
    %2258 = vmatprep.subr.bf16.mxu0 0
    %2259 = vmatpush1.bf16.xpose.msra.mxu0 %v2256
    %2260 = vmatprep.subr.bf16.mxu0 0
    %2261 = vmatpush1.bf16.xpose.msra.mxu0 0
    %2262 = vmatprep.subr.bf16.mxu0 0
    %2263 = vmatpush1.bf16.xpose.msra.mxu0 0
    %2264 = vmatprep.subr.bf16.mxu0 0
    %2265 = vmatpush1.bf16.xpose.msra.mxu0 0
    %2266 = vmatprep.subr.bf16.mxu0 0
    %2267 = vmatpush1.bf16.xpose.msra.mxu0 0
    %2268 = vmatprep.subr.bf16.mxu0 0
    %2269 = vmatpush1.bf16.xpose.msra.mxu0 0
    %2270 = vmatprep.subr.bf16.mxu0 0
    %2271 = vmatpush1.bf16.xpose.msra.mxu0 0
    %2272 = vmatprep.subr.bf16.mxu0 0
    %2273 = vmatpush1.bf16.xpose.msra.mxu0 0
    %2274 = vmatprep.subr.bf16.mxu0 0
    %2275 = vmatpush1.bf16.xpose.msra.mxu0 0
    %2276 = vmatprep.subr.bf16.mxu0 0
    %2277 = vmatpush1.bf16.xpose.msra.mxu0 0
    %2278 = vmatprep.subr.bf16.mxu0 0
    %2279 = vmatpush1.bf16.xpose.msra.mxu0 0
    %2280 = vmatprep.subr.bf16.mxu0 0
    %2281 = vmatpush1.bf16.xpose.msra.mxu0 0
    %2282 = vmatprep.subr.bf16.mxu0 0
    %2283 = vmatpush1.bf16.xpose.msra.mxu0 0
    %2284 = vmatprep.subr.bf16.mxu0 0
    %2285 = vmatpush1.bf16.xpose.msra.mxu0 0
    %2286 = vmatprep.subr.bf16.mxu0 0
    %2287 = vmatpush1.bf16.xpose.msra.mxu0 0
    %2288 = vmatprep.subr.bf16.mxu0 0
    %2289 = vmatpush1.bf16.xpose.msra.mxu0 0
    %2290 = vmatprep.mubr.bf16.mxu0 0
    %2291 = vmatmul.mubr.bf16.gmra.mrb[0].mxu0 %v2253
    %v2292 = vpop.f32.mrb[0].mxu0
    %v2293 = vadd.f32 0.0, %v2292
    %v2294 = vpop.f32.mrb[0].mxu0
    %v2295 = vpop.f32.mrb[0].mxu0
    %v2296 = vadd.f32 0.0, %v2295
    %v2297 = vpop.f32.mrb[0].mxu0
    %2298 = vdwg.mxu0
    %2300 = vrot.lane.b32.xlu0 %v2046, 96
    %v2301 = vpop.permute.xlu0 %2300
    %v2303 = vsel %vm361, %v2046, 0
    %v2306 = vsel %vm361, %v2301, 0
    %2308 = vmatprep.subr.bf16.mxu0 0
    %2309 = vmatpush1.bf16.xpose.msra.mxu0 %v2306
    %2310 = vmatprep.subr.bf16.mxu0 0
    %2311 = vmatpush1.bf16.xpose.msra.mxu0 0
    %2312 = vmatprep.subr.bf16.mxu0 0
    %2313 = vmatpush1.bf16.xpose.msra.mxu0 0
    %2314 = vmatprep.subr.bf16.mxu0 0
    %2315 = vmatpush1.bf16.xpose.msra.mxu0 0
    %2316 = vmatprep.subr.bf16.mxu0 0
    %2317 = vmatpush1.bf16.xpose.msra.mxu0 0
    %2318 = vmatprep.subr.bf16.mxu0 0
    %2319 = vmatpush1.bf16.xpose.msra.mxu0 0
    %2320 = vmatprep.subr.bf16.mxu0 0
    %2321 = vmatpush1.bf16.xpose.msra.mxu0 0
    %2322 = vmatprep.subr.bf16.mxu0 0
    %2323 = vmatpush1.bf16.xpose.msra.mxu0 0
    %2324 = vmatprep.subr.bf16.mxu0 0
    %2325 = vmatpush1.bf16.xpose.msra.mxu0 0
    %2326 = vmatprep.subr.bf16.mxu0 0
    %2327 = vmatpush1.bf16.xpose.msra.mxu0 0
    %2328 = vmatprep.subr.bf16.mxu0 0
    %2329 = vmatpush1.bf16.xpose.msra.mxu0 0
    %2330 = vmatprep.subr.bf16.mxu0 0
    %2331 = vmatpush1.bf16.xpose.msra.mxu0 0
    %2332 = vmatprep.subr.bf16.mxu0 0
    %2333 = vmatpush1.bf16.xpose.msra.mxu0 0
    %2334 = vmatprep.subr.bf16.mxu0 0
    %2335 = vmatpush1.bf16.xpose.msra.mxu0 0
    %2336 = vmatprep.subr.bf16.mxu0 0
    %2337 = vmatpush1.bf16.xpose.msra.mxu0 0
    %2338 = vmatprep.subr.bf16.mxu0 0
    %2339 = vmatpush1.bf16.xpose.msra.mxu0 0
    %2340 = vmatprep.mubr.bf16.mxu0 0
    %2341 = vmatmul.mubr.bf16.gmra.mrb[0].mxu0 %v2303
    %v2342 = vpop.f32.mrb[0].mxu0
    %v2343 = vadd.f32 0.0, %v2342
    %v2344 = vpop.f32.mrb[0].mxu0
    %v2345 = vpop.f32.mrb[0].mxu0
    %v2346 = vadd.f32 0.0, %v2345
    %v2347 = vpop.f32.mrb[0].mxu0
    %2348 = vdwg.mxu0
    %2350 = vrot.lane.b32.xlu0 %v2047, 96
    %v2351 = vpop.permute.xlu0 %2350
    %v2353 = vsel %vm361, %v2047, 0
    %v2356 = vsel %vm361, %v2351, 0
    %2358 = vmatprep.subr.bf16.mxu0 0
    %2359 = vmatpush1.bf16.xpose.msra.mxu0 %v2356
    %2360 = vmatprep.subr.bf16.mxu0 0
    %2361 = vmatpush1.bf16.xpose.msra.mxu0 0
    %2362 = vmatprep.subr.bf16.mxu0 0
    %2363 = vmatpush1.bf16.xpose.msra.mxu0 0
    %2364 = vmatprep.subr.bf16.mxu0 0
    %2365 = vmatpush1.bf16.xpose.msra.mxu0 0
    %2366 = vmatprep.subr.bf16.mxu0 0
    %2367 = vmatpush1.bf16.xpose.msra.mxu0 0
    %2368 = vmatprep.subr.bf16.mxu0 0
    %2369 = vmatpush1.bf16.xpose.msra.mxu0 0
    %2370 = vmatprep.subr.bf16.mxu0 0
    %2371 = vmatpush1.bf16.xpose.msra.mxu0 0
    %2372 = vmatprep.subr.bf16.mxu0 0
    %2373 = vmatpush1.bf16.xpose.msra.mxu0 0
    %2374 = vmatprep.subr.bf16.mxu0 0
    %2375 = vmatpush1.bf16.xpose.msra.mxu0 0
    %2376 = vmatprep.subr.bf16.mxu0 0
    %2377 = vmatpush1.bf16.xpose.msra.mxu0 0
    %2378 = vmatprep.subr.bf16.mxu0 0
    %2379 = vmatpush1.bf16.xpose.msra.mxu0 0
    %2380 = vmatprep.subr.bf16.mxu0 0
    %2381 = vmatpush1.bf16.xpose.msra.mxu0 0
    %2382 = vmatprep.subr.bf16.mxu0 0
    %2383 = vmatpush1.bf16.xpose.msra.mxu0 0
    %2384 = vmatprep.subr.bf16.mxu0 0
    %2385 = vmatpush1.bf16.xpose.msra.mxu0 0
    %2386 = vmatprep.subr.bf16.mxu0 0
    %2387 = vmatpush1.bf16.xpose.msra.mxu0 0
    %2388 = vmatprep.subr.bf16.mxu0 0
    %2389 = vmatpush1.bf16.xpose.msra.mxu0 0
    %2390 = vmatprep.mubr.bf16.mxu0 0
    %2391 = vmatmul.mubr.bf16.gmra.mrb[0].mxu0 %v2353
    %v2392 = vpop.f32.mrb[0].mxu0
    %v2393 = vadd.f32 0.0, %v2392
    %v2394 = vpop.f32.mrb[0].mxu0
    %v2395 = vpop.f32.mrb[0].mxu0
    %v2396 = vadd.f32 0.0, %v2395
    %v2397 = vpop.f32.mrb[0].mxu0
    %2398 = vdwg.mxu0
    %2400 = vrot.lane.b32.xlu0 %v2048, 96
    %v2401 = vpop.permute.xlu0 %2400
    %v2403 = vsel %vm361, %v2048, 0
    %v2406 = vsel %vm361, %v2401, 0
    %2408 = vmatprep.subr.bf16.mxu0 0
    %2409 = vmatpush1.bf16.xpose.msra.mxu0 %v2406
    %2410 = vmatprep.subr.bf16.mxu0 0
    %2411 = vmatpush1.bf16.xpose.msra.mxu0 0
    %2412 = vmatprep.subr.bf16.mxu0 0
    %2413 = vmatpush1.bf16.xpose.msra.mxu0 0
    %2414 = vmatprep.subr.bf16.mxu0 0
    %2415 = vmatpush1.bf16.xpose.msra.mxu0 0
    %2416 = vmatprep.subr.bf16.mxu0 0
    %2417 = vmatpush1.bf16.xpose.msra.mxu0 0
    %2418 = vmatprep.subr.bf16.mxu0 0
    %2419 = vmatpush1.bf16.xpose.msra.mxu0 0
    %2420 = vmatprep.subr.bf16.mxu0 0
    %2421 = vmatpush1.bf16.xpose.msra.mxu0 0
    %2422 = vmatprep.subr.bf16.mxu0 0
    %2423 = vmatpush1.bf16.xpose.msra.mxu0 0
    %2424 = vmatprep.subr.bf16.mxu0 0
    %2425 = vmatpush1.bf16.xpose.msra.mxu0 0
    %2426 = vmatprep.subr.bf16.mxu0 0
    %2427 = vmatpush1.bf16.xpose.msra.mxu0 0
    %2428 = vmatprep.subr.bf16.mxu0 0
    %2429 = vmatpush1.bf16.xpose.msra.mxu0 0
    %2430 = vmatprep.subr.bf16.mxu0 0
    %2431 = vmatpush1.bf16.xpose.msra.mxu0 0
    %2432 = vmatprep.subr.bf16.mxu0 0
    %2433 = vmatpush1.bf16.xpose.msra.mxu0 0
    %2434 = vmatprep.subr.bf16.mxu0 0
    %2435 = vmatpush1.bf16.xpose.msra.mxu0 0
    %2436 = vmatprep.subr.bf16.mxu0 0
    %2437 = vmatpush1.bf16.xpose.msra.mxu0 0
    %2438 = vmatprep.subr.bf16.mxu0 0
    %2439 = vmatpush1.bf16.xpose.msra.mxu0 0
    %2440 = vmatprep.mubr.bf16.mxu0 0
    %2441 = vmatmul.mubr.bf16.gmra.mrb[0].mxu0 %v2403
    %v2442 = vpop.f32.mrb[0].mxu0
    %v2443 = vadd.f32 0.0, %v2442
    %v2444 = vpop.f32.mrb[0].mxu0
    %v2445 = vpop.f32.mrb[0].mxu0
    %v2446 = vadd.f32 0.0, %v2445
    %v2447 = vpop.f32.mrb[0].mxu0
    %2448 = vdwg.mxu0
    %v2449 = vsel %vm759, %v2093, -inf
    %2450 = vmax.xlane.f32.xlu0 %v2449
    %v2451 = vpop.xlane.xlu0 %2450
    %v2452 = vsel %vm759, %v2096, -inf
    %2453 = vmax.xlane.f32.xlu0 %v2452
    %v2454 = vpop.xlane.xlu0 %2453
    %v2455 = vsel %vm759, %v2143, -inf
    %2456 = vmax.xlane.f32.xlu0 %v2455
    %v2457 = vpop.xlane.xlu0 %2456
    %v2458 = vsel %vm759, %v2146, -inf
    %2459 = vmax.xlane.f32.xlu0 %v2458
    %v2460 = vpop.xlane.xlu0 %2459
    %v2461 = vsel %vm759, %v2193, -inf
    %2462 = vmax.xlane.f32.xlu0 %v2461
    %v2463 = vpop.xlane.xlu0 %2462
    %v2464 = vsel %vm759, %v2196, -inf
    %2465 = vmax.xlane.f32.xlu0 %v2464
    %v2466 = vpop.xlane.xlu0 %2465
    %v2467 = vsel %vm759, %v2243, -inf
    %2468 = vmax.xlane.f32.xlu0 %v2467
    %v2469 = vpop.xlane.xlu0 %2468
    %v2470 = vsel %vm759, %v2246, -inf
    %2471 = vmax.xlane.f32.xlu0 %v2470
    %v2472 = vpop.xlane.xlu0 %2471
    %v2473 = vsel %vm759, %v2293, -inf
    %2474 = vmax.xlane.f32.xlu0 %v2473
    %v2475 = vpop.xlane.xlu0 %2474
    %v2476 = vsel %vm759, %v2296, -inf
    %2477 = vmax.xlane.f32.xlu0 %v2476
    %v2478 = vpop.xlane.xlu0 %2477
    %v2479 = vsel %vm759, %v2343, -inf
    %2480 = vmax.xlane.f32.xlu0 %v2479
    %v2481 = vpop.xlane.xlu0 %2480
    %v2482 = vsel %vm759, %v2346, -inf
    %2483 = vmax.xlane.f32.xlu0 %v2482
    %v2484 = vpop.xlane.xlu0 %2483
    %v2485 = vsel %vm759, %v2393, -inf
    %2486 = vmax.xlane.f32.xlu0 %v2485
    %v2487 = vpop.xlane.xlu0 %2486
    %v2488 = vsel %vm759, %v2396, -inf
    %2489 = vmax.xlane.f32.xlu0 %v2488
    %v2490 = vpop.xlane.xlu0 %2489
    %v2491 = vsel %vm759, %v2443, -inf
    %2492 = vmax.xlane.f32.xlu0 %v2491
    %v2493 = vpop.xlane.xlu0 %2492
    %v2494 = vsel %vm759, %v2446, -inf
    %2495 = vmax.xlane.f32.xlu0 %v2494
    %v2496 = vpop.xlane.xlu0 %2495
    %v2497 = vsub.f32 %v2093, %v2451
    %v2498 = vsub.f32 %v2096, %v2454
    %v2499 = vsub.f32 %v2143, %v2457
    %v2500 = vsub.f32 %v2146, %v2460
    %v2501 = vsub.f32 %v2193, %v2463
    %v2502 = vsub.f32 %v2196, %v2466
    %v2503 = vsub.f32 %v2243, %v2469
    %v2504 = vsub.f32 %v2246, %v2472
    %v2505 = vsub.f32 %v2293, %v2475
    %v2506 = vsub.f32 %v2296, %v2478
    %v2507 = vsub.f32 %v2343, %v2481
    %v2508 = vsub.f32 %v2346, %v2484
    %v2509 = vsub.f32 %v2393, %v2487
    %v2510 = vsub.f32 %v2396, %v2490
    %v2511 = vsub.f32 %v2443, %v2493
    %v2512 = vsub.f32 %v2446, %v2496
    %v2513 = vmul.f32 %v2497, 1.442695
    %v2514 = vpow.pop %v2513
    %v2515 = vmul.f32 %v2498, 1.442695
    %v2516 = vpow.pop %v2515
    %v2517 = vmul.f32 %v2499, 1.442695
    %v2518 = vpow.pop %v2517
    %v2519 = vmul.f32 %v2500, 1.442695
    %v2520 = vpow.pop %v2519
    %v2521 = vmul.f32 %v2501, 1.442695
    %v2522 = vpow.pop %v2521
    %v2523 = vmul.f32 %v2502, 1.442695
    %v2524 = vpow.pop %v2523
    %v2525 = vmul.f32 %v2503, 1.442695
    %v2526 = vpow.pop %v2525
    %v2527 = vmul.f32 %v2504, 1.442695
    %v2528 = vpow.pop %v2527
    %v2529 = vmul.f32 %v2505, 1.442695
    %v2530 = vpow.pop %v2529
    %v2531 = vmul.f32 %v2506, 1.442695
    %v2532 = vpow.pop %v2531
    %v2533 = vmul.f32 %v2507, 1.442695
    %v2534 = vpow.pop %v2533
    %v2535 = vmul.f32 %v2508, 1.442695
    %v2536 = vpow.pop %v2535
    %v2537 = vmul.f32 %v2509, 1.442695
    %v2538 = vpow.pop %v2537
    %v2539 = vmul.f32 %v2510, 1.442695
    %v2540 = vpow.pop %v2539
    %v2541 = vmul.f32 %v2511, 1.442695
    %v2542 = vpow.pop %v2541
    %v2543 = vmul.f32 %v2512, 1.442695
    %v2544 = vpow.pop %v2543
    %v2545 = vsel %vm759, %v2514, 0.0
    %2546 = vadd.xlane.f32.xlu0 %v2545
    %v2547 = vpop.xlane.xlu0 %2546
    %v2548 = vsel %vm759, %v2516, 0.0
    %2549 = vadd.xlane.f32.xlu0 %v2548
    %v2550 = vpop.xlane.xlu0 %2549
    %v2551 = vsel %vm759, %v2518, 0.0
    %2552 = vadd.xlane.f32.xlu0 %v2551
    %v2553 = vpop.xlane.xlu0 %2552
    %v2554 = vsel %vm759, %v2520, 0.0
    %2555 = vadd.xlane.f32.xlu0 %v2554
    %v2556 = vpop.xlane.xlu0 %2555
    %v2557 = vsel %vm759, %v2522, 0.0
    %2558 = vadd.xlane.f32.xlu0 %v2557
    %v2559 = vpop.xlane.xlu0 %2558
    %v2560 = vsel %vm759, %v2524, 0.0
    %2561 = vadd.xlane.f32.xlu0 %v2560
    %v2562 = vpop.xlane.xlu0 %2561
    %v2563 = vsel %vm759, %v2526, 0.0
    %2564 = vadd.xlane.f32.xlu0 %v2563
    %v2565 = vpop.xlane.xlu0 %2564
    %v2566 = vsel %vm759, %v2528, 0.0
    %2567 = vadd.xlane.f32.xlu0 %v2566
    %v2568 = vpop.xlane.xlu0 %2567
    %v2569 = vsel %vm759, %v2530, 0.0
    %2570 = vadd.xlane.f32.xlu0 %v2569
    %v2571 = vpop.xlane.xlu0 %2570
    %v2572 = vsel %vm759, %v2532, 0.0
    %2573 = vadd.xlane.f32.xlu0 %v2572
    %v2574 = vpop.xlane.xlu0 %2573
    %v2575 = vsel %vm759, %v2534, 0.0
    %2576 = vadd.xlane.f32.xlu0 %v2575
    %v2577 = vpop.xlane.xlu0 %2576
    %v2578 = vsel %vm759, %v2536, 0.0
    %2579 = vadd.xlane.f32.xlu0 %v2578
    %v2580 = vpop.xlane.xlu0 %2579
    %v2581 = vsel %vm759, %v2538, 0.0
    %2582 = vadd.xlane.f32.xlu0 %v2581
    %v2583 = vpop.xlane.xlu0 %2582
    %v2584 = vsel %vm759, %v2540, 0.0
    %2585 = vadd.xlane.f32.xlu0 %v2584
    %v2586 = vpop.xlane.xlu0 %2585
    %v2587 = vsel %vm759, %v2542, 0.0
    %2588 = vadd.xlane.f32.xlu0 %v2587
    %v2589 = vpop.xlane.xlu0 %2588
    %v2590 = vsel %vm759, %v2544, 0.0
    %2591 = vadd.xlane.f32.xlu0 %v2590
    %v2592 = vpop.xlane.xlu0 %2591
    %v2593 = vrcp.pop %v2547
    %v2594 = vrcp.pop %v2550
    %v2595 = vrcp.pop %v2553
    %v2596 = vrcp.pop %v2556
    %v2597 = vrcp.pop %v2559
    %v2598 = vrcp.pop %v2562
    %v2599 = vrcp.pop %v2565
    %v2600 = vrcp.pop %v2568
    %v2601 = vrcp.pop %v2571
    %v2602 = vrcp.pop %v2574
    %v2603 = vrcp.pop %v2577
    %v2604 = vrcp.pop %v2580
    %v2605 = vrcp.pop %v2583
    %v2606 = vrcp.pop %v2586
    %v2607 = vrcp.pop %v2589
    %v2608 = vrcp.pop %v2592
    %v2609 = vmul.f32 %v2514, %v2593
    %v2610 = vmul.f32 %v2516, %v2594
    %v2611 = vmul.f32 %v2518, %v2595
    %v2612 = vmul.f32 %v2520, %v2596
    %v2613 = vmul.f32 %v2522, %v2597
    %v2614 = vmul.f32 %v2524, %v2598
    %v2615 = vmul.f32 %v2526, %v2599
    %v2616 = vmul.f32 %v2528, %v2600
    %v2617 = vmul.f32 %v2530, %v2601
    %v2618 = vmul.f32 %v2532, %v2602
    %v2619 = vmul.f32 %v2534, %v2603
    %v2620 = vmul.f32 %v2536, %v2604
    %v2621 = vmul.f32 %v2538, %v2605
    %v2622 = vmul.f32 %v2540, %v2606
    %v2623 = vmul.f32 %v2542, %v2607
    %v2624 = vmul.f32 %v2544, %v2608
    %v2625 = vpack.c.bf16 %v2610, %v2609
    %v2626 = vpack.c.bf16 %v2612, %v2611
    %v2627 = vpack.c.bf16 %v2614, %v2613
    %v2628 = vpack.c.bf16 %v2616, %v2615
    %v2629 = vpack.c.bf16 %v2618, %v2617
    %v2630 = vpack.c.bf16 %v2620, %v2619
    %v2631 = vpack.c.bf16 %v2622, %v2621
    %v2632 = vpack.c.bf16 %v2624, %v2623
    %2633 = vrot.lane.b32.xlu0 %v2041, 64
    %v2634 = vpop.permute.xlu0 %2633
    %v2637 = vsel %vm759, %v2625, 0
    %2639 = vmatprep.subr.bf16.mxu0 0
    %2640 = vmatpush1.bf16.msra.mxu0 %v2634
    %2641 = vmatprep.subr.bf16.mxu0 0
    %2642 = vmatpush1.bf16.msra.mxu0 0
    %2643 = vmatprep.subr.bf16.mxu0 0
    %2644 = vmatpush1.bf16.msra.mxu0 0
    %2645 = vmatprep.subr.bf16.mxu0 0
    %2646 = vmatpush1.bf16.msra.mxu0 0
    %2647 = vmatprep.subr.bf16.mxu0 0
    %2648 = vmatpush1.bf16.msra.mxu0 0
    %2649 = vmatprep.subr.bf16.mxu0 0
    %2650 = vmatpush1.bf16.msra.mxu0 0
    %2651 = vmatprep.subr.bf16.mxu0 0
    %2652 = vmatpush1.bf16.msra.mxu0 0
    %2653 = vmatprep.subr.bf16.mxu0 0
    %2654 = vmatpush1.bf16.msra.mxu0 0
    %2655 = vmatprep.subr.bf16.mxu0 0
    %2656 = vmatpush1.bf16.msra.mxu0 0
    %2657 = vmatprep.subr.bf16.mxu0 0
    %2658 = vmatpush1.bf16.msra.mxu0 0
    %2659 = vmatprep.subr.bf16.mxu0 0
    %2660 = vmatpush1.bf16.msra.mxu0 0
    %2661 = vmatprep.subr.bf16.mxu0 0
    %2662 = vmatpush1.bf16.msra.mxu0 0
    %2663 = vmatprep.subr.bf16.mxu0 0
    %2664 = vmatpush1.bf16.msra.mxu0 0
    %2665 = vmatprep.subr.bf16.mxu0 0
    %2666 = vmatpush1.bf16.msra.mxu0 0
    %2667 = vmatprep.subr.bf16.mxu0 0
    %2668 = vmatpush1.bf16.msra.mxu0 0
    %2669 = vmatprep.subr.bf16.mxu0 0
    %2670 = vmatpush1.bf16.msra.mxu0 0
    %2671 = vmatprep.mubr.bf16.mxu0 0
    %2672 = vmatmul.mubr.bf16.gmra.mrb[0].mxu0 %v2637
    %v2673 = vpop.f32.mrb[0].mxu0
    %v2674 = vadd.f32 0.0, %v2673
    %v2675 = vpop.f32.mrb[0].mxu0
    %v2676 = vpop.f32.mrb[0].mxu0
    %v2677 = vadd.f32 0.0, %v2676
    %v2678 = vpop.f32.mrb[0].mxu0
    %2679 = vdwg.mxu0
    %2680 = vrot.lane.b32.xlu0 %v2042, 64
    %v2681 = vpop.permute.xlu0 %2680
    %v2684 = vsel %vm759, %v2626, 0
    %2686 = vmatprep.subr.bf16.mxu0 0
    %2687 = vmatpush1.bf16.msra.mxu0 %v2681
    %2688 = vmatprep.subr.bf16.mxu0 0
    %2689 = vmatpush1.bf16.msra.mxu0 0
    %2690 = vmatprep.subr.bf16.mxu0 0
    %2691 = vmatpush1.bf16.msra.mxu0 0
    %2692 = vmatprep.subr.bf16.mxu0 0
    %2693 = vmatpush1.bf16.msra.mxu0 0
    %2694 = vmatprep.subr.bf16.mxu0 0
    %2695 = vmatpush1.bf16.msra.mxu0 0
    %2696 = vmatprep.subr.bf16.mxu0 0
    %2697 = vmatpush1.bf16.msra.mxu0 0
    %2698 = vmatprep.subr.bf16.mxu0 0
    %2699 = vmatpush1.bf16.msra.mxu0 0
    %2700 = vmatprep.subr.bf16.mxu0 0
    %2701 = vmatpush1.bf16.msra.mxu0 0
    %2702 = vmatprep.subr.bf16.mxu0 0
    %2703 = vmatpush1.bf16.msra.mxu0 0
    %2704 = vmatprep.subr.bf16.mxu0 0
    %2705 = vmatpush1.bf16.msra.mxu0 0
    %2706 = vmatprep.subr.bf16.mxu0 0
    %2707 = vmatpush1.bf16.msra.mxu0 0
    %2708 = vmatprep.subr.bf16.mxu0 0
    %2709 = vmatpush1.bf16.msra.mxu0 0
    %2710 = vmatprep.subr.bf16.mxu0 0
    %2711 = vmatpush1.bf16.msra.mxu0 0
    %2712 = vmatprep.subr.bf16.mxu0 0
    %2713 = vmatpush1.bf16.msra.mxu0 0
    %2714 = vmatprep.subr.bf16.mxu0 0
    %2715 = vmatpush1.bf16.msra.mxu0 0
    %2716 = vmatprep.subr.bf16.mxu0 0
    %2717 = vmatpush1.bf16.msra.mxu0 0
    %2718 = vmatprep.mubr.bf16.mxu0 0
    %2719 = vmatmul.mubr.bf16.gmra.mrb[0].mxu0 %v2684
    %v2720 = vpop.f32.mrb[0].mxu0
    %v2721 = vadd.f32 0.0, %v2720
    %v2722 = vpop.f32.mrb[0].mxu0
    %v2723 = vpop.f32.mrb[0].mxu0
    %v2724 = vadd.f32 0.0, %v2723
    %v2725 = vpop.f32.mrb[0].mxu0
    %2726 = vdwg.mxu0
    %2727 = vrot.lane.b32.xlu0 %v2043, 64
    %v2728 = vpop.permute.xlu0 %2727
    %v2731 = vsel %vm759, %v2627, 0
    %2733 = vmatprep.subr.bf16.mxu0 0
    %2734 = vmatpush1.bf16.msra.mxu0 %v2728
    %2735 = vmatprep.subr.bf16.mxu0 0
    %2736 = vmatpush1.bf16.msra.mxu0 0
    %2737 = vmatprep.subr.bf16.mxu0 0
    %2738 = vmatpush1.bf16.msra.mxu0 0
    %2739 = vmatprep.subr.bf16.mxu0 0
    %2740 = vmatpush1.bf16.msra.mxu0 0
    %2741 = vmatprep.subr.bf16.mxu0 0
    %2742 = vmatpush1.bf16.msra.mxu0 0
    %2743 = vmatprep.subr.bf16.mxu0 0
    %2744 = vmatpush1.bf16.msra.mxu0 0
    %2745 = vmatprep.subr.bf16.mxu0 0
    %2746 = vmatpush1.bf16.msra.mxu0 0
    %2747 = vmatprep.subr.bf16.mxu0 0
    %2748 = vmatpush1.bf16.msra.mxu0 0
    %2749 = vmatprep.subr.bf16.mxu0 0
    %2750 = vmatpush1.bf16.msra.mxu0 0
    %2751 = vmatprep.subr.bf16.mxu0 0
    %2752 = vmatpush1.bf16.msra.mxu0 0
    %2753 = vmatprep.subr.bf16.mxu0 0
    %2754 = vmatpush1.bf16.msra.mxu0 0
    %2755 = vmatprep.subr.bf16.mxu0 0
    %2756 = vmatpush1.bf16.msra.mxu0 0
    %2757 = vmatprep.subr.bf16.mxu0 0
    %2758 = vmatpush1.bf16.msra.mxu0 0
    %2759 = vmatprep.subr.bf16.mxu0 0
    %2760 = vmatpush1.bf16.msra.mxu0 0
    %2761 = vmatprep.subr.bf16.mxu0 0
    %2762 = vmatpush1.bf16.msra.mxu0 0
    %2763 = vmatprep.subr.bf16.mxu0 0
    %2764 = vmatpush1.bf16.msra.mxu0 0
    %2765 = vmatprep.mubr.bf16.mxu0 0
    %2766 = vmatmul.mubr.bf16.gmra.mrb[0].mxu0 %v2731
    %v2767 = vpop.f32.mrb[0].mxu0
    %v2768 = vadd.f32 0.0, %v2767
    %v2769 = vpop.f32.mrb[0].mxu0
    %v2770 = vpop.f32.mrb[0].mxu0
    %v2771 = vadd.f32 0.0, %v2770
    %v2772 = vpop.f32.mrb[0].mxu0
    %2773 = vdwg.mxu0
    %2774 = vrot.lane.b32.xlu0 %v2044, 64
    %v2775 = vpop.permute.xlu0 %2774
    %v2778 = vsel %vm759, %v2628, 0
    %2780 = vmatprep.subr.bf16.mxu0 0
    %2781 = vmatpush1.bf16.msra.mxu0 %v2775
    %2782 = vmatprep.subr.bf16.mxu0 0
    %2783 = vmatpush1.bf16.msra.mxu0 0
    %2784 = vmatprep.subr.bf16.mxu0 0
    %2785 = vmatpush1.bf16.msra.mxu0 0
    %2786 = vmatprep.subr.bf16.mxu0 0
    %2787 = vmatpush1.bf16.msra.mxu0 0
    %2788 = vmatprep.subr.bf16.mxu0 0
    %2789 = vmatpush1.bf16.msra.mxu0 0
    %2790 = vmatprep.subr.bf16.mxu0 0
    %2791 = vmatpush1.bf16.msra.mxu0 0
    %2792 = vmatprep.subr.bf16.mxu0 0
    %2793 = vmatpush1.bf16.msra.mxu0 0
    %2794 = vmatprep.subr.bf16.mxu0 0
    %2795 = vmatpush1.bf16.msra.mxu0 0
    %2796 = vmatprep.subr.bf16.mxu0 0
    %2797 = vmatpush1.bf16.msra.mxu0 0
    %2798 = vmatprep.subr.bf16.mxu0 0
    %2799 = vmatpush1.bf16.msra.mxu0 0
    %2800 = vmatprep.subr.bf16.mxu0 0
    %2801 = vmatpush1.bf16.msra.mxu0 0
    %2802 = vmatprep.subr.bf16.mxu0 0
    %2803 = vmatpush1.bf16.msra.mxu0 0
    %2804 = vmatprep.subr.bf16.mxu0 0
    %2805 = vmatpush1.bf16.msra.mxu0 0
    %2806 = vmatprep.subr.bf16.mxu0 0
    %2807 = vmatpush1.bf16.msra.mxu0 0
    %2808 = vmatprep.subr.bf16.mxu0 0
    %2809 = vmatpush1.bf16.msra.mxu0 0
    %2810 = vmatprep.subr.bf16.mxu0 0
    %2811 = vmatpush1.bf16.msra.mxu0 0
    %2812 = vmatprep.mubr.bf16.mxu0 0
    %2813 = vmatmul.mubr.bf16.gmra.mrb[0].mxu0 %v2778
    %v2814 = vpop.f32.mrb[0].mxu0
    %v2815 = vadd.f32 0.0, %v2814
    %v2816 = vpop.f32.mrb[0].mxu0
    %v2817 = vpop.f32.mrb[0].mxu0
    %v2818 = vadd.f32 0.0, %v2817
    %v2819 = vpop.f32.mrb[0].mxu0
    %2820 = vdwg.mxu0
    %2821 = vrot.lane.b32.xlu0 %v2045, 64
    %v2822 = vpop.permute.xlu0 %2821
    %v2825 = vsel %vm759, %v2629, 0
    %2827 = vmatprep.subr.bf16.mxu0 0
    %2828 = vmatpush1.bf16.msra.mxu0 %v2822
    %2829 = vmatprep.subr.bf16.mxu0 0
    %2830 = vmatpush1.bf16.msra.mxu0 0
    %2831 = vmatprep.subr.bf16.mxu0 0
    %2832 = vmatpush1.bf16.msra.mxu0 0
    %2833 = vmatprep.subr.bf16.mxu0 0
    %2834 = vmatpush1.bf16.msra.mxu0 0
    %2835 = vmatprep.subr.bf16.mxu0 0
    %2836 = vmatpush1.bf16.msra.mxu0 0
    %2837 = vmatprep.subr.bf16.mxu0 0
    %2838 = vmatpush1.bf16.msra.mxu0 0
    %2839 = vmatprep.subr.bf16.mxu0 0
    %2840 = vmatpush1.bf16.msra.mxu0 0
    %2841 = vmatprep.subr.bf16.mxu0 0
    %2842 = vmatpush1.bf16.msra.mxu0 0
    %2843 = vmatprep.subr.bf16.mxu0 0
    %2844 = vmatpush1.bf16.msra.mxu0 0
    %2845 = vmatprep.subr.bf16.mxu0 0
    %2846 = vmatpush1.bf16.msra.mxu0 0
    %2847 = vmatprep.subr.bf16.mxu0 0
    %2848 = vmatpush1.bf16.msra.mxu0 0
    %2849 = vmatprep.subr.bf16.mxu0 0
    %2850 = vmatpush1.bf16.msra.mxu0 0
    %2851 = vmatprep.subr.bf16.mxu0 0
    %2852 = vmatpush1.bf16.msra.mxu0 0
    %2853 = vmatprep.subr.bf16.mxu0 0
    %2854 = vmatpush1.bf16.msra.mxu0 0
    %2855 = vmatprep.subr.bf16.mxu0 0
    %2856 = vmatpush1.bf16.msra.mxu0 0
    %2857 = vmatprep.subr.bf16.mxu0 0
    %2858 = vmatpush1.bf16.msra.mxu0 0
    %2859 = vmatprep.mubr.bf16.mxu0 0
    %2860 = vmatmul.mubr.bf16.gmra.mrb[0].mxu0 %v2825
    %v2861 = vpop.f32.mrb[0].mxu0
    %v2862 = vadd.f32 0.0, %v2861
    %v2863 = vpop.f32.mrb[0].mxu0
    %v2864 = vpop.f32.mrb[0].mxu0
    %v2865 = vadd.f32 0.0, %v2864
    %v2866 = vpop.f32.mrb[0].mxu0
    %2867 = vdwg.mxu0
    %2868 = vrot.lane.b32.xlu0 %v2046, 64
    %v2869 = vpop.permute.xlu0 %2868
    %v2872 = vsel %vm759, %v2630, 0
    %2874 = vmatprep.subr.bf16.mxu0 0
    %2875 = vmatpush1.bf16.msra.mxu0 %v2869
    %2876 = vmatprep.subr.bf16.mxu0 0
    %2877 = vmatpush1.bf16.msra.mxu0 0
    %2878 = vmatprep.subr.bf16.mxu0 0
    %2879 = vmatpush1.bf16.msra.mxu0 0
    %2880 = vmatprep.subr.bf16.mxu0 0
    %2881 = vmatpush1.bf16.msra.mxu0 0
    %2882 = vmatprep.subr.bf16.mxu0 0
    %2883 = vmatpush1.bf16.msra.mxu0 0
    %2884 = vmatprep.subr.bf16.mxu0 0
    %2885 = vmatpush1.bf16.msra.mxu0 0
    %2886 = vmatprep.subr.bf16.mxu0 0
    %2887 = vmatpush1.bf16.msra.mxu0 0
    %2888 = vmatprep.subr.bf16.mxu0 0
    %2889 = vmatpush1.bf16.msra.mxu0 0
    %2890 = vmatprep.subr.bf16.mxu0 0
    %2891 = vmatpush1.bf16.msra.mxu0 0
    %2892 = vmatprep.subr.bf16.mxu0 0
    %2893 = vmatpush1.bf16.msra.mxu0 0
    %2894 = vmatprep.subr.bf16.mxu0 0
    %2895 = vmatpush1.bf16.msra.mxu0 0
    %2896 = vmatprep.subr.bf16.mxu0 0
    %2897 = vmatpush1.bf16.msra.mxu0 0
    %2898 = vmatprep.subr.bf16.mxu0 0
    %2899 = vmatpush1.bf16.msra.mxu0 0
    %2900 = vmatprep.subr.bf16.mxu0 0
    %2901 = vmatpush1.bf16.msra.mxu0 0
    %2902 = vmatprep.subr.bf16.mxu0 0
    %2903 = vmatpush1.bf16.msra.mxu0 0
    %2904 = vmatprep.subr.bf16.mxu0 0
    %2905 = vmatpush1.bf16.msra.mxu0 0
    %2906 = vmatprep.mubr.bf16.mxu0 0
    %2907 = vmatmul.mubr.bf16.gmra.mrb[0].mxu0 %v2872
    %v2908 = vpop.f32.mrb[0].mxu0
    %v2909 = vadd.f32 0.0, %v2908
    %v2910 = vpop.f32.mrb[0].mxu0
    %v2911 = vpop.f32.mrb[0].mxu0
    %v2912 = vadd.f32 0.0, %v2911
    %v2913 = vpop.f32.mrb[0].mxu0
    %2914 = vdwg.mxu0
    %2915 = vrot.lane.b32.xlu0 %v2047, 64
    %v2916 = vpop.permute.xlu0 %2915
    %v2919 = vsel %vm759, %v2631, 0
    %2921 = vmatprep.subr.bf16.mxu0 0
    %2922 = vmatpush1.bf16.msra.mxu0 %v2916
    %2923 = vmatprep.subr.bf16.mxu0 0
    %2924 = vmatpush1.bf16.msra.mxu0 0
    %2925 = vmatprep.subr.bf16.mxu0 0
    %2926 = vmatpush1.bf16.msra.mxu0 0
    %2927 = vmatprep.subr.bf16.mxu0 0
    %2928 = vmatpush1.bf16.msra.mxu0 0
    %2929 = vmatprep.subr.bf16.mxu0 0
    %2930 = vmatpush1.bf16.msra.mxu0 0
    %2931 = vmatprep.subr.bf16.mxu0 0
    %2932 = vmatpush1.bf16.msra.mxu0 0
    %2933 = vmatprep.subr.bf16.mxu0 0
    %2934 = vmatpush1.bf16.msra.mxu0 0
    %2935 = vmatprep.subr.bf16.mxu0 0
    %2936 = vmatpush1.bf16.msra.mxu0 0
    %2937 = vmatprep.subr.bf16.mxu0 0
    %2938 = vmatpush1.bf16.msra.mxu0 0
    %2939 = vmatprep.subr.bf16.mxu0 0
    %2940 = vmatpush1.bf16.msra.mxu0 0
    %2941 = vmatprep.subr.bf16.mxu0 0
    %2942 = vmatpush1.bf16.msra.mxu0 0
    %2943 = vmatprep.subr.bf16.mxu0 0
    %2944 = vmatpush1.bf16.msra.mxu0 0
    %2945 = vmatprep.subr.bf16.mxu0 0
    %2946 = vmatpush1.bf16.msra.mxu0 0
    %2947 = vmatprep.subr.bf16.mxu0 0
    %2948 = vmatpush1.bf16.msra.mxu0 0
    %2949 = vmatprep.subr.bf16.mxu0 0
    %2950 = vmatpush1.bf16.msra.mxu0 0
    %2951 = vmatprep.subr.bf16.mxu0 0
    %2952 = vmatpush1.bf16.msra.mxu0 0
    %2953 = vmatprep.mubr.bf16.mxu0 0
    %2954 = vmatmul.mubr.bf16.gmra.mrb[0].mxu0 %v2919
    %v2955 = vpop.f32.mrb[0].mxu0
    %v2956 = vadd.f32 0.0, %v2955
    %v2957 = vpop.f32.mrb[0].mxu0
    %v2958 = vpop.f32.mrb[0].mxu0
    %v2959 = vadd.f32 0.0, %v2958
    %v2960 = vpop.f32.mrb[0].mxu0
    %2961 = vdwg.mxu0
    %2962 = vrot.lane.b32.xlu0 %v2048, 64
    %v2963 = vpop.permute.xlu0 %2962
    %v2966 = vsel %vm759, %v2632, 0
    %2968 = vmatprep.subr.bf16.mxu0 0
    %2969 = vmatpush1.bf16.msra.mxu0 %v2963
    %2970 = vmatprep.subr.bf16.mxu0 0
    %2971 = vmatpush1.bf16.msra.mxu0 0
    %2972 = vmatprep.subr.bf16.mxu0 0
    %2973 = vmatpush1.bf16.msra.mxu0 0
    %2974 = vmatprep.subr.bf16.mxu0 0
    %2975 = vmatpush1.bf16.msra.mxu0 0
    %2976 = vmatprep.subr.bf16.mxu0 0
    %2977 = vmatpush1.bf16.msra.mxu0 0
    %2978 = vmatprep.subr.bf16.mxu0 0
    %2979 = vmatpush1.bf16.msra.mxu0 0
    %2980 = vmatprep.subr.bf16.mxu0 0
    %2981 = vmatpush1.bf16.msra.mxu0 0
    %2982 = vmatprep.subr.bf16.mxu0 0
    %2983 = vmatpush1.bf16.msra.mxu0 0
    %2984 = vmatprep.subr.bf16.mxu0 0
    %2985 = vmatpush1.bf16.msra.mxu0 0
    %2986 = vmatprep.subr.bf16.mxu0 0
    %2987 = vmatpush1.bf16.msra.mxu0 0
    %2988 = vmatprep.subr.bf16.mxu0 0
    %2989 = vmatpush1.bf16.msra.mxu0 0
    %2990 = vmatprep.subr.bf16.mxu0 0
    %2991 = vmatpush1.bf16.msra.mxu0 0
    %2992 = vmatprep.subr.bf16.mxu0 0
    %2993 = vmatpush1.bf16.msra.mxu0 0
    %2994 = vmatprep.subr.bf16.mxu0 0
    %2995 = vmatpush1.bf16.msra.mxu0 0
    %2996 = vmatprep.subr.bf16.mxu0 0
    %2997 = vmatpush1.bf16.msra.mxu0 0
    %2998 = vmatprep.subr.bf16.mxu0 0
    %2999 = vmatpush1.bf16.msra.mxu0 0
    %3000 = vmatprep.mubr.bf16.mxu0 0
    %3001 = vmatmul.mubr.bf16.gmra.mrb[0].mxu0 %v2966
    %v3002 = vpop.f32.mrb[0].mxu0
    %v3003 = vadd.f32 0.0, %v3002
    %v3004 = vpop.f32.mrb[0].mxu0
    %v3005 = vpop.f32.mrb[0].mxu0
    %v3006 = vadd.f32 0.0, %v3005
    %v3007 = vpop.f32.mrb[0].mxu0
    %3008 = vdwg.mxu0
    %3013 = vrot.lane.b32.xlu0 %v2768, 8
    %v3014 = vpop.permute.xlu0 %3013
    %3015 = vrot.lane.b32.xlu0 %v2771, 8
    %v3016 = vpop.permute.xlu0 %3015
    %3017 = vrot.lane.b32.xlu0 %v2815, 8
    %v3018 = vpop.permute.xlu0 %3017
    %3019 = vrot.lane.b32.xlu0 %v2818, 8
    %v3020 = vpop.permute.xlu0 %3019
    %3029 = vrot.lane.b32.xlu0 %v2862, 16
    %v3030 = vpop.permute.xlu0 %3029
    %3031 = vrot.lane.b32.xlu0 %v2865, 16
    %v3032 = vpop.permute.xlu0 %3031
    %3033 = vrot.lane.b32.xlu0 %v2909, 16
    %v3034 = vpop.permute.xlu0 %3033
    %3035 = vrot.lane.b32.xlu0 %v2912, 16
    %v3036 = vpop.permute.xlu0 %3035
    %3045 = vrot.lane.b32.xlu0 %v2956, 24
    %v3046 = vpop.permute.xlu0 %3045
    %3047 = vrot.lane.b32.xlu0 %v2959, 24
    %v3048 = vpop.permute.xlu0 %3047
    %3049 = vrot.lane.b32.xlu0 %v3003, 24
    %v3050 = vpop.permute.xlu0 %3049
    %3051 = vrot.lane.b32.xlu0 %v3006, 24
    %v3052 = vpop.permute.xlu0 %3051
    %v3057 = vsel %vm361, %v2674, %v3014
    %v3058 = vsel %vm361, %v2677, %v3016
    %v3059 = vsel %vm361, %v2721, %v3018
    %v3060 = vsel %vm361, %v2724, %v3020
    %v3061 = vsel %vm759, %v3057, %v3030
    %v3062 = vsel %vm759, %v3058, %v3032
    %v3063 = vsel %vm759, %v3059, %v3034
    %v3064 = vsel %vm759, %v3060, %v3036
    %v3065 = vsel %vm1376, %v3061, %v3046
    %v3066 = vsel %vm1376, %v3062, %v3048
    %v3067 = vsel %vm1376, %v3063, %v3050
    %v3068 = vsel %vm1376, %v3064, %v3052
    %v3069 = vpack.c.bf16 %v3066, %v3065
    %v3070 = vpack.c.bf16 %v3068, %v3067
    %v3071 = vlaneseq
    %v3072 = vshrl.u32 %v3071, 7
    %v3073 = vsub.s32 0, %v3072
    %v3074 = vrot.slane %v1854, %v3073
    %v3079 = vunpack.c.l.b16 %v1826
    %v3080 = vunpack.c.l.b16 %v1827
    %v3081 = vunpack.c.l.b16 %v1828
    %v3082 = vunpack.c.l.b16 %v1829
    %v3083 = vpack.c.b16 %v3080, %v3079
    %v3084 = vpack.c.b16 %v3082, %v3081
    %v3088 = vsel %vm165, %v3069, 0
    %v3091 = vsel %vm165, %v3070, 0
    %3093 = vmatprep.subr.bf16.mxu0 0
    %3094 = vmatpush1.bf16.msra.mxu0 %v3083
    %3095 = vmatprep.subr.bf16.mxu0 0
    %3096 = vmatpush1.bf16.msra.mxu0 %v3084
    %3097 = vmatprep.subr.bf16.mxu0 0
    %3098 = vmatpush1.bf16.msra.mxu0 0
    %3099 = vmatprep.subr.bf16.mxu0 0
    %3100 = vmatpush1.bf16.msra.mxu0 0
    %3101 = vmatprep.subr.bf16.mxu0 0
    %3102 = vmatpush1.bf16.msra.mxu0 0
    %3103 = vmatprep.subr.bf16.mxu0 0
    %3104 = vmatpush1.bf16.msra.mxu0 0
    %3105 = vmatprep.subr.bf16.mxu0 0
    %3106 = vmatpush1.bf16.msra.mxu0 0
    %3107 = vmatprep.subr.bf16.mxu0 0
    %3108 = vmatpush1.bf16.msra.mxu0 0
    %3109 = vmatprep.subr.bf16.mxu0 0
    %3110 = vmatpush1.bf16.msra.mxu0 0
    %3111 = vmatprep.subr.bf16.mxu0 0
    %3112 = vmatpush1.bf16.msra.mxu0 0
    %3113 = vmatprep.subr.bf16.mxu0 0
    %3114 = vmatpush1.bf16.msra.mxu0 0
    %3115 = vmatprep.subr.bf16.mxu0 0
    %3116 = vmatpush1.bf16.msra.mxu0 0
    %3117 = vmatprep.subr.bf16.mxu0 0
    %3118 = vmatpush1.bf16.msra.mxu0 0
    %3119 = vmatprep.subr.bf16.mxu0 0
    %3120 = vmatpush1.bf16.msra.mxu0 0
    %3121 = vmatprep.subr.bf16.mxu0 0
    %3122 = vmatpush1.bf16.msra.mxu0 0
    %3123 = vmatprep.subr.bf16.mxu0 0
    %3124 = vmatpush1.bf16.msra.mxu0 0
    %3125 = vmatprep.mubr.bf16.mxu0 0
    %3126 = vmatmul.mubr.bf16.gmra.mrb[0].mxu0 %v3088
    %v3127 = vpop.f32.mrb[0].mxu0
    %v3128 = vadd.f32 %v3074, %v3127
    %v3129 = vpop.f32.mrb[0].mxu0
    %v3130 = vpop.f32.mrb[0].mxu0
    %v3131 = vadd.f32 %v3074, %v3130
    %v3132 = vpop.f32.mrb[0].mxu0
    %3133 = vmatprep.mubr.bf16.mxu0 0
    %3134 = vmatmul.mubr.bf16.gmra.mrb[0].mxu0 %v3091
    %v3135 = vpop.f32.mrb[0].mxu0
    %v3136 = vadd.f32 %v3074, %v3135
    %v3137 = vpop.f32.mrb[0].mxu0
    %v3138 = vpop.f32.mrb[0].mxu0
    %v3139 = vadd.f32 %v3074, %v3138
    %v3140 = vpop.f32.mrb[0].mxu0
    %3141 = vdwg.mxu0
    %v3142 = vadd.f32 %v1812, %v3128
    %v3143 = vadd.f32 %v1813, %v3131
    %v3144 = vadd.f32 %v1814, %v3136
    %v3145 = vadd.f32 %v1815, %v3139
    %v3146 = vsel %vm165, %v3142, 0.0
    %3147 = vadd.xlane.f32.xlu0 %v3146
    %v3148 = vpop.xlane.xlu0 %3147
    %v3149 = vsel %vm165, %v3143, 0.0
    %3150 = vadd.xlane.f32.xlu0 %v3149
    %v3151 = vpop.xlane.xlu0 %3150
    %v3152 = vsel %vm165, %v3144, 0.0
    %3153 = vadd.xlane.f32.xlu0 %v3152
    %v3154 = vpop.xlane.xlu0 %3153
    %v3155 = vsel %vm165, %v3145, 0.0
    %3156 = vadd.xlane.f32.xlu0 %v3155
    %v3157 = vpop.xlane.xlu0 %3156
    %v3158 = vmul.f32 %v3148, %v178
    %v3159 = vmul.f32 %v3151, %v178
    %v3160 = vmul.f32 %v3154, %v178
    %v3161 = vmul.f32 %v3157, %v178
    %v3162 = vsub.f32 %v3142, %v3158
    %v3163 = vsub.f32 %v3143, %v3159
    %v3164 = vsub.f32 %v3144, %v3160
    %v3165 = vsub.f32 %v3145, %v3161
    %v3166 = vmul.f32 %v3162, %v3162
    %v3167 = vmul.f32 %v3163, %v3163
    %v3168 = vmul.f32 %v3164, %v3164
    %v3169 = vmul.f32 %v3165, %v3165
    %v3170 = vsel %vm165, %v3166, 0.0
    %3171 = vadd.xlane.f32.xlu0 %v3170
    %v3172 = vpop.xlane.xlu0 %3171
    %v3173 = vsel %vm165, %v3167, 0.0
    %3174 = vadd.xlane.f32.xlu0 %v3173
    %v3175 = vpop.xlane.xlu0 %3174
    %v3176 = vsel %vm165, %v3168, 0.0
    %3177 = vadd.xlane.f32.xlu0 %v3176
    %v3178 = vpop.xlane.xlu0 %3177
    %v3179 = vsel %vm165, %v3169, 0.0
    %3180 = vadd.xlane.f32.xlu0 %v3179
    %v3181 = vpop.xlane.xlu0 %3180
    %v3182 = vmul.f32 %v3172, %v178
    %v3183 = vmul.f32 %v3175, %v178
    %v3184 = vmul.f32 %v3178, %v178
    %v3185 = vmul.f32 %v3181, %v178
    %v3186 = vadd.f32 %v3182, 1e-05
    %v3187 = vadd.f32 %v3183, 1e-05
    %v3188 = vadd.f32 %v3184, 1e-05
    %v3189 = vadd.f32 %v3185, 1e-05
    %v3190 = vrsqrt.pop %v3186
    %v3191 = vrsqrt.pop %v3187
    %v3192 = vrsqrt.pop %v3188
    %v3193 = vrsqrt.pop %v3189
    %v3194 = vmul.f32 %v3162, %v3190
    %v3195 = vmul.f32 %v3163, %v3191
    %v3196 = vmul.f32 %v3164, %v3192
    %v3197 = vmul.f32 %v3165, %v3193
    %v3198 = vlaneseq
    %v3199 = vshrl.u32 %v3198, 7
    %v3200 = vsub.s32 0, %v3199
    %v3201 = vrot.slane %v1855, %v3200
    %v3202 = vmul.f32 %v3194, %v3201
    %v3203 = vmul.f32 %v3195, %v3201
    %v3204 = vmul.f32 %v3196, %v3201
    %v3205 = vmul.f32 %v3197, %v3201
    %v3206 = vlaneseq
    %v3207 = vshrl.u32 %v3206, 7
    %v3208 = vsub.s32 0, %v3207
    %v3209 = vrot.slane %v1856, %v3208
    %v3210 = vadd.f32 %v3202, %v3209
    %v3211 = vadd.f32 %v3203, %v3209
    %v3212 = vadd.f32 %v3204, %v3209
    %v3213 = vadd.f32 %v3205, %v3209
    %v3214 = vpack.c.bf16 %v3211, %v3210
    %v3215 = vpack.c.bf16 %v3213, %v3212
    %v3217 = vlaneseq
    %v3218 = vshrl.u32 %v3217, 7
    %v3219 = vsub.s32 0, %v3218
    %v3220 = vrot.slane %v1850, %v3219
    %v3226 = vunpack.c.l.b16 %v1821
    %v3227 = vunpack.c.l.b16 %v1822
    %v3228 = vunpack.c.l.b16 %v1823
    %v3229 = vunpack.c.l.b16 %v1824
    %v3230 = vpack.c.b16 %v3227, %v3226
    %v3231 = vpack.c.b16 %v3229, %v3228
    %v3235 = vsel %vm165, %v3214, 0
    %v3238 = vsel %vm165, %v3215, 0
    %3240 = vmatprep.subr.bf16.mxu0 0
    %3241 = vmatpush1.bf16.msra.mxu0 %v3230
    %3242 = vmatprep.subr.bf16.mxu0 0
    %3243 = vmatpush1.bf16.msra.mxu0 %v3231
    %3244 = vmatprep.subr.bf16.mxu0 0
    %3245 = vmatpush1.bf16.msra.mxu0 0
    %3246 = vmatprep.subr.bf16.mxu0 0
    %3247 = vmatpush1.bf16.msra.mxu0 0
    %3248 = vmatprep.subr.bf16.mxu0 0
    %3249 = vmatpush1.bf16.msra.mxu0 0
    %3250 = vmatprep.subr.bf16.mxu0 0
    %3251 = vmatpush1.bf16.msra.mxu0 0
    %3252 = vmatprep.subr.bf16.mxu0 0
    %3253 = vmatpush1.bf16.msra.mxu0 0
    %3254 = vmatprep.subr.bf16.mxu0 0
    %3255 = vmatpush1.bf16.msra.mxu0 0
    %3256 = vmatprep.subr.bf16.mxu0 0
    %3257 = vmatpush1.bf16.msra.mxu0 0
    %3258 = vmatprep.subr.bf16.mxu0 0
    %3259 = vmatpush1.bf16.msra.mxu0 0
    %3260 = vmatprep.subr.bf16.mxu0 0
    %3261 = vmatpush1.bf16.msra.mxu0 0
    %3262 = vmatprep.subr.bf16.mxu0 0
    %3263 = vmatpush1.bf16.msra.mxu0 0
    %3264 = vmatprep.subr.bf16.mxu0 0
    %3265 = vmatpush1.bf16.msra.mxu0 0
    %3266 = vmatprep.subr.bf16.mxu0 0
    %3267 = vmatpush1.bf16.msra.mxu0 0
    %3268 = vmatprep.subr.bf16.mxu0 0
    %3269 = vmatpush1.bf16.msra.mxu0 0
    %3270 = vmatprep.subr.bf16.mxu0 0
    %3271 = vmatpush1.bf16.msra.mxu0 0
    %3272 = vmatprep.mubr.bf16.mxu0 0
    %3273 = vmatmul.mubr.bf16.gmra.mrb[0].mxu0 %v3235
    %v3274 = vpop.f32.mrb[0].mxu0
    %v3275 = vadd.f32 %v3220, %v3274
    %v3276 = vpop.f32.mrb[0].mxu0
    %v3277 = vpop.f32.mrb[0].mxu0
    %v3278 = vadd.f32 %v3220, %v3277
    %v3279 = vpop.f32.mrb[0].mxu0
    %3280 = vmatprep.mubr.bf16.mxu0 0
    %3281 = vmatmul.mubr.bf16.gmra.mrb[0].mxu0 %v3238
    %v3282 = vpop.f32.mrb[0].mxu0
    %v3283 = vadd.f32 %v3220, %v3282
    %v3284 = vpop.f32.mrb[0].mxu0
    %v3285 = vpop.f32.mrb[0].mxu0
    %v3286 = vadd.f32 %v3220, %v3285
    %v3287 = vpop.f32.mrb[0].mxu0
    %3288 = vdwg.mxu0
    %v3289 = vmul.f32 %v3275, 0.5
    %v3290 = vmul.f32 %v3278, 0.5
    %v3291 = vmul.f32 %v3283, 0.5
    %v3292 = vmul.f32 %v3286, 0.5
    %v3293 = vmul.f32 %v3275, 0.70710677
    %v3294 = vmul.f32 %v3278, 0.70710677
    %v3295 = vmul.f32 %v3283, 0.70710677
    %v3296 = vmul.f32 %v3286, 0.70710677
    %v3297 = vand.u32 2147483647, %v3293
    %v3298 = vand.u32 2147483647, %v3294
    %v3299 = vand.u32 2147483647, %v3295
    %v3300 = vand.u32 2147483647, %v3296
    %v3301 = vmul.f32 %v3297, 0.3275911
    %v3302 = vmul.f32 %v3298, 0.3275911
    %v3303 = vmul.f32 %v3299, 0.3275911
    %v3304 = vmul.f32 %v3300, 0.3275911
    %v3305 = vadd.f32 %v3301, 1.0
    %v3306 = vadd.f32 %v3302, 1.0
    %v3307 = vadd.f32 %v3303, 1.0
    %v3308 = vadd.f32 %v3304, 1.0
    %v3309 = vrcp.pop %v3305
    %v3310 = vmul.f32 1.0, %v3309
    %v3311 = vrcp.pop %v3306
    %v3312 = vmul.f32 1.0, %v3311
    %v3313 = vrcp.pop %v3307
    %v3314 = vmul.f32 1.0, %v3313
    %v3315 = vrcp.pop %v3308
    %v3316 = vmul.f32 1.0, %v3315
    %v3317 = vmul.f32 %v3310, 1.0614054
    %v3318 = vmul.f32 %v3312, 1.0614054
    %v3319 = vmul.f32 %v3314, 1.0614054
    %v3320 = vmul.f32 %v3316, 1.0614054
    %v3321 = vadd.f32 %v3317, -1.4531521
    %v3322 = vadd.f32 %v3318, -1.4531521
    %v3323 = vadd.f32 %v3319, -1.4531521
    %v3324 = vadd.f32 %v3320, -1.4531521
    %v3325 = vmul.f32 %v3310, %v3321
    %v3326 = vmul.f32 %v3312, %v3322
    %v3327 = vmul.f32 %v3314, %v3323
    %v3328 = vmul.f32 %v3316, %v3324
    %v3329 = vadd.f32 %v3325, 1.4214138
    %v3330 = vadd.f32 %v3326, 1.4214138
    %v3331 = vadd.f32 %v3327, 1.4214138
    %v3332 = vadd.f32 %v3328, 1.4214138
    %v3333 = vmul.f32 %v3310, %v3329
    %v3334 = vmul.f32 %v3312, %v3330
    %v3335 = vmul.f32 %v3314, %v3331
    %v3336 = vmul.f32 %v3316, %v3332
    %v3337 = vadd.f32 %v3333, -0.28449672
    %v3338 = vadd.f32 %v3334, -0.28449672
    %v3339 = vadd.f32 %v3335, -0.28449672
    %v3340 = vadd.f32 %v3336, -0.28449672
    %v3341 = vmul.f32 %v3310, %v3337
    %v3342 = vmul.f32 %v3312, %v3338
    %v3343 = vmul.f32 %v3314, %v3339
    %v3344 = vmul.f32 %v3316, %v3340
    %v3345 = vadd.f32 %v3341, 0.2548296
    %v3346 = vadd.f32 %v3342, 0.2548296
    %v3347 = vadd.f32 %v3343, 0.2548296
    %v3348 = vadd.f32 %v3344, 0.2548296
    %v3349 = vmul.f32 %v3310, %v3345
    %v3350 = vmul.f32 %v3312, %v3346
    %v3351 = vmul.f32 %v3314, %v3347
    %v3352 = vmul.f32 %v3316, %v3348
    %v3353 = vsub.f32 0.0, %v3297
    %v3354 = vsub.f32 0.0, %v3298
    %v3355 = vsub.f32 0.0, %v3299
    %v3356 = vsub.f32 0.0, %v3300
    %v3357 = vmul.f32 %v3353, %v3297
    %v3358 = vmul.f32 %v3354, %v3298
    %v3359 = vmul.f32 %v3355, %v3299
    %v3360 = vmul.f32 %v3356, %v3300
    %v3361 = vmul.f32 %v3357, 1.442695
    %v3362 = vpow.pop %v3361
    %v3363 = vmul.f32 %v3358, 1.442695
    %v3364 = vpow.pop %v3363
    %v3365 = vmul.f32 %v3359, 1.442695
    %v3366 = vpow.pop %v3365
    %v3367 = vmul.f32 %v3360, 1.442695
    %v3368 = vpow.pop %v3367
    %v3369 = vmul.f32 %v3349, %v3362
    %v3370 = vmul.f32 %v3350, %v3364
    %v3371 = vmul.f32 %v3351, %v3366
    %v3372 = vmul.f32 %v3352, %v3368
    %v3373 = vsub.f32 1.0, %v3369
    %v3374 = vsub.f32 1.0, %v3370
    %v3375 = vsub.f32 1.0, %v3371
    %v3376 = vsub.f32 1.0, %v3372
    %vm3377 = vcmp.lt.f32.partialorder %v3293, 0.0
    %vm3378 = vcmp.lt.f32.partialorder %v3294, 0.0
    %vm3379 = vcmp.lt.f32.partialorder %v3295, 0.0
    %vm3380 = vcmp.lt.f32.partialorder %v3296, 0.0
    %v3381 = vsub.f32 0.0, %v3373
    %v3382 = vsub.f32 0.0, %v3374
    %v3383 = vsub.f32 0.0, %v3375
    %v3384 = vsub.f32 0.0, %v3376
    %v3385 = vsel %vm3377, %v3381, %v3373
    %v3386 = vsel %vm3378, %v3382, %v3374
    %v3387 = vsel %vm3379, %v3383, %v3375
    %v3388 = vsel %vm3380, %v3384, %v3376
    %v3389 = vadd.f32 %v3385, 1.0
    %v3390 = vadd.f32 %v3386, 1.0
    %v3391 = vadd.f32 %v3387, 1.0
    %v3392 = vadd.f32 %v3388, 1.0
    %v3393 = vmul.f32 %v3289, %v3389
    %v3394 = vmul.f32 %v3290, %v3390
    %v3395 = vmul.f32 %v3291, %v3391
    %v3396 = vmul.f32 %v3292, %v3392
    %v3397 = vpack.c.bf16 %v3394, %v3393
    %v3398 = vpack.c.bf16 %v3396, %v3395
    %v3399 = vlaneseq
    %v3400 = vshrl.u32 %v3399, 7
    %v3401 = vsub.s32 0, %v3400
    %v3402 = vrot.slane %v1857, %v3401
    %v3419 = vunpack.c.l.b16 %v1831
    %v3420 = vunpack.c.l.b16 %v1832
    %v3421 = vunpack.c.l.b16 %v1833
    %v3422 = vunpack.c.l.b16 %v1834
    %v3423 = vunpack.c.l.b16 %v1835
    %v3424 = vunpack.c.l.b16 %v1836
    %v3425 = vunpack.c.l.b16 %v1837
    %v3426 = vunpack.c.l.b16 %v1838
    %v3427 = vunpack.c.l.b16 %v1839
    %v3428 = vunpack.c.l.b16 %v1840
    %v3429 = vunpack.c.l.b16 %v1841
    %v3430 = vunpack.c.l.b16 %v1842
    %v3431 = vunpack.c.l.b16 %v1843
    %v3432 = vunpack.c.l.b16 %v1844
    %v3433 = vunpack.c.l.b16 %v1845
    %v3434 = vunpack.c.l.b16 %v1846
    %v3435 = vpack.c.b16 %v3420, %v3419
    %v3436 = vpack.c.b16 %v3422, %v3421
    %v3437 = vpack.c.b16 %v3424, %v3423
    %v3438 = vpack.c.b16 %v3426, %v3425
    %v3439 = vpack.c.b16 %v3428, %v3427
    %v3440 = vpack.c.b16 %v3430, %v3429
    %v3441 = vpack.c.b16 %v3432, %v3431
    %v3442 = vpack.c.b16 %v3434, %v3433
    %3451 = vmatprep.subr.bf16.mxu0 0
    %3452 = vmatpush1.bf16.msra.mxu0 %v3435
    %3453 = vmatprep.subr.bf16.mxu0 0
    %3454 = vmatpush1.bf16.msra.mxu0 %v3436
    %3455 = vmatprep.subr.bf16.mxu0 0
    %3456 = vmatpush1.bf16.msra.mxu0 %v3437
    %3457 = vmatprep.subr.bf16.mxu0 0
    %3458 = vmatpush1.bf16.msra.mxu0 %v3438
    %3459 = vmatprep.subr.bf16.mxu0 0
    %3460 = vmatpush1.bf16.msra.mxu0 %v3439
    %3461 = vmatprep.subr.bf16.mxu0 0
    %3462 = vmatpush1.bf16.msra.mxu0 %v3440
    %3463 = vmatprep.subr.bf16.mxu0 0
    %3464 = vmatpush1.bf16.msra.mxu0 %v3441
    %3465 = vmatprep.subr.bf16.mxu0 0
    %3466 = vmatpush1.bf16.msra.mxu0 %v3442
    %3467 = vmatprep.subr.bf16.mxu0 0
    %3468 = vmatpush1.bf16.msra.mxu0 0
    %3469 = vmatprep.subr.bf16.mxu0 0
    %3470 = vmatpush1.bf16.msra.mxu0 0
    %3471 = vmatprep.subr.bf16.mxu0 0
    %3472 = vmatpush1.bf16.msra.mxu0 0
    %3473 = vmatprep.subr.bf16.mxu0 0
    %3474 = vmatpush1.bf16.msra.mxu0 0
    %3475 = vmatprep.subr.bf16.mxu0 0
    %3476 = vmatpush1.bf16.msra.mxu0 0
    %3477 = vmatprep.subr.bf16.mxu0 0
    %3478 = vmatpush1.bf16.msra.mxu0 0
    %3479 = vmatprep.subr.bf16.mxu0 0
    %3480 = vmatpush1.bf16.msra.mxu0 0
    %3481 = vmatprep.subr.bf16.mxu0 0
    %3482 = vmatpush1.bf16.msra.mxu0 0
    %3483 = vmatprep.mubr.bf16.mxu0 0
    %3484 = vmatmul.mubr.bf16.gmra.mrb[0].mxu0 %v3397
    %v3485 = vpop.f32.mrb[0].mxu0
    %v3486 = vadd.f32 %v3402, %v3485
    %v3487 = vpop.f32.mrb[0].mxu0
    %v3488 = vpop.f32.mrb[0].mxu0
    %v3489 = vadd.f32 %v3402, %v3488
    %v3490 = vpop.f32.mrb[0].mxu0
    %3491 = vmatprep.mubr.bf16.mxu0 0
    %3492 = vmatmul.mubr.bf16.gmra.mrb[0].mxu0 %v3398
    %v3493 = vpop.f32.mrb[0].mxu0
    %v3494 = vadd.f32 %v3402, %v3493
    %v3495 = vpop.f32.mrb[0].mxu0
    %v3496 = vpop.f32.mrb[0].mxu0
    %v3497 = vadd.f32 %v3402, %v3496
    %v3498 = vpop.f32.mrb[0].mxu0
    %3499 = vdwg.mxu0
    %v3500 = vadd.f32 %v3142, %v3486
    %v3501 = vadd.f32 %v3143, %v3489
    %v3502 = vadd.f32 %v3144, %v3494
    %v3503 = vadd.f32 %v3145, %v3497
    %v3504 = vld [vmem:[%s9] sm:$0x1]
    %v3505 = vld [vmem:[%s9 + $0x1] sm:$0x1]
    %v3506 = vsel %vm165, %v3500, 0.0
    %3507 = vadd.xlane.f32.xlu0 %v3506
    %v3508 = vpop.xlane.xlu0 %3507
    %v3509 = vsel %vm165, %v3501, 0.0
    %3510 = vadd.xlane.f32.xlu0 %v3509
    %v3511 = vpop.xlane.xlu0 %3510
    %v3512 = vsel %vm165, %v3502, 0.0
    %3513 = vadd.xlane.f32.xlu0 %v3512
    %v3514 = vpop.xlane.xlu0 %3513
    %v3515 = vsel %vm165, %v3503, 0.0
    %3516 = vadd.xlane.f32.xlu0 %v3515
    %v3517 = vpop.xlane.xlu0 %3516
    %v3518 = vmul.f32 %v3508, %v178
    %v3519 = vmul.f32 %v3511, %v178
    %v3520 = vmul.f32 %v3514, %v178
    %v3521 = vmul.f32 %v3517, %v178
    %v3522 = vsub.f32 %v3500, %v3518
    %v3523 = vsub.f32 %v3501, %v3519
    %v3524 = vsub.f32 %v3502, %v3520
    %v3525 = vsub.f32 %v3503, %v3521
    %v3526 = vmul.f32 %v3522, %v3522
    %v3527 = vmul.f32 %v3523, %v3523
    %v3528 = vmul.f32 %v3524, %v3524
    %v3529 = vmul.f32 %v3525, %v3525
    %v3530 = vsel %vm165, %v3526, 0.0
    %3531 = vadd.xlane.f32.xlu0 %v3530
    %v3532 = vpop.xlane.xlu0 %3531
    %v3533 = vsel %vm165, %v3527, 0.0
    %3534 = vadd.xlane.f32.xlu0 %v3533
    %v3535 = vpop.xlane.xlu0 %3534
    %v3536 = vsel %vm165, %v3528, 0.0
    %3537 = vadd.xlane.f32.xlu0 %v3536
    %v3538 = vpop.xlane.xlu0 %3537
    %v3539 = vsel %vm165, %v3529, 0.0
    %3540 = vadd.xlane.f32.xlu0 %v3539
    %v3541 = vpop.xlane.xlu0 %3540
    %v3542 = vmul.f32 %v3532, %v178
    %v3543 = vmul.f32 %v3535, %v178
    %v3544 = vmul.f32 %v3538, %v178
    %v3545 = vmul.f32 %v3541, %v178
    %v3546 = vadd.f32 %v3542, 1e-05
    %v3547 = vadd.f32 %v3543, 1e-05
    %v3548 = vadd.f32 %v3544, 1e-05
    %v3549 = vadd.f32 %v3545, 1e-05
    %v3550 = vrsqrt.pop %v3546
    %v3551 = vrsqrt.pop %v3547
    %v3552 = vrsqrt.pop %v3548
    %v3553 = vrsqrt.pop %v3549
    %v3554 = vmul.f32 %v3522, %v3550
    %v3555 = vmul.f32 %v3523, %v3551
    %v3556 = vmul.f32 %v3524, %v3552
    %v3557 = vmul.f32 %v3525, %v3553
    %v3558 = vlaneseq
    %v3559 = vshrl.u32 %v3558, 7
    %v3560 = vsub.s32 0, %v3559
    %v3561 = vrot.slane %v3504, %v3560
    %v3562 = vmul.f32 %v3554, %v3561
    %v3563 = vmul.f32 %v3555, %v3561
    %v3564 = vmul.f32 %v3556, %v3561
    %v3565 = vmul.f32 %v3557, %v3561
    %v3566 = vlaneseq
    %v3567 = vshrl.u32 %v3566, 7
    %v3568 = vsub.s32 0, %v3567
    %v3569 = vrot.slane %v3505, %v3568
    %v3570 = vadd.f32 %v3562, %v3569
    %v3571 = vadd.f32 %v3563, %v3569
    %v3572 = vadd.f32 %v3564, %v3569
    %v3573 = vadd.f32 %v3565, %v3569
    %3574 = vst.msk [vmem:[#allocation2] sm:$0xff] %vm165, %v3570
    %3575 = vst.msk [vmem:[#allocation2 + $0x8] sm:$0xff] %vm165, %v3571
    %3576 = vst.msk [vmem:[#allocation2 + $0x10] sm:$0xff] %vm165, %v3572
    %3577 = vst.msk [vmem:[#allocation2 + $0x18] sm:$0xff] %vm165, %v3573
    // Predicated region
    $region42: #{vit_det_forward.1} parent=1 // pred_check
      _
    $region43: #{vit_det_forward.1} parent=1 // pred_check_branch
      %3579 = sbr.rel (0) target = $region45
    $region44: #{vit_det_forward.1} parent=1 // pred_region
      %s3581 = ssub.s32 512, 512
      %3582 = vsyncadd [#allocation3], %s3581
      %s3583 = sshll.u32 [#allocation2], 4
      %s3584 = int_to_ptr.vmem [resolvable:$true] %s3583
      %3589 = dma.vmem_to_hbm [thread:$0]  %s3584, 512, %s10, [#allocation3], 128, 128, 8
    $region45: #{vit_det_forward.1} parent=1 // pred_fallthru
      _
    // Predicated region
    $region46: #{vit_det_forward.1} parent=1 // pred_check
      _
    $region47: #{vit_det_forward.1} parent=1 // pred_check_branch
      %3591 = sbr.rel (0) target = $region49
    $region48: #{vit_det_forward.1} parent=1 // pred_region
      %3592 = dma.done [#allocation3], 512
    $region49: #{vit_det_forward.1} parent=1 // pred_fallthru
      _
    %3593 = vsyncpa [#allocation3], 1

</llo_original>
